<compile_context>
chip_gen: v5e
topology: v5e:2x2
jax: 0.10.0
libtpu: 0.0.40
codegen_flags: <defaults>
</compile_context>

<pallas_src>
import functools
import math

import jax
import jax.numpy as jnp
from jax.experimental import pallas as pl
from jax.experimental.pallas import tpu as pltpu


def siren_kernel(x_ref, *refs, omegas, apply_sin, fma_first):
    """refs = (w0, b0, w1, b1, ..., wL, bL, out_ref).

    x_ref:   (in_features, tm)   -- points on the lane axis
    w_l:     (out_l, in_l)       -- PyTorch weight layout
    b_l:     (out_l, 1)
    out_ref: (out_features, tm)  -- lane-dense store
    """
    o_ref = refs[-1]
    wb = refs[:-1]
    h = x_ref[...].astype(jnp.float32)
    n_layers = len(wb) // 2
    for l in range(n_layers):
        w = wb[2 * l][...].astype(jnp.float32)
        b = wb[2 * l + 1][...].astype(jnp.float32)
        if l == 0 and fma_first:
            # Tiny-K first layer: outer-product broadcast FMAs on the VPU
            # instead of a K=2 MXU pass.
            y = b
            for k in range(w.shape[1]):
                y = y + w[:, k:k + 1] * h[k:k + 1, :]
        else:
            y = jnp.dot(w, h, preferred_element_type=jnp.float32) + b
        if apply_sin[l]:
            # omega*y rides in VALU slack; sin goes to the EUP (now lane-dense).
            y = jnp.sin(omegas[l] * y)
        h = y
    o_ref[...] = h.astype(o_ref.dtype)


def _pick_row_tile(n_pad, tm_max):
    """Largest multiple-of-128 tile dividing n_pad and <= tm_max.

    Prefers a grid of length >= 2 so both v7x TensorCores get work.
    """
    tm_max = max(int(tm_max), 128)
    m = n_pad // 128
    cand = [d for d in range(1, m + 1) if m % d == 0 and 128 * d <= tm_max]
    pref = [d for d in cand if (m // d) >= 2]
    d = max(pref) if pref else max(cand)
    return 128 * d


def siren_forward(coords, params, omegas, apply_sin, *, tm=2048):
    """coords: (N, in_features); params: list of (W(out,in), b(out,))."""
    N, in_f = coords.shape
    out_f = params[-1][0].shape[0]

    n_pad = ((N + 127) // 128) * 128
    tm_eff = _pick_row_tile(n_pad, tm)
    grid_len = n_pad // tm_eff

    # Feature-major layout: points on the lane axis; pad N to a multiple of
    # 128 (the padded tail is computed and sliced away -- layout plumbing).
    x = jnp.zeros((in_f, n_pad), coords.dtype).at[:, :N].set(coords.T)

    in_specs = [pl.BlockSpec((in_f, tm_eff), lambda i: (0, i))]
    args = [x]
    for (w, b) in params:
        o_l, i_l = w.shape
        # Grid-constant blocks: DMA'd once, resident across all row tiles.
        in_specs.append(pl.BlockSpec((o_l, i_l), lambda i: (0, 0)))
        in_specs.append(pl.BlockSpec((o_l, 1), lambda i: (0, 0)))
        args.append(w.astype(jnp.float32))
        args.append(b.reshape(o_l, 1).astype(jnp.float32))

    kernel = functools.partial(
        siren_kernel,
        omegas=tuple(float(o) for o in omegas),
        apply_sin=tuple(bool(s) for s in apply_sin),
        fma_first=(in_f <= 8),
    )
    out_t = pl.pallas_call(
        kernel,
        out_shape=jax.ShapeDtypeStruct((out_f, n_pad), coords.dtype),
        grid_spec=pltpu.PrefetchScalarGridSpec(
            num_scalar_prefetch=0,
            grid=(grid_len,),
            in_specs=in_specs,
            out_specs=pl.BlockSpec((out_f, tm_eff), lambda i: (0, i)),
        ),
        compiler_params=pltpu.CompilerParams(
            dimension_semantics=("parallel",),
        ),
    )(*args)
    out = out_t.T[:N]          # back to (N, out_features)
    return out, coords


def init_siren_params(key, in_features, hidden_features, hidden_layers,
                      out_features, outermost_linear, first_omega_0,
                      hidden_omega_0):
    """Deterministic init mirroring SIREN's uniform ranges (weights (out,in))."""
    dims = ([in_features] + [hidden_features] * (hidden_layers + 1)
            + [out_features])
    params, omegas, apply_sin = [], [], []
    n_layers = len(dims) - 1
    for l in range(n_layers):
        fan_in, fan_out = dims[l], dims[l + 1]
        is_first = (l == 0)
        is_last = (l == n_layers - 1)
        if is_first:
            w_bound = 1.0 / fan_in
        else:
            w_bound = math.sqrt(6.0 / fan_in) / hidden_omega_0
        key, kw, kb = jax.random.split(key, 3)
        w = jax.random.uniform(kw, (fan_out, fan_in), jnp.float32,
                               minval=-w_bound, maxval=w_bound)
        # PyTorch nn.Linear default bias init: U(-1/sqrt(fan_in), 1/sqrt(fan_in))
        b_bound = 1.0 / math.sqrt(fan_in)
        b = jax.random.uniform(kb, (fan_out,), jnp.float32,
                               minval=-b_bound, maxval=b_bound)
        params.append((w, b))
        if is_last and outermost_linear:
            omegas.append(1.0)
            apply_sin.append(False)
        else:
            omegas.append(first_omega_0 if is_first else hidden_omega_0)
            apply_sin.append(True)
    return params, omegas, apply_sin


def siren_reference(coords, params, omegas, apply_sin):
    h = coords.astype(jnp.float32)
    for (w, b), omega, do_sin in zip(params, omegas, apply_sin):
        h = h @ w.T + b           # PyTorch convention: x @ W.T + b
        if do_sin:
            h = jnp.sin(omega * h)
    return h


if __name__ == "__main__":
    key = jax.random.PRNGKey(0)

    # Siren(in=2, hidden=32, hidden_layers=2, out=1, outermost_linear=True)
    in_features, hidden_features, hidden_layers, out_features = 2, 32, 2, 1
    first_omega_0, hidden_omega_0 = 30.0, 30.0
    outermost_linear = True

    kp, kx = jax.random.split(key)
    params, omegas, apply_sin = init_siren_params(
        kp, in_features, hidden_features, hidden_layers, out_features,
        outermost_linear, first_omega_0, hidden_omega_0)

    # 512 points (e.g. a flattened sampling grid) in [-1, 1]^2
    N = 512
    coords = jax.random.uniform(kx, (N, in_features), jnp.float32,
                                minval=-1.0, maxval=1.0)

    out, coords_out = siren_forward(coords, params, omegas, apply_sin)
    out = jax.block_until_ready(out)
    coords_out = jax.block_until_ready(coords_out)

    ref = siren_reference(coords, params, omegas, apply_sin)
    assert out.shape == (N, out_features)
    assert coords_out.shape == coords.shape
    assert jnp.allclose(out, ref, atol=2e-4, rtol=2e-4), "mismatch vs reference"

    print("KERNEL_OK")
</pallas_src>

<mosaic_0001>
module attributes {stable_mosaic.version = 11 : i64} {
  func.func @siren_kernel(%arg0: i32, %arg1: memref<2x256xf32, #tpu.memory_space<vmem>>, %arg2: memref<32x2xf32, #tpu.memory_space<vmem>>, %arg3: memref<32x1xf32, #tpu.memory_space<vmem>>, %arg4: memref<32x32xf32, #tpu.memory_space<vmem>>, %arg5: memref<32x1xf32, #tpu.memory_space<vmem>>, %arg6: memref<32x32xf32, #tpu.memory_space<vmem>>, %arg7: memref<32x1xf32, #tpu.memory_space<vmem>>, %arg8: memref<1x32xf32, #tpu.memory_space<vmem>>, %arg9: memref<1x1xf32, #tpu.memory_space<vmem>>, %arg10: memref<1x256xf32, #tpu.memory_space<vmem>>) attributes {dimension_semantics = [#tpu.dimension_semantics<parallel>], iteration_bounds = array<i64: 2>, scalar_prefetch = 0 : i64, scratch_operands = 0 : i64, tpu.core_type = #tpu.core_type<tc>, window_params = [{transform_indices = @transform_0, window_bounds = array<i64: 2, 256>}, {pipeline_mode = #tpu.pipeline_mode<synchronous>, transform_indices = @transform_1, window_bounds = array<i64: 32, 2>}, {pipeline_mode = #tpu.pipeline_mode<synchronous>, transform_indices = @transform_2, window_bounds = array<i64: 32, 1>}, {pipeline_mode = #tpu.pipeline_mode<synchronous>, transform_indices = @transform_3, window_bounds = array<i64: 32, 32>}, {pipeline_mode = #tpu.pipeline_mode<synchronous>, transform_indices = @transform_4, window_bounds = array<i64: 32, 1>}, {pipeline_mode = #tpu.pipeline_mode<synchronous>, transform_indices = @transform_5, window_bounds = array<i64: 32, 32>}, {pipeline_mode = #tpu.pipeline_mode<synchronous>, transform_indices = @transform_6, window_bounds = array<i64: 32, 1>}, {pipeline_mode = #tpu.pipeline_mode<synchronous>, transform_indices = @transform_7, window_bounds = array<i64: 1, 32>}, {pipeline_mode = #tpu.pipeline_mode<synchronous>, transform_indices = @transform_8, window_bounds = array<i64: 1, 1>}, {transform_indices = @transform_9, window_bounds = array<i64: 1, 256>}]} {
    %c0 = arith.constant 0 : index
    %c0_0 = arith.constant 0 : index
    %0 = vector.load %arg1[%c0, %c0_0] : memref<2x256xf32, #tpu.memory_space<vmem>>, vector<2x256xf32>
    %c0_1 = arith.constant 0 : index
    %c0_2 = arith.constant 0 : index
    %1 = vector.load %arg2[%c0_1, %c0_2] : memref<32x2xf32, #tpu.memory_space<vmem>>, vector<32x2xf32>
    %c0_3 = arith.constant 0 : index
    %c0_4 = arith.constant 0 : index
    %2 = vector.load %arg3[%c0_3, %c0_4] : memref<32x1xf32, #tpu.memory_space<vmem>>, vector<32x1xf32>
    %3 = vector.extract_strided_slice %1 {offsets = [0, 0], sizes = [32, 1], strides = [1, 1]} : vector<32x2xf32> to vector<32x1xf32>
    %4 = vector.extract_strided_slice %0 {offsets = [0, 0], sizes = [1, 256], strides = [1, 1]} : vector<2x256xf32> to vector<1x256xf32>
    %5 = vector.broadcast %3 : vector<32x1xf32> to vector<32x256xf32>
    %6 = vector.broadcast %4 : vector<1x256xf32> to vector<32x256xf32>
    %7 = arith.mulf %5, %6 : vector<32x256xf32>
    %8 = vector.broadcast %2 : vector<32x1xf32> to vector<32x256xf32>
    %9 = arith.addf %8, %7 : vector<32x256xf32>
    %10 = vector.extract_strided_slice %1 {offsets = [0, 1], sizes = [32, 1], strides = [1, 1]} : vector<32x2xf32> to vector<32x1xf32>
    %11 = vector.extract_strided_slice %0 {offsets = [1, 0], sizes = [1, 256], strides = [1, 1]} : vector<2x256xf32> to vector<1x256xf32>
    %12 = vector.broadcast %10 : vector<32x1xf32> to vector<32x256xf32>
    %13 = vector.broadcast %11 : vector<1x256xf32> to vector<32x256xf32>
    %14 = arith.mulf %12, %13 : vector<32x256xf32>
    %15 = arith.addf %9, %14 : vector<32x256xf32>
    %cst = arith.constant 3.000000e+01 : f32
    %16 = vector.broadcast %cst : f32 to vector<32x256xf32>
    %17 = arith.mulf %16, %15 : vector<32x256xf32>
    %18 = math.sin %17 : vector<32x256xf32>
    %c0_5 = arith.constant 0 : index
    %c0_6 = arith.constant 0 : index
    %19 = vector.load %arg4[%c0_5, %c0_6] : memref<32x32xf32, #tpu.memory_space<vmem>>, vector<32x32xf32>
    %c0_7 = arith.constant 0 : index
    %c0_8 = arith.constant 0 : index
    %20 = vector.load %arg5[%c0_7, %c0_8] : memref<32x1xf32, #tpu.memory_space<vmem>>, vector<32x1xf32>
    %cst_9 = arith.constant dense<0.000000e+00> : vector<32x256xf32>
    %21 = tpu.matmul %19, %18, %cst_9 {dimension_numbers = #tpu.dot_dimension_numbers<[1], [0], [0], [1], [0, 0, 1, 1], [], []>} : vector<32x32xf32>, vector<32x256xf32>, vector<32x256xf32> -> vector<32x256xf32>
    %22 = vector.broadcast %20 : vector<32x1xf32> to vector<32x256xf32>
    %23 = arith.addf %21, %22 : vector<32x256xf32>
    %cst_10 = arith.constant 3.000000e+01 : f32
    %24 = vector.broadcast %cst_10 : f32 to vector<32x256xf32>
    %25 = arith.mulf %24, %23 : vector<32x256xf32>
    %26 = math.sin %25 : vector<32x256xf32>
    %c0_11 = arith.constant 0 : index
    %c0_12 = arith.constant 0 : index
    %27 = vector.load %arg6[%c0_11, %c0_12] : memref<32x32xf32, #tpu.memory_space<vmem>>, vector<32x32xf32>
    %c0_13 = arith.constant 0 : index
    %c0_14 = arith.constant 0 : index
    %28 = vector.load %arg7[%c0_13, %c0_14] : memref<32x1xf32, #tpu.memory_space<vmem>>, vector<32x1xf32>
    %cst_15 = arith.constant dense<0.000000e+00> : vector<32x256xf32>
    %29 = tpu.matmul %27, %26, %cst_15 {dimension_numbers = #tpu.dot_dimension_numbers<[1], [0], [0], [1], [0, 0, 1, 1], [], []>} : vector<32x32xf32>, vector<32x256xf32>, vector<32x256xf32> -> vector<32x256xf32>
    %30 = vector.broadcast %28 : vector<32x1xf32> to vector<32x256xf32>
    %31 = arith.addf %29, %30 : vector<32x256xf32>
    %cst_16 = arith.constant 3.000000e+01 : f32
    %32 = vector.broadcast %cst_16 : f32 to vector<32x256xf32>
    %33 = arith.mulf %32, %31 : vector<32x256xf32>
    %34 = math.sin %33 : vector<32x256xf32>
    %c0_17 = arith.constant 0 : index
    %c0_18 = arith.constant 0 : index
    %35 = vector.load %arg8[%c0_17, %c0_18] : memref<1x32xf32, #tpu.memory_space<vmem>>, vector<1x32xf32>
    %c0_19 = arith.constant 0 : index
    %c0_20 = arith.constant 0 : index
    %36 = vector.load %arg9[%c0_19, %c0_20] : memref<1x1xf32, #tpu.memory_space<vmem>>, vector<1x1xf32>
    %cst_21 = arith.constant dense<0.000000e+00> : vector<1x256xf32>
    %37 = tpu.matmul %35, %34, %cst_21 {dimension_numbers = #tpu.dot_dimension_numbers<[1], [0], [0], [1], [0, 0, 1, 1], [], []>} : vector<1x32xf32>, vector<32x256xf32>, vector<1x256xf32> -> vector<1x256xf32>
    %38 = vector.broadcast %36 : vector<1x1xf32> to vector<1x256xf32>
    %39 = arith.addf %37, %38 : vector<1x256xf32>
    %c0_22 = arith.constant 0 : index
    %c0_23 = arith.constant 0 : index
    %40 = vector.load %arg10[%c0_22, %c0_23] : memref<1x256xf32, #tpu.memory_space<vmem>>, vector<1x256xf32>
    tpu.vector_store %arg10[%c0_22, %c0_23], %39 {strides = array<i32>} : memref<1x256xf32, #tpu.memory_space<vmem>>, vector<1x256xf32>,
    return
  }
  func.func @transform_0(%arg0: i32) -> (i32, i32) {
    %c0_i32 = arith.constant 0 : i32
    %c0_i32_0 = arith.constant 0 : i32
    return %c0_i32, %arg0 : i32, i32
  }
  func.func @transform_1(%arg0: i32) -> (i32, i32) {
    %c0_i32 = arith.constant 0 : i32
    %c0_i32_0 = arith.constant 0 : i32
    %c0_i32_1 = arith.constant 0 : i32
    return %c0_i32, %c0_i32_0 : i32, i32
  }
  func.func @transform_2(%arg0: i32) -> (i32, i32) {
    %c0_i32 = arith.constant 0 : i32
    %c0_i32_0 = arith.constant 0 : i32
    %c0_i32_1 = arith.constant 0 : i32
    return %c0_i32, %c0_i32_0 : i32, i32
  }
  func.func @transform_3(%arg0: i32) -> (i32, i32) {
    %c0_i32 = arith.constant 0 : i32
    %c0_i32_0 = arith.constant 0 : i32
    %c0_i32_1 = arith.constant 0 : i32
    return %c0_i32, %c0_i32_0 : i32, i32
  }
  func.func @transform_4(%arg0: i32) -> (i32, i32) {
    %c0_i32 = arith.constant 0 : i32
    %c0_i32_0 = arith.constant 0 : i32
    %c0_i32_1 = arith.constant 0 : i32
    return %c0_i32, %c0_i32_0 : i32, i32
  }
  func.func @transform_5(%arg0: i32) -> (i32, i32) {
    %c0_i32 = arith.constant 0 : i32
    %c0_i32_0 = arith.constant 0 : i32
    %c0_i32_1 = arith.constant 0 : i32
    return %c0_i32, %c0_i32_0 : i32, i32
  }
  func.func @transform_6(%arg0: i32) -> (i32, i32) {
    %c0_i32 = arith.constant 0 : i32
    %c0_i32_0 = arith.constant 0 : i32
    %c0_i32_1 = arith.constant 0 : i32
    return %c0_i32, %c0_i32_0 : i32, i32
  }
  func.func @transform_7(%arg0: i32) -> (i32, i32) {
    %c0_i32 = arith.constant 0 : i32
    %c0_i32_0 = arith.constant 0 : i32
    %c0_i32_1 = arith.constant 0 : i32
    return %c0_i32, %c0_i32_0 : i32, i32
  }
  func.func @transform_8(%arg0: i32) -> (i32, i32) {
    %c0_i32 = arith.constant 0 : i32
    %c0_i32_0 = arith.constant 0 : i32
    %c0_i32_1 = arith.constant 0 : i32
    return %c0_i32, %c0_i32_0 : i32, i32
  }
  func.func @transform_9(%arg0: i32) -> (i32, i32) {
    %c0_i32 = arith.constant 0 : i32
    %c0_i32_0 = arith.constant 0 : i32
    return %c0_i32, %arg0 : i32, i32
  }
}

</mosaic_0001>

<llo_original>
// kernel: tpu_custom_call.1
$region0: #{tpu_custom_call.1}
  #allocation0 [shape = 'u32[]', space=smem, size = 0x4, offset = 0x4, fixed_abs, tag = 'smem constant byte address 0x4 - core index']
  #allocation1 [shape = 'u32[72,128]{1,0:T(1,128)}', space=vmem, size = 0x9000, scoped, tag = 'internal scratch']
  #allocation2 [shape = 'f32[1,1]{1,0:T(1,128)S(1)}', space=vmem, size = 0x200, scoped, tag = 'scoped memory for tpu_custom_call.1']
  %s0 = inlined_call_operand.vmem [shape: f32[2,512], index: 0, kind: input, shape index: {}]
  %s1 = inlined_call_operand.vmem [shape: f32[32,2], index: 1, kind: input, shape index: {}]
  %s2 = inlined_call_operand.vmem [shape: f32[32,1], index: 2, kind: input, shape index: {}]
  %s3 = inlined_call_operand.vmem [shape: f32[32,32], index: 3, kind: input, shape index: {}]
  %s4 = inlined_call_operand.vmem [shape: f32[32,1], index: 4, kind: input, shape index: {}]
  %s5 = inlined_call_operand.vmem [shape: f32[32,32], index: 5, kind: input, shape index: {}]
  %s6 = inlined_call_operand.vmem [shape: f32[32,1], index: 6, kind: input, shape index: {}]
  %s7 = inlined_call_operand.vmem [shape: f32[1,32], index: 7, kind: input, shape index: {}]
  %s8 = inlined_call_operand.<no memory space> [shape: f32[1,1], index: 8, kind: input, shape index: {}]
  %s9 = inlined_call_operand.hbm [shape: f32[1,512], index: 9, kind: output, shape index: {}]
  %s10 = sld [smem:[#allocation0]]
  $region69: #{tpu_custom_call.1} parent=0
    _
  %s12 = ssub.s32 1, %s10
  %s13 = scalar_select 0, %s12, %s10
  %v14 = vstv %s8
  %15 = vst [vmem:[#allocation2] sm:$0x1] %v14
  $region1: #{tpu_custom_call.1} parent=0
    #allocation3 [shape = 'u8[2048]{0}', space=vmem, size = 0x800, scoped, tag = 'output window, operand 0']
    #allocation4 [shape = 's32[2]{0}', space=sflag, size = 0x8, scoped, tag = 'scoped memory for tpu_custom_call.1']
    %16 = vsyncpa [#allocation4], 0
    %s17 = scalar_lea.sflag [#allocation4], 1
    %18 = vsyncpa %s17, 0
    loop: start=0, step=1, limit=4
    $region2: #{tpu_custom_call.1} parent=1 // loop_pre_header
      _
    $region3: #{tpu_custom_call.1} parent=1 // loop_header
      %s20 = sphi 0, %s24
      %p21 = scmp.ge.s32.totalorder %s20, 4
      %s30 = sphi 0, %s32
      %s33 = sphi 0, %s30
      %s34 = sphi 0, %s33
      %s50 = sphi 0, %s34
      %s54 = sphi 0, %s54
      %s56 = sphi 0, %s54
      %s57 = sphi 0, %s56
      %s71 = sphi 0, %s57
      %s75 = sphi 0, %s75
      %s77 = sphi 0, %s75
      %s78 = sphi 0, %s77
      %s92 = sphi 0, %s78
      %s96 = sphi 0, %s96
      %s98 = sphi 0, %s96
      %s99 = sphi 0, %s98
      %s113 = sphi 0, %s99
      %s117 = sphi 0, %s117
      %s119 = sphi 0, %s117
      %s120 = sphi 0, %s119
      %s134 = sphi 0, %s120
      %s138 = sphi 0, %s138
      %s140 = sphi 0, %s138
      %s141 = sphi 0, %s140
      %s155 = sphi 0, %s141
      %s159 = sphi 0, %s159
      %s161 = sphi 0, %s159
      %s162 = sphi 0, %s161
      %s176 = sphi 0, %s162
      %s180 = sphi 0, %s180
      %s182 = sphi 0, %s180
      %s183 = sphi 0, %s182
      %s197 = sphi 0, %s183
      %s201 = sphi 0, %s201
      %s203 = sphi 0, %s201
      %s204 = sphi 0, %s203
      %s218 = sphi 0, %s204
      %s224 = sphi 0, %s226
      %s227 = sphi 0, %s224
      %s228 = sphi 0, %s227
      %s244 = sphi 0, %s228
    $region4: #{tpu_custom_call.1} parent=1 // loop_header_branch
      %23 = sbr.rel (%p21) target = $region8
    $region5: #{tpu_custom_call.1} parent=1 // loop_body
      %s25 = ssub.s32 %s20, 1
      %s26 = ssub.s32 %s20, 2
      %s27 = sadd.s32 %s20, 1
      %s28 = ssub.s32 %s20, %s27
      %p29 = scmp.eq.s32.totalorder %s28, 0
      %s31 = sadd.s32 %s30, 1
      %s32 = scalar_select %p29, %s30, %s31
      %p35 = pneg %p29
      %p36 = scmp.eq.s32.totalorder %s20, 1
      %p37 = por %p35, %p36
      %p38 = scmp.ne.s32.totalorder %s30, %s33
      %p39 = scmp.eq.s32.totalorder %s20, 0
      %p40 = por %p38, %p39
      %p41 = scmp.ne.s32.totalorder %s30, %s33
      %p42 = scmp.eq.s32.totalorder %s25, 1
      %p43 = por %p41, %p42
      %p44 = scmp.ne.s32.totalorder %s33, %s34
      %p45 = scmp.eq.s32.totalorder %s25, 0
      %p46 = por %p44, %p45
      %p47 = scmp.ne.s32.totalorder %s33, %s34
      %p48 = scmp.eq.s32.totalorder %s26, 1
      %p49 = por %p47, %p48
      %p51 = scmp.ne.s32.totalorder %s34, %s50
      %p52 = scmp.eq.s32.totalorder %s26, 0
      %p53 = por %p51, %p52
      %s55 = sadd.s32 %s54, 1
      %p58 = scmp.eq.s32.totalorder %s20, 1
      %p59 = scmp.ne.s32.totalorder %s54, %s56
      %p60 = scmp.eq.s32.totalorder %s20, 0
      %p61 = por %p59, %p60
      %p62 = scmp.ne.s32.totalorder %s54, %s56
      %p63 = scmp.eq.s32.totalorder %s25, 1
      %p64 = por %p62, %p63
      %p65 = scmp.ne.s32.totalorder %s56, %s57
      %p66 = scmp.eq.s32.totalorder %s25, 0
      %p67 = por %p65, %p66
      %p68 = scmp.ne.s32.totalorder %s56, %s57
      %p69 = scmp.eq.s32.totalorder %s26, 1
      %p70 = por %p68, %p69
      %p72 = scmp.ne.s32.totalorder %s57, %s71
      %p73 = scmp.eq.s32.totalorder %s26, 0
      %p74 = por %p72, %p73
      %s76 = sadd.s32 %s75, 1
      %p79 = scmp.eq.s32.totalorder %s20, 1
      %p80 = scmp.ne.s32.totalorder %s75, %s77
      %p81 = scmp.eq.s32.totalorder %s20, 0
      %p82 = por %p80, %p81
      %p83 = scmp.ne.s32.totalorder %s75, %s77
      %p84 = scmp.eq.s32.totalorder %s25, 1
      %p85 = por %p83, %p84
      %p86 = scmp.ne.s32.totalorder %s77, %s78
      %p87 = scmp.eq.s32.totalorder %s25, 0
      %p88 = por %p86, %p87
      %p89 = scmp.ne.s32.totalorder %s77, %s78
      %p90 = scmp.eq.s32.totalorder %s26, 1
      %p91 = por %p89, %p90
      %p93 = scmp.ne.s32.totalorder %s78, %s92
      %p94 = scmp.eq.s32.totalorder %s26, 0
      %p95 = por %p93, %p94
      %s97 = sadd.s32 %s96, 1
      %p100 = scmp.eq.s32.totalorder %s20, 1
      %p101 = scmp.ne.s32.totalorder %s96, %s98
      %p102 = scmp.eq.s32.totalorder %s20, 0
      %p103 = por %p101, %p102
      %p104 = scmp.ne.s32.totalorder %s96, %s98
      %p105 = scmp.eq.s32.totalorder %s25, 1
      %p106 = por %p104, %p105
      %p107 = scmp.ne.s32.totalorder %s98, %s99
      %p108 = scmp.eq.s32.totalorder %s25, 0
      %p109 = por %p107, %p108
      %p110 = scmp.ne.s32.totalorder %s98, %s99
      %p111 = scmp.eq.s32.totalorder %s26, 1
      %p112 = por %p110, %p111
      %p114 = scmp.ne.s32.totalorder %s99, %s113
      %p115 = scmp.eq.s32.totalorder %s26, 0
      %p116 = por %p114, %p115
      %s118 = sadd.s32 %s117, 1
      %p121 = scmp.eq.s32.totalorder %s20, 1
      %p122 = scmp.ne.s32.totalorder %s117, %s119
      %p123 = scmp.eq.s32.totalorder %s20, 0
      %p124 = por %p122, %p123
      %p125 = scmp.ne.s32.totalorder %s117, %s119
      %p126 = scmp.eq.s32.totalorder %s25, 1
      %p127 = por %p125, %p126
      %p128 = scmp.ne.s32.totalorder %s119, %s120
      %p129 = scmp.eq.s32.totalorder %s25, 0
      %p130 = por %p128, %p129
      %p131 = scmp.ne.s32.totalorder %s119, %s120
      %p132 = scmp.eq.s32.totalorder %s26, 1
      %p133 = por %p131, %p132
      %p135 = scmp.ne.s32.totalorder %s120, %s134
      %p136 = scmp.eq.s32.totalorder %s26, 0
      %p137 = por %p135, %p136
      %s139 = sadd.s32 %s138, 1
      %p142 = scmp.eq.s32.totalorder %s20, 1
      %p143 = scmp.ne.s32.totalorder %s138, %s140
      %p144 = scmp.eq.s32.totalorder %s20, 0
      %p145 = por %p143, %p144
      %p146 = scmp.ne.s32.totalorder %s138, %s140
      %p147 = scmp.eq.s32.totalorder %s25, 1
      %p148 = por %p146, %p147
      %p149 = scmp.ne.s32.totalorder %s140, %s141
      %p150 = scmp.eq.s32.totalorder %s25, 0
      %p151 = por %p149, %p150
      %p152 = scmp.ne.s32.totalorder %s140, %s141
      %p153 = scmp.eq.s32.totalorder %s26, 1
      %p154 = por %p152, %p153
      %p156 = scmp.ne.s32.totalorder %s141, %s155
      %p157 = scmp.eq.s32.totalorder %s26, 0
      %p158 = por %p156, %p157
      %s160 = sadd.s32 %s159, 1
      %p163 = scmp.eq.s32.totalorder %s20, 1
      %p164 = scmp.ne.s32.totalorder %s159, %s161
      %p165 = scmp.eq.s32.totalorder %s20, 0
      %p166 = por %p164, %p165
      %p167 = scmp.ne.s32.totalorder %s159, %s161
      %p168 = scmp.eq.s32.totalorder %s25, 1
      %p169 = por %p167, %p168
      %p170 = scmp.ne.s32.totalorder %s161, %s162
      %p171 = scmp.eq.s32.totalorder %s25, 0
      %p172 = por %p170, %p171
      %p173 = scmp.ne.s32.totalorder %s161, %s162
      %p174 = scmp.eq.s32.totalorder %s26, 1
      %p175 = por %p173, %p174
      %p177 = scmp.ne.s32.totalorder %s162, %s176
      %p178 = scmp.eq.s32.totalorder %s26, 0
      %p179 = por %p177, %p178
      %s181 = sadd.s32 %s180, 1
      %p184 = scmp.eq.s32.totalorder %s20, 1
      %p185 = scmp.ne.s32.totalorder %s180, %s182
      %p186 = scmp.eq.s32.totalorder %s20, 0
      %p187 = por %p185, %p186
      %p188 = scmp.ne.s32.totalorder %s180, %s182
      %p189 = scmp.eq.s32.totalorder %s25, 1
      %p190 = por %p188, %p189
      %p191 = scmp.ne.s32.totalorder %s182, %s183
      %p192 = scmp.eq.s32.totalorder %s25, 0
      %p193 = por %p191, %p192
      %p194 = scmp.ne.s32.totalorder %s182, %s183
      %p195 = scmp.eq.s32.totalorder %s26, 1
      %p196 = por %p194, %p195
      %p198 = scmp.ne.s32.totalorder %s183, %s197
      %p199 = scmp.eq.s32.totalorder %s26, 0
      %p200 = por %p198, %p199
      %s202 = sadd.s32 %s201, 1
      %p205 = scmp.eq.s32.totalorder %s20, 1
      %p206 = scmp.ne.s32.totalorder %s201, %s203
      %p207 = scmp.eq.s32.totalorder %s20, 0
      %p208 = por %p206, %p207
      %p209 = scmp.ne.s32.totalorder %s201, %s203
      %p210 = scmp.eq.s32.totalorder %s25, 1
      %p211 = por %p209, %p210
      %p212 = scmp.ne.s32.totalorder %s203, %s204
      %p213 = scmp.eq.s32.totalorder %s25, 0
      %p214 = por %p212, %p213
      %p215 = scmp.ne.s32.totalorder %s203, %s204
      %p216 = scmp.eq.s32.totalorder %s26, 1
      %p217 = por %p215, %p216
      %p219 = scmp.ne.s32.totalorder %s204, %s218
      %p220 = scmp.eq.s32.totalorder %s26, 0
      %p221 = por %p219, %p220
      %s222 = ssub.s32 %s20, %s27
      %p223 = scmp.eq.s32.totalorder %s222, 0
      %s225 = sadd.s32 %s224, 1
      %s226 = scalar_select %p223, %s224, %s225
      %p229 = pneg %p223
      %p230 = scmp.eq.s32.totalorder %s20, 1
      %p231 = por %p229, %p230
      %p232 = scmp.ne.s32.totalorder %s224, %s227
      %p233 = scmp.eq.s32.totalorder %s20, 0
      %p234 = por %p232, %p233
      %p235 = scmp.ne.s32.totalorder %s224, %s227
      %p236 = scmp.eq.s32.totalorder %s25, 1
      %p237 = por %p235, %p236
      %p238 = scmp.ne.s32.totalorder %s227, %s228
      %p239 = scmp.eq.s32.totalorder %s25, 0
      %p240 = por %p238, %p239
      %p241 = scmp.ne.s32.totalorder %s227, %s228
      %p242 = scmp.eq.s32.totalorder %s26, 1
      %p243 = por %p241, %p242
      %p245 = scmp.ne.s32.totalorder %s228, %s244
      %p246 = scmp.eq.s32.totalorder %s26, 0
      %p247 = por %p245, %p246
      %p248 = scmp.le.s32.totalorder 1, %s20
      %p249 = scmp.lt.s32.totalorder %s20, 3
      %p250 = pnand %p248, %p249
      %p251 = pneg %p250
      // Predicated region
      $region9: #{tpu_custom_call.1} parent=5 // pred_check
        _
      $region10: #{tpu_custom_call.1} parent=5 // pred_check_branch
        %253 = sbr.rel (%p250) target = $region12
      $region11: #{tpu_custom_call.1} parent=5 // pred_region
        %s254 = ssub.s32 %s20, 1
        // Predicated region
        $region13: #{tpu_custom_call.1} parent=11 // pred_check
          %p255 = pneg %p67
        $region14: #{tpu_custom_call.1} parent=11 // pred_check_branch
          %257 = sbr.rel (%p255) target = $region16
        $region15: #{tpu_custom_call.1} parent=11 // pred_region
          _
        $region16: #{tpu_custom_call.1} parent=11 // pred_fallthru
          _
        // Predicated region
        $region17: #{tpu_custom_call.1} parent=11 // pred_check
          %p258 = pneg %p88
        $region18: #{tpu_custom_call.1} parent=11 // pred_check_branch
          %260 = sbr.rel (%p258) target = $region20
        $region19: #{tpu_custom_call.1} parent=11 // pred_region
          _
        $region20: #{tpu_custom_call.1} parent=11 // pred_fallthru
          _
        // Predicated region
        $region21: #{tpu_custom_call.1} parent=11 // pred_check
          %p261 = pneg %p109
        $region22: #{tpu_custom_call.1} parent=11 // pred_check_branch
          %263 = sbr.rel (%p261) target = $region24
        $region23: #{tpu_custom_call.1} parent=11 // pred_region
          _
        $region24: #{tpu_custom_call.1} parent=11 // pred_fallthru
          _
        // Predicated region
        $region25: #{tpu_custom_call.1} parent=11 // pred_check
          %p264 = pneg %p130
        $region26: #{tpu_custom_call.1} parent=11 // pred_check_branch
          %266 = sbr.rel (%p264) target = $region28
        $region27: #{tpu_custom_call.1} parent=11 // pred_region
          _
        $region28: #{tpu_custom_call.1} parent=11 // pred_fallthru
          _
        // Predicated region
        $region29: #{tpu_custom_call.1} parent=11 // pred_check
          %p267 = pneg %p151
        $region30: #{tpu_custom_call.1} parent=11 // pred_check_branch
          %269 = sbr.rel (%p267) target = $region32
        $region31: #{tpu_custom_call.1} parent=11 // pred_region
          _
        $region32: #{tpu_custom_call.1} parent=11 // pred_fallthru
          _
        // Predicated region
        $region33: #{tpu_custom_call.1} parent=11 // pred_check
          %p270 = pneg %p172
        $region34: #{tpu_custom_call.1} parent=11 // pred_check_branch
          %272 = sbr.rel (%p270) target = $region36
        $region35: #{tpu_custom_call.1} parent=11 // pred_region
          _
        $region36: #{tpu_custom_call.1} parent=11 // pred_fallthru
          _
        // Predicated region
        $region37: #{tpu_custom_call.1} parent=11 // pred_check
          %p273 = pneg %p193
        $region38: #{tpu_custom_call.1} parent=11 // pred_check_branch
          %275 = sbr.rel (%p273) target = $region40
        $region39: #{tpu_custom_call.1} parent=11 // pred_region
          _
        $region40: #{tpu_custom_call.1} parent=11 // pred_fallthru
          _
        // Predicated region
        $region41: #{tpu_custom_call.1} parent=11 // pred_check
          %p276 = pneg %p214
        $region42: #{tpu_custom_call.1} parent=11 // pred_check_branch
          %278 = sbr.rel (%p276) target = $region44
        $region43: #{tpu_custom_call.1} parent=11 // pred_region
          _
        $region44: #{tpu_custom_call.1} parent=11 // pred_fallthru
          _
      $region12: #{tpu_custom_call.1} parent=5 // pred_fallthru
        _
      %p279 = scmp.lt.s32.totalorder %s20, 2
      // Predicated region
      $region45: #{tpu_custom_call.1} parent=5 // pred_check
        %p280 = pneg %p279
      $region46: #{tpu_custom_call.1} parent=5 // pred_check_branch
        %282 = sbr.rel (%p280) target = $region48
      $region47: #{tpu_custom_call.1} parent=5 // pred_region
        // Predicated region
        $region49: #{tpu_custom_call.1} parent=47 // pred_check
          %p283 = pneg %p40
        $region50: #{tpu_custom_call.1} parent=47 // pred_check_branch
          %285 = sbr.rel (%p283) target = $region52
        $region51: #{tpu_custom_call.1} parent=47 // pred_region
          %s286 = smul.u32 2, %s20
          %p287 = scmp.lt.s32.totalorder %s286, 3
          %s288 = scalar_select %p287, %s286, 3
          %s289 = smul.addr %s288, 2
          %s290 = scalar_lea.vmem %s0, %s289
          %s291 = smul.u32 2, %s20
        $region52: #{tpu_custom_call.1} parent=47 // pred_fallthru
          _
      $region48: #{tpu_custom_call.1} parent=5 // pred_fallthru
        _
      %p292 = scmp.le.s32.totalorder 1, %s20
      %p293 = scmp.lt.s32.totalorder %s20, 3
      %p294 = pnand %p292, %p293
      %p295 = pneg %p294
      // Predicated region
      $region53: #{tpu_custom_call.1} parent=5 // pred_check
        _
      $region54: #{tpu_custom_call.1} parent=5 // pred_check_branch
        %297 = sbr.rel (%p294) target = $region56
      $region55: #{tpu_custom_call.1} parent=5 // pred_region
        %s298 = ssub.s32 %s20, 1
        %s299 = smul.u32 2, %s25
        %p300 = scmp.lt.s32.totalorder %s299, 3
        %s301 = scalar_select %p300, %s299, 3
        %s302 = smul.addr %s301, 2
        %s303 = scalar_lea.vmem %s0, %s302
        %p304 = pneg %p46
        %p305 = pneg %p43
        %p306 = pneg %p67
        %p307 = pneg %p64
        %p308 = pneg %p88
        %p309 = pneg %p85
        %p310 = pneg %p109
        %p311 = pneg %p106
        %p312 = pneg %p130
        %p313 = pneg %p127
        %p314 = pneg %p151
        %p315 = pneg %p148
        %p316 = pneg %p172
        %p317 = pneg %p169
        %p318 = pneg %p193
        %p319 = pneg %p190
        %p320 = pneg %p214
        %p321 = pneg %p211
        %p322 = pneg %p240
        %p323 = pneg %p237
        %s324 = sand.u32 %s227, 1
        %s325 = scalar_lea.sflag [#allocation4], %s324
        %s326 = sand.u32 %s227, 1
        %s327 = smul.addr %s326, 2
        %s328 = scalar_lea.vmem [#allocation3], %s327
        %s329 = smul.u32 2, %s25
        %p330 = scmp.lt.s32.totalorder %s329, 3
        %s331 = scalar_select %p330, %s329, 3
        %s332 = smul.addr %s331, 2
        %s333 = scalar_lea.vmem %s0, %s332
        %s334 = smul.u32 2, %s25
        %s335 = smul.u32 2, %s25
        %v336 = vld [vmem:[%s333] sm:$0xf]
        %v337 = vld [vmem:[%s1] sm:$0xff]
        %v338 = vld [vmem:[%s1 + $0x8] sm:$0xff]
        %v339 = vld [vmem:[%s1 + $0x10] sm:$0xff]
        %v340 = vld [vmem:[%s1 + $0x18] sm:$0xff]
        %v341 = vld [vmem:[%s2] sm:$0xff]
        %v342 = vld [vmem:[%s2 + $0x8] sm:$0xff]
        %v343 = vld [vmem:[%s2 + $0x10] sm:$0xff]
        %v344 = vld [vmem:[%s2 + $0x18] sm:$0xff]
        %346 = vset.pattern.permute.xlu0 0
        %347 = vperm.xlu0 %346, %v337
        %v348 = vpop.permute.xlu0 %347
        %351 = vset.pattern.permute.xlu0 0
        %352 = vperm.xlu0 %351, %v338
        %v353 = vpop.permute.xlu0 %352
        %356 = vset.pattern.permute.xlu0 0
        %357 = vperm.xlu0 %356, %v339
        %v358 = vpop.permute.xlu0 %357
        %361 = vset.pattern.permute.xlu0 0
        %362 = vperm.xlu0 %361, %v340
        %v363 = vpop.permute.xlu0 %362
        %v366 = vperm.slane %v336, 0
        %v367 = vperm.slane %v336, 2
        %v370 = vperm.slane %v366, 0
        %v371 = vperm.slane %v367, 0
        %v372 = vmul.f32 %v348, %v370
        %v373 = vmul.f32 %v348, %v371
        %v374 = vmul.f32 %v353, %v370
        %v375 = vmul.f32 %v353, %v371
        %v376 = vmul.f32 %v358, %v370
        %v377 = vmul.f32 %v358, %v371
        %v378 = vmul.f32 %v363, %v370
        %v379 = vmul.f32 %v363, %v371
        %381 = vset.pattern.permute.xlu0 0
        %382 = vperm.xlu0 %381, %v341
        %v383 = vpop.permute.xlu0 %382
        %386 = vset.pattern.permute.xlu0 0
        %387 = vperm.xlu0 %386, %v342
        %v388 = vpop.permute.xlu0 %387
        %391 = vset.pattern.permute.xlu0 0
        %392 = vperm.xlu0 %391, %v343
        %v393 = vpop.permute.xlu0 %392
        %396 = vset.pattern.permute.xlu0 0
        %397 = vperm.xlu0 %396, %v344
        %v398 = vpop.permute.xlu0 %397
        %v400 = vadd.f32 %v383, %v372
        %v401 = vadd.f32 %v383, %v373
        %v402 = vadd.f32 %v388, %v374
        %v403 = vadd.f32 %v388, %v375
        %v404 = vadd.f32 %v393, %v376
        %v405 = vadd.f32 %v393, %v377
        %v406 = vadd.f32 %v398, %v378
        %v407 = vadd.f32 %v398, %v379
        %408 = vset.pattern.permute.xlu0 1
        %409 = vperm.xlu0 %408, %v337
        %v410 = vpop.permute.xlu0 %409
        %412 = vset.pattern.permute.xlu0 1
        %413 = vperm.xlu0 %412, %v338
        %v414 = vpop.permute.xlu0 %413
        %416 = vset.pattern.permute.xlu0 1
        %417 = vperm.xlu0 %416, %v339
        %v418 = vpop.permute.xlu0 %417
        %420 = vset.pattern.permute.xlu0 1
        %421 = vperm.xlu0 %420, %v340
        %v422 = vpop.permute.xlu0 %421
        %v424 = vperm.slane %v336, 1
        %v425 = vperm.slane %v336, 3
        %v428 = vperm.slane %v424, 1
        %v429 = vperm.slane %v425, 1
        %v430 = vmul.f32 %v410, %v428
        %v431 = vmul.f32 %v410, %v429
        %v432 = vmul.f32 %v414, %v428
        %v433 = vmul.f32 %v414, %v429
        %v434 = vmul.f32 %v418, %v428
        %v435 = vmul.f32 %v418, %v429
        %v436 = vmul.f32 %v422, %v428
        %v437 = vmul.f32 %v422, %v429
        %v438 = vadd.f32 %v400, %v430
        %v439 = vadd.f32 %v401, %v431
        %v440 = vadd.f32 %v402, %v432
        %v441 = vadd.f32 %v403, %v433
        %v442 = vadd.f32 %v404, %v434
        %v443 = vadd.f32 %v405, %v435
        %v444 = vadd.f32 %v406, %v436
        %v445 = vadd.f32 %v407, %v437
        %v446 = vmul.f32 %v438, 30.0
        %v447 = vmul.f32 %v439, 30.0
        %v448 = vmul.f32 %v440, 30.0
        %v449 = vmul.f32 %v441, 30.0
        %v450 = vmul.f32 %v442, 30.0
        %v451 = vmul.f32 %v443, 30.0
        %v452 = vmul.f32 %v444, 30.0
        %v453 = vmul.f32 %v445, 30.0
        %v454 = vand.u32 2147483647, %v446
        %vm455 = vcmp.le.f32.partialorder %v454, 0.7853982
        %vm456 = vcmp.lt.s32.totalorder %v446, 0
        %v457 = vand.u32 %v446, 2139095040
        %v458 = vshrl.u32 %v457, 23
        %v459 = vsub.s32 %v458, 127
        %v460 = vand.u32 2147483647, %v446
        %v461 = vand.u32 %v460, 8388607
        %v462 = vor.u32 %v461, 8388608
        %v463 = vsub.s32 0, %v462
        %v464 = vadd.s32 %v459, 1
        %vm465 = vcmp.gt.s32.totalorder %v464, 0
        %v466 = vsel %vm465, %v464, 0
        %v467 = vshrl.u32 %v466, 5
        %v468 = vand.u32 %v466, 31
        %v469 = vsub.s32 32, %v468
        %v470 = vshrl.u32 683565275, %v469
        %v471 = vshll.u32 683565275, %v468
        %v472 = vshrl.u32 2475754826, %v469
        %v473 = vor.u32 %v471, %v472
        %v474 = vshll.u32 2475754826, %v468
        %v475 = vshrl.u32 2131351028, %v469
        %v476 = vor.u32 %v474, %v475
        %v477 = vshll.u32 2131351028, %v468
        %v478 = vshrl.u32 2102212464, %v469
        %v479 = vor.u32 %v477, %v478
        %v480 = vshll.u32 2102212464, %v468
        %v481 = vshrl.u32 920167782, %v469
        %v482 = vor.u32 %v480, %v481
        %v483 = vshll.u32 920167782, %v468
        %v484 = vshrl.u32 1326507024, %v469
        %v485 = vor.u32 %v483, %v484
        %vm486 = vcmp.lt.s32.totalorder %v467, 1
        %vm487 = vcmp.lt.s32.totalorder %v467, 2
        %vm488 = vcmp.lt.s32.totalorder %v467, 3
        %vm489 = vcmp.lt.s32.totalorder %v467, 4
        %v490 = vsel %vm486, %v470, %v473
        %v491 = vsel %vm489, %v479, 2102212464
        %v492 = vsel %vm488, %v476, %v491
        %v493 = vsel %vm487, %v490, %v492
        %v494 = vsel %vm486, %v473, %v476
        %v495 = vsel %vm489, %v482, 920167782
        %v496 = vsel %vm488, %v479, %v495
        %v497 = vsel %vm487, %v494, %v496
        %v498 = vsel %vm486, %v476, %v479
        %v499 = vsel %vm489, %v485, 1326507024
        %v500 = vsel %vm488, %v482, %v499
        %v501 = vsel %vm487, %v498, %v500
        %v502 = vshll.u32 %v462, 8
        %v503 = vand.u32 %v502, 65535
        %v504 = vshrl.u32 %v502, 16
        %v505 = vand.u32 %v501, 65535
        %v506 = vshrl.u32 %v501, 16
        %v507 = vmul.u32 %v503, %v505
        %v508 = vmul.u32 %v503, %v506
        %v509 = vmul.u32 %v504, %v505
        %v510 = vmul.u32 %v504, %v506
        %v511 = vshll.u32 %v508, 16
        %v512 = vshrl.u32 %v508, 16
        %v513 = vshll.u32 %v509, 16
        %v514 = vshrl.u32 %v509, 16
        %vm515 = vc.u32 %v507, %v511
        %v516 = vsel %vm515, 1, 0
        %v517 = vadd.s32 %v507, %v511
        %v518 = vadd.s32 %v510, %v516
        %vm519 = vc.u32 %v517, %v513
        %v520 = vsel %vm519, 1, 0
        %v521 = vadd.s32 %v517, %v513
        %v522 = vadd.s32 %v518, %v520
        %v523 = vadd.s32 %v522, %v512
        %v524 = vadd.s32 %v523, %v514
        %v525 = vand.u32 %v502, 65535
        %v526 = vshrl.u32 %v502, 16
        %v527 = vand.u32 %v497, 65535
        %v528 = vshrl.u32 %v497, 16
        %v529 = vmul.u32 %v525, %v527
        %v530 = vmul.u32 %v525, %v528
        %v531 = vmul.u32 %v526, %v527
        %v532 = vmul.u32 %v526, %v528
        %v533 = vshll.u32 %v530, 16
        %v534 = vshrl.u32 %v530, 16
        %v535 = vshll.u32 %v531, 16
        %v536 = vshrl.u32 %v531, 16
        %vm537 = vc.u32 %v529, %v533
        %v538 = vsel %vm537, 1, 0
        %v539 = vadd.s32 %v529, %v533
        %v540 = vadd.s32 %v532, %v538
        %vm541 = vc.u32 %v539, %v535
        %v542 = vsel %vm541, 1, 0
        %v543 = vadd.s32 %v539, %v535
        %v544 = vadd.s32 %v540, %v542
        %v545 = vadd.s32 %v544, %v534
        %v546 = vadd.s32 %v545, %v536
        %v547 = vmul.u32 %v502, %v493
        %v548 = vadd.s32 %v524, %v543
        %vm549 = vc.u32 %v524, %v543
        %v550 = vadd.s32 %v546, 1
        %v551 = vsel %vm549, %v550, %v546
        %v552 = vadd.s32 %v547, %v551
        %v553 = vadd.s32 %v552, 536870912
        %v554 = vshrl.u32 %v553, 30
        %v555 = vshll.u32 %v554, 30
        %v556 = vsub.s32 %v552, %v555
        %vm557 = vcmp.lt.s32.totalorder %v556, 0
        %v558 = vsub.s32 0, %v556
        %v559 = vsel %vm557, %v558, %v556
        %v560 = vclz %v559
        %v561 = vsub.s32 %v560, 2
        %vm562 = vcmp.gt.s32.totalorder 0, %v561
        %v563 = vsel %vm562, 0, %v561
        %v564 = vsub.s32 32, %v563
        %v565 = vshll.u32 %v556, %v563
        %v566 = vshrl.u32 %v548, %v564
        %v567 = vor.u32 %v565, %v566
        %v568 = vsub.s32 4294967266, %v563
        %v569 = vadd.s32 %v568, 127
        %v570 = vshll.u32 %v569, 23
        %v571 = vor.u32 4788187, %v570
        %v572 = vand.u32 2147483647, %v571
        %v574 = vcvt.s32.f32 %v567
        %v575 = vmul.f32 %v574, %v572
        %v576 = vxor.u32 %v575, 2147483648
        %v577 = vsel %vm456, %v576, %v575
        %v578 = vsub.s32 4, %v554
        %v579 = vsel %vm456, %v578, %v554
        %v580 = vsel %vm455, %v446, %v577
        %v581 = vsel %vm455, 0, %v579
        %v582 = vmul.f32 %v580, %v580
        %v583 = vmul.f32 %v582, -0.001358992
        %v584 = vadd.f32 %v583, 0.041655596
        %v585 = vmul.f32 %v582, %v584
        %v586 = vadd.f32 %v585, -0.4999988
        %v587 = vmul.f32 %v582, %v586
        %v588 = vadd.f32 1.0, %v587
        %v589 = vmul.f32 %v580, %v580
        %v590 = vmul.f32 %v589, -0.00019511016
        %v591 = vadd.f32 %v590, 0.008332121
        %v592 = vmul.f32 %v589, %v591
        %v593 = vadd.f32 %v592, -0.16666654
        %v594 = vmul.f32 %v589, %v593
        %v595 = vadd.f32 %v594, 1.0
        %v596 = vmul.f32 %v595, %v580
        %vm597 = vweird.f32 %v446
        %v598 = vadd.s32 %v581, 3
        %v599 = vand.u32 %v598, 3
        %vm600 = vcmp.lt.s32.totalorder %v599, 2
        %vm601 = vcmp.eq.s32.totalorder %v599, 0
        %v602 = vxor.u32 %v596, 2147483648
        %v603 = vsel %vm601, %v588, %v602
        %vm604 = vcmp.eq.s32.totalorder %v599, 2
        %v605 = vxor.u32 %v588, 2147483648
        %v606 = vsel %vm604, %v605, %v596
        %v607 = vsel %vm600, %v603, %v606
        %v608 = vsel %vm597, nan, %v607
        %v609 = vand.u32 2147483647, %v447
        %vm610 = vcmp.le.f32.partialorder %v609, 0.7853982
        %vm611 = vcmp.lt.s32.totalorder %v447, 0
        %v612 = vand.u32 %v447, 2139095040
        %v613 = vshrl.u32 %v612, 23
        %v614 = vsub.s32 %v613, 127
        %v615 = vand.u32 2147483647, %v447
        %v616 = vand.u32 %v615, 8388607
        %v617 = vor.u32 %v616, 8388608
        %v618 = vsub.s32 0, %v617
        %v619 = vadd.s32 %v614, 1
        %vm620 = vcmp.gt.s32.totalorder %v619, 0
        %v621 = vsel %vm620, %v619, 0
        %v622 = vshrl.u32 %v621, 5
        %v623 = vand.u32 %v621, 31
        %v624 = vsub.s32 32, %v623
        %v625 = vshrl.u32 683565275, %v624
        %v626 = vshll.u32 683565275, %v623
        %v627 = vshrl.u32 2475754826, %v624
        %v628 = vor.u32 %v626, %v627
        %v629 = vshll.u32 2475754826, %v623
        %v630 = vshrl.u32 2131351028, %v624
        %v631 = vor.u32 %v629, %v630
        %v632 = vshll.u32 2131351028, %v623
        %v633 = vshrl.u32 2102212464, %v624
        %v634 = vor.u32 %v632, %v633
        %v635 = vshll.u32 2102212464, %v623
        %v636 = vshrl.u32 920167782, %v624
        %v637 = vor.u32 %v635, %v636
        %v638 = vshll.u32 920167782, %v623
        %v639 = vshrl.u32 1326507024, %v624
        %v640 = vor.u32 %v638, %v639
        %vm641 = vcmp.lt.s32.totalorder %v622, 1
        %vm642 = vcmp.lt.s32.totalorder %v622, 2
        %vm643 = vcmp.lt.s32.totalorder %v622, 3
        %vm644 = vcmp.lt.s32.totalorder %v622, 4
        %v645 = vsel %vm641, %v625, %v628
        %v646 = vsel %vm644, %v634, 2102212464
        %v647 = vsel %vm643, %v631, %v646
        %v648 = vsel %vm642, %v645, %v647
        %v649 = vsel %vm641, %v628, %v631
        %v650 = vsel %vm644, %v637, 920167782
        %v651 = vsel %vm643, %v634, %v650
        %v652 = vsel %vm642, %v649, %v651
        %v653 = vsel %vm641, %v631, %v634
        %v654 = vsel %vm644, %v640, 1326507024
        %v655 = vsel %vm643, %v637, %v654
        %v656 = vsel %vm642, %v653, %v655
        %v657 = vshll.u32 %v617, 8
        %v658 = vand.u32 %v657, 65535
        %v659 = vshrl.u32 %v657, 16
        %v660 = vand.u32 %v656, 65535
        %v661 = vshrl.u32 %v656, 16
        %v662 = vmul.u32 %v658, %v660
        %v663 = vmul.u32 %v658, %v661
        %v664 = vmul.u32 %v659, %v660
        %v665 = vmul.u32 %v659, %v661
        %v666 = vshll.u32 %v663, 16
        %v667 = vshrl.u32 %v663, 16
        %v668 = vshll.u32 %v664, 16
        %v669 = vshrl.u32 %v664, 16
        %vm670 = vc.u32 %v662, %v666
        %v671 = vsel %vm670, 1, 0
        %v672 = vadd.s32 %v662, %v666
        %v673 = vadd.s32 %v665, %v671
        %vm674 = vc.u32 %v672, %v668
        %v675 = vsel %vm674, 1, 0
        %v676 = vadd.s32 %v672, %v668
        %v677 = vadd.s32 %v673, %v675
        %v678 = vadd.s32 %v677, %v667
        %v679 = vadd.s32 %v678, %v669
        %v680 = vand.u32 %v657, 65535
        %v681 = vshrl.u32 %v657, 16
        %v682 = vand.u32 %v652, 65535
        %v683 = vshrl.u32 %v652, 16
        %v684 = vmul.u32 %v680, %v682
        %v685 = vmul.u32 %v680, %v683
        %v686 = vmul.u32 %v681, %v682
        %v687 = vmul.u32 %v681, %v683
        %v688 = vshll.u32 %v685, 16
        %v689 = vshrl.u32 %v685, 16
        %v690 = vshll.u32 %v686, 16
        %v691 = vshrl.u32 %v686, 16
        %vm692 = vc.u32 %v684, %v688
        %v693 = vsel %vm692, 1, 0
        %v694 = vadd.s32 %v684, %v688
        %v695 = vadd.s32 %v687, %v693
        %vm696 = vc.u32 %v694, %v690
        %v697 = vsel %vm696, 1, 0
        %v698 = vadd.s32 %v694, %v690
        %v699 = vadd.s32 %v695, %v697
        %v700 = vadd.s32 %v699, %v689
        %v701 = vadd.s32 %v700, %v691
        %v702 = vmul.u32 %v657, %v648
        %v703 = vadd.s32 %v679, %v698
        %vm704 = vc.u32 %v679, %v698
        %v705 = vadd.s32 %v701, 1
        %v706 = vsel %vm704, %v705, %v701
        %v707 = vadd.s32 %v702, %v706
        %v708 = vadd.s32 %v707, 536870912
        %v709 = vshrl.u32 %v708, 30
        %v710 = vshll.u32 %v709, 30
        %v711 = vsub.s32 %v707, %v710
        %vm712 = vcmp.lt.s32.totalorder %v711, 0
        %v713 = vsub.s32 0, %v711
        %v714 = vsel %vm712, %v713, %v711
        %v715 = vclz %v714
        %v716 = vsub.s32 %v715, 2
        %vm717 = vcmp.gt.s32.totalorder 0, %v716
        %v718 = vsel %vm717, 0, %v716
        %v719 = vsub.s32 32, %v718
        %v720 = vshll.u32 %v711, %v718
        %v721 = vshrl.u32 %v703, %v719
        %v722 = vor.u32 %v720, %v721
        %v723 = vsub.s32 4294967266, %v718
        %v724 = vadd.s32 %v723, 127
        %v725 = vshll.u32 %v724, 23
        %v726 = vor.u32 4788187, %v725
        %v727 = vand.u32 2147483647, %v726
        %v729 = vcvt.s32.f32 %v722
        %v730 = vmul.f32 %v729, %v727
        %v731 = vxor.u32 %v730, 2147483648
        %v732 = vsel %vm611, %v731, %v730
        %v733 = vsub.s32 4, %v709
        %v734 = vsel %vm611, %v733, %v709
        %v735 = vsel %vm610, %v447, %v732
        %v736 = vsel %vm610, 0, %v734
        %v737 = vmul.f32 %v735, %v735
        %v738 = vmul.f32 %v737, -0.001358992
        %v739 = vadd.f32 %v738, 0.041655596
        %v740 = vmul.f32 %v737, %v739
        %v741 = vadd.f32 %v740, -0.4999988
        %v742 = vmul.f32 %v737, %v741
        %v743 = vadd.f32 1.0, %v742
        %v744 = vmul.f32 %v735, %v735
        %v745 = vmul.f32 %v744, -0.00019511016
        %v746 = vadd.f32 %v745, 0.008332121
        %v747 = vmul.f32 %v744, %v746
        %v748 = vadd.f32 %v747, -0.16666654
        %v749 = vmul.f32 %v744, %v748
        %v750 = vadd.f32 %v749, 1.0
        %v751 = vmul.f32 %v750, %v735
        %vm752 = vweird.f32 %v447
        %v753 = vadd.s32 %v736, 3
        %v754 = vand.u32 %v753, 3
        %vm755 = vcmp.lt.s32.totalorder %v754, 2
        %vm756 = vcmp.eq.s32.totalorder %v754, 0
        %v757 = vxor.u32 %v751, 2147483648
        %v758 = vsel %vm756, %v743, %v757
        %vm759 = vcmp.eq.s32.totalorder %v754, 2
        %v760 = vxor.u32 %v743, 2147483648
        %v761 = vsel %vm759, %v760, %v751
        %v762 = vsel %vm755, %v758, %v761
        %v763 = vsel %vm752, nan, %v762
        %v764 = vand.u32 2147483647, %v448
        %vm765 = vcmp.le.f32.partialorder %v764, 0.7853982
        %vm766 = vcmp.lt.s32.totalorder %v448, 0
        %v767 = vand.u32 %v448, 2139095040
        %v768 = vshrl.u32 %v767, 23
        %v769 = vsub.s32 %v768, 127
        %v770 = vand.u32 2147483647, %v448
        %v771 = vand.u32 %v770, 8388607
        %v772 = vor.u32 %v771, 8388608
        %v773 = vsub.s32 0, %v772
        %v774 = vadd.s32 %v769, 1
        %vm775 = vcmp.gt.s32.totalorder %v774, 0
        %v776 = vsel %vm775, %v774, 0
        %v777 = vshrl.u32 %v776, 5
        %v778 = vand.u32 %v776, 31
        %v779 = vsub.s32 32, %v778
        %v780 = vshrl.u32 683565275, %v779
        %v781 = vshll.u32 683565275, %v778
        %v782 = vshrl.u32 2475754826, %v779
        %v783 = vor.u32 %v781, %v782
        %v784 = vshll.u32 2475754826, %v778
        %v785 = vshrl.u32 2131351028, %v779
        %v786 = vor.u32 %v784, %v785
        %v787 = vshll.u32 2131351028, %v778
        %v788 = vshrl.u32 2102212464, %v779
        %v789 = vor.u32 %v787, %v788
        %v790 = vshll.u32 2102212464, %v778
        %v791 = vshrl.u32 920167782, %v779
        %v792 = vor.u32 %v790, %v791
        %v793 = vshll.u32 920167782, %v778
        %v794 = vshrl.u32 1326507024, %v779
        %v795 = vor.u32 %v793, %v794
        %vm796 = vcmp.lt.s32.totalorder %v777, 1
        %vm797 = vcmp.lt.s32.totalorder %v777, 2
        %vm798 = vcmp.lt.s32.totalorder %v777, 3
        %vm799 = vcmp.lt.s32.totalorder %v777, 4
        %v800 = vsel %vm796, %v780, %v783
        %v801 = vsel %vm799, %v789, 2102212464
        %v802 = vsel %vm798, %v786, %v801
        %v803 = vsel %vm797, %v800, %v802
        %v804 = vsel %vm796, %v783, %v786
        %v805 = vsel %vm799, %v792, 920167782
        %v806 = vsel %vm798, %v789, %v805
        %v807 = vsel %vm797, %v804, %v806
        %v808 = vsel %vm796, %v786, %v789
        %v809 = vsel %vm799, %v795, 1326507024
        %v810 = vsel %vm798, %v792, %v809
        %v811 = vsel %vm797, %v808, %v810
        %v812 = vshll.u32 %v772, 8
        %v813 = vand.u32 %v812, 65535
        %v814 = vshrl.u32 %v812, 16
        %v815 = vand.u32 %v811, 65535
        %v816 = vshrl.u32 %v811, 16
        %v817 = vmul.u32 %v813, %v815
        %v818 = vmul.u32 %v813, %v816
        %v819 = vmul.u32 %v814, %v815
        %v820 = vmul.u32 %v814, %v816
        %v821 = vshll.u32 %v818, 16
        %v822 = vshrl.u32 %v818, 16
        %v823 = vshll.u32 %v819, 16
        %v824 = vshrl.u32 %v819, 16
        %vm825 = vc.u32 %v817, %v821
        %v826 = vsel %vm825, 1, 0
        %v827 = vadd.s32 %v817, %v821
        %v828 = vadd.s32 %v820, %v826
        %vm829 = vc.u32 %v827, %v823
        %v830 = vsel %vm829, 1, 0
        %v831 = vadd.s32 %v827, %v823
        %v832 = vadd.s32 %v828, %v830
        %v833 = vadd.s32 %v832, %v822
        %v834 = vadd.s32 %v833, %v824
        %v835 = vand.u32 %v812, 65535
        %v836 = vshrl.u32 %v812, 16
        %v837 = vand.u32 %v807, 65535
        %v838 = vshrl.u32 %v807, 16
        %v839 = vmul.u32 %v835, %v837
        %v840 = vmul.u32 %v835, %v838
        %v841 = vmul.u32 %v836, %v837
        %v842 = vmul.u32 %v836, %v838
        %v843 = vshll.u32 %v840, 16
        %v844 = vshrl.u32 %v840, 16
        %v845 = vshll.u32 %v841, 16
        %v846 = vshrl.u32 %v841, 16
        %vm847 = vc.u32 %v839, %v843
        %v848 = vsel %vm847, 1, 0
        %v849 = vadd.s32 %v839, %v843
        %v850 = vadd.s32 %v842, %v848
        %vm851 = vc.u32 %v849, %v845
        %v852 = vsel %vm851, 1, 0
        %v853 = vadd.s32 %v849, %v845
        %v854 = vadd.s32 %v850, %v852
        %v855 = vadd.s32 %v854, %v844
        %v856 = vadd.s32 %v855, %v846
        %v857 = vmul.u32 %v812, %v803
        %v858 = vadd.s32 %v834, %v853
        %vm859 = vc.u32 %v834, %v853
        %v860 = vadd.s32 %v856, 1
        %v861 = vsel %vm859, %v860, %v856
        %v862 = vadd.s32 %v857, %v861
        %v863 = vadd.s32 %v862, 536870912
        %v864 = vshrl.u32 %v863, 30
        %v865 = vshll.u32 %v864, 30
        %v866 = vsub.s32 %v862, %v865
        %vm867 = vcmp.lt.s32.totalorder %v866, 0
        %v868 = vsub.s32 0, %v866
        %v869 = vsel %vm867, %v868, %v866
        %v870 = vclz %v869
        %v871 = vsub.s32 %v870, 2
        %vm872 = vcmp.gt.s32.totalorder 0, %v871
        %v873 = vsel %vm872, 0, %v871
        %v874 = vsub.s32 32, %v873
        %v875 = vshll.u32 %v866, %v873
        %v876 = vshrl.u32 %v858, %v874
        %v877 = vor.u32 %v875, %v876
        %v878 = vsub.s32 4294967266, %v873
        %v879 = vadd.s32 %v878, 127
        %v880 = vshll.u32 %v879, 23
        %v881 = vor.u32 4788187, %v880
        %v882 = vand.u32 2147483647, %v881
        %v884 = vcvt.s32.f32 %v877
        %v885 = vmul.f32 %v884, %v882
        %v886 = vxor.u32 %v885, 2147483648
        %v887 = vsel %vm766, %v886, %v885
        %v888 = vsub.s32 4, %v864
        %v889 = vsel %vm766, %v888, %v864
        %v890 = vsel %vm765, %v448, %v887
        %v891 = vsel %vm765, 0, %v889
        %v892 = vmul.f32 %v890, %v890
        %v893 = vmul.f32 %v892, -0.001358992
        %v894 = vadd.f32 %v893, 0.041655596
        %v895 = vmul.f32 %v892, %v894
        %v896 = vadd.f32 %v895, -0.4999988
        %v897 = vmul.f32 %v892, %v896
        %v898 = vadd.f32 1.0, %v897
        %v899 = vmul.f32 %v890, %v890
        %v900 = vmul.f32 %v899, -0.00019511016
        %v901 = vadd.f32 %v900, 0.008332121
        %v902 = vmul.f32 %v899, %v901
        %v903 = vadd.f32 %v902, -0.16666654
        %v904 = vmul.f32 %v899, %v903
        %v905 = vadd.f32 %v904, 1.0
        %v906 = vmul.f32 %v905, %v890
        %vm907 = vweird.f32 %v448
        %v908 = vadd.s32 %v891, 3
        %v909 = vand.u32 %v908, 3
        %vm910 = vcmp.lt.s32.totalorder %v909, 2
        %vm911 = vcmp.eq.s32.totalorder %v909, 0
        %v912 = vxor.u32 %v906, 2147483648
        %v913 = vsel %vm911, %v898, %v912
        %vm914 = vcmp.eq.s32.totalorder %v909, 2
        %v915 = vxor.u32 %v898, 2147483648
        %v916 = vsel %vm914, %v915, %v906
        %v917 = vsel %vm910, %v913, %v916
        %v918 = vsel %vm907, nan, %v917
        %v919 = vand.u32 2147483647, %v449
        %vm920 = vcmp.le.f32.partialorder %v919, 0.7853982
        %vm921 = vcmp.lt.s32.totalorder %v449, 0
        %v922 = vand.u32 %v449, 2139095040
        %v923 = vshrl.u32 %v922, 23
        %v924 = vsub.s32 %v923, 127
        %v925 = vand.u32 2147483647, %v449
        %v926 = vand.u32 %v925, 8388607
        %v927 = vor.u32 %v926, 8388608
        %v928 = vsub.s32 0, %v927
        %v929 = vadd.s32 %v924, 1
        %vm930 = vcmp.gt.s32.totalorder %v929, 0
        %v931 = vsel %vm930, %v929, 0
        %v932 = vshrl.u32 %v931, 5
        %v933 = vand.u32 %v931, 31
        %v934 = vsub.s32 32, %v933
        %v935 = vshrl.u32 683565275, %v934
        %v936 = vshll.u32 683565275, %v933
        %v937 = vshrl.u32 2475754826, %v934
        %v938 = vor.u32 %v936, %v937
        %v939 = vshll.u32 2475754826, %v933
        %v940 = vshrl.u32 2131351028, %v934
        %v941 = vor.u32 %v939, %v940
        %v942 = vshll.u32 2131351028, %v933
        %v943 = vshrl.u32 2102212464, %v934
        %v944 = vor.u32 %v942, %v943
        %v945 = vshll.u32 2102212464, %v933
        %v946 = vshrl.u32 920167782, %v934
        %v947 = vor.u32 %v945, %v946
        %v948 = vshll.u32 920167782, %v933
        %v949 = vshrl.u32 1326507024, %v934
        %v950 = vor.u32 %v948, %v949
        %vm951 = vcmp.lt.s32.totalorder %v932, 1
        %vm952 = vcmp.lt.s32.totalorder %v932, 2
        %vm953 = vcmp.lt.s32.totalorder %v932, 3
        %vm954 = vcmp.lt.s32.totalorder %v932, 4
        %v955 = vsel %vm951, %v935, %v938
        %v956 = vsel %vm954, %v944, 2102212464
        %v957 = vsel %vm953, %v941, %v956
        %v958 = vsel %vm952, %v955, %v957
        %v959 = vsel %vm951, %v938, %v941
        %v960 = vsel %vm954, %v947, 920167782
        %v961 = vsel %vm953, %v944, %v960
        %v962 = vsel %vm952, %v959, %v961
        %v963 = vsel %vm951, %v941, %v944
        %v964 = vsel %vm954, %v950, 1326507024
        %v965 = vsel %vm953, %v947, %v964
        %v966 = vsel %vm952, %v963, %v965
        %v967 = vshll.u32 %v927, 8
        %v968 = vand.u32 %v967, 65535
        %v969 = vshrl.u32 %v967, 16
        %v970 = vand.u32 %v966, 65535
        %v971 = vshrl.u32 %v966, 16
        %v972 = vmul.u32 %v968, %v970
        %v973 = vmul.u32 %v968, %v971
        %v974 = vmul.u32 %v969, %v970
        %v975 = vmul.u32 %v969, %v971
        %v976 = vshll.u32 %v973, 16
        %v977 = vshrl.u32 %v973, 16
        %v978 = vshll.u32 %v974, 16
        %v979 = vshrl.u32 %v974, 16
        %vm980 = vc.u32 %v972, %v976
        %v981 = vsel %vm980, 1, 0
        %v982 = vadd.s32 %v972, %v976
        %v983 = vadd.s32 %v975, %v981
        %vm984 = vc.u32 %v982, %v978
        %v985 = vsel %vm984, 1, 0
        %v986 = vadd.s32 %v982, %v978
        %v987 = vadd.s32 %v983, %v985
        %v988 = vadd.s32 %v987, %v977
        %v989 = vadd.s32 %v988, %v979
        %v990 = vand.u32 %v967, 65535
        %v991 = vshrl.u32 %v967, 16
        %v992 = vand.u32 %v962, 65535
        %v993 = vshrl.u32 %v962, 16
        %v994 = vmul.u32 %v990, %v992
        %v995 = vmul.u32 %v990, %v993
        %v996 = vmul.u32 %v991, %v992
        %v997 = vmul.u32 %v991, %v993
        %v998 = vshll.u32 %v995, 16
        %v999 = vshrl.u32 %v995, 16
        %v1000 = vshll.u32 %v996, 16
        %v1001 = vshrl.u32 %v996, 16
        %vm1002 = vc.u32 %v994, %v998
        %v1003 = vsel %vm1002, 1, 0
        %v1004 = vadd.s32 %v994, %v998
        %v1005 = vadd.s32 %v997, %v1003
        %vm1006 = vc.u32 %v1004, %v1000
        %v1007 = vsel %vm1006, 1, 0
        %v1008 = vadd.s32 %v1004, %v1000
        %v1009 = vadd.s32 %v1005, %v1007
        %v1010 = vadd.s32 %v1009, %v999
        %v1011 = vadd.s32 %v1010, %v1001
        %v1012 = vmul.u32 %v967, %v958
        %v1013 = vadd.s32 %v989, %v1008
        %vm1014 = vc.u32 %v989, %v1008
        %v1015 = vadd.s32 %v1011, 1
        %v1016 = vsel %vm1014, %v1015, %v1011
        %v1017 = vadd.s32 %v1012, %v1016
        %v1018 = vadd.s32 %v1017, 536870912
        %v1019 = vshrl.u32 %v1018, 30
        %v1020 = vshll.u32 %v1019, 30
        %v1021 = vsub.s32 %v1017, %v1020
        %vm1022 = vcmp.lt.s32.totalorder %v1021, 0
        %v1023 = vsub.s32 0, %v1021
        %v1024 = vsel %vm1022, %v1023, %v1021
        %v1025 = vclz %v1024
        %v1026 = vsub.s32 %v1025, 2
        %vm1027 = vcmp.gt.s32.totalorder 0, %v1026
        %v1028 = vsel %vm1027, 0, %v1026
        %v1029 = vsub.s32 32, %v1028
        %v1030 = vshll.u32 %v1021, %v1028
        %v1031 = vshrl.u32 %v1013, %v1029
        %v1032 = vor.u32 %v1030, %v1031
        %v1033 = vsub.s32 4294967266, %v1028
        %v1034 = vadd.s32 %v1033, 127
        %v1035 = vshll.u32 %v1034, 23
        %v1036 = vor.u32 4788187, %v1035
        %v1037 = vand.u32 2147483647, %v1036
        %v1039 = vcvt.s32.f32 %v1032
        %v1040 = vmul.f32 %v1039, %v1037
        %v1041 = vxor.u32 %v1040, 2147483648
        %v1042 = vsel %vm921, %v1041, %v1040
        %v1043 = vsub.s32 4, %v1019
        %v1044 = vsel %vm921, %v1043, %v1019
        %v1045 = vsel %vm920, %v449, %v1042
        %v1046 = vsel %vm920, 0, %v1044
        %v1047 = vmul.f32 %v1045, %v1045
        %v1048 = vmul.f32 %v1047, -0.001358992
        %v1049 = vadd.f32 %v1048, 0.041655596
        %v1050 = vmul.f32 %v1047, %v1049
        %v1051 = vadd.f32 %v1050, -0.4999988
        %v1052 = vmul.f32 %v1047, %v1051
        %v1053 = vadd.f32 1.0, %v1052
        %v1054 = vmul.f32 %v1045, %v1045
        %v1055 = vmul.f32 %v1054, -0.00019511016
        %v1056 = vadd.f32 %v1055, 0.008332121
        %v1057 = vmul.f32 %v1054, %v1056
        %v1058 = vadd.f32 %v1057, -0.16666654
        %v1059 = vmul.f32 %v1054, %v1058
        %v1060 = vadd.f32 %v1059, 1.0
        %v1061 = vmul.f32 %v1060, %v1045
        %vm1062 = vweird.f32 %v449
        %v1063 = vadd.s32 %v1046, 3
        %v1064 = vand.u32 %v1063, 3
        %vm1065 = vcmp.lt.s32.totalorder %v1064, 2
        %vm1066 = vcmp.eq.s32.totalorder %v1064, 0
        %v1067 = vxor.u32 %v1061, 2147483648
        %v1068 = vsel %vm1066, %v1053, %v1067
        %vm1069 = vcmp.eq.s32.totalorder %v1064, 2
        %v1070 = vxor.u32 %v1053, 2147483648
        %v1071 = vsel %vm1069, %v1070, %v1061
        %v1072 = vsel %vm1065, %v1068, %v1071
        %v1073 = vsel %vm1062, nan, %v1072
        %v1074 = vand.u32 2147483647, %v450
        %vm1075 = vcmp.le.f32.partialorder %v1074, 0.7853982
        %vm1076 = vcmp.lt.s32.totalorder %v450, 0
        %v1077 = vand.u32 %v450, 2139095040
        %v1078 = vshrl.u32 %v1077, 23
        %v1079 = vsub.s32 %v1078, 127
        %v1080 = vand.u32 2147483647, %v450
        %v1081 = vand.u32 %v1080, 8388607
        %v1082 = vor.u32 %v1081, 8388608
        %v1083 = vsub.s32 0, %v1082
        %v1084 = vadd.s32 %v1079, 1
        %vm1085 = vcmp.gt.s32.totalorder %v1084, 0
        %v1086 = vsel %vm1085, %v1084, 0
        %v1087 = vshrl.u32 %v1086, 5
        %v1088 = vand.u32 %v1086, 31
        %v1089 = vsub.s32 32, %v1088
        %v1090 = vshrl.u32 683565275, %v1089
        %v1091 = vshll.u32 683565275, %v1088
        %v1092 = vshrl.u32 2475754826, %v1089
        %v1093 = vor.u32 %v1091, %v1092
        %v1094 = vshll.u32 2475754826, %v1088
        %v1095 = vshrl.u32 2131351028, %v1089
        %v1096 = vor.u32 %v1094, %v1095
        %v1097 = vshll.u32 2131351028, %v1088
        %v1098 = vshrl.u32 2102212464, %v1089
        %v1099 = vor.u32 %v1097, %v1098
        %v1100 = vshll.u32 2102212464, %v1088
        %v1101 = vshrl.u32 920167782, %v1089
        %v1102 = vor.u32 %v1100, %v1101
        %v1103 = vshll.u32 920167782, %v1088
        %v1104 = vshrl.u32 1326507024, %v1089
        %v1105 = vor.u32 %v1103, %v1104
        %vm1106 = vcmp.lt.s32.totalorder %v1087, 1
        %vm1107 = vcmp.lt.s32.totalorder %v1087, 2
        %vm1108 = vcmp.lt.s32.totalorder %v1087, 3
        %vm1109 = vcmp.lt.s32.totalorder %v1087, 4
        %v1110 = vsel %vm1106, %v1090, %v1093
        %v1111 = vsel %vm1109, %v1099, 2102212464
        %v1112 = vsel %vm1108, %v1096, %v1111
        %v1113 = vsel %vm1107, %v1110, %v1112
        %v1114 = vsel %vm1106, %v1093, %v1096
        %v1115 = vsel %vm1109, %v1102, 920167782
        %v1116 = vsel %vm1108, %v1099, %v1115
        %v1117 = vsel %vm1107, %v1114, %v1116
        %v1118 = vsel %vm1106, %v1096, %v1099
        %v1119 = vsel %vm1109, %v1105, 1326507024
        %v1120 = vsel %vm1108, %v1102, %v1119
        %v1121 = vsel %vm1107, %v1118, %v1120
        %v1122 = vshll.u32 %v1082, 8
        %v1123 = vand.u32 %v1122, 65535
        %v1124 = vshrl.u32 %v1122, 16
        %v1125 = vand.u32 %v1121, 65535
        %v1126 = vshrl.u32 %v1121, 16
        %v1127 = vmul.u32 %v1123, %v1125
        %v1128 = vmul.u32 %v1123, %v1126
        %v1129 = vmul.u32 %v1124, %v1125
        %v1130 = vmul.u32 %v1124, %v1126
        %v1131 = vshll.u32 %v1128, 16
        %v1132 = vshrl.u32 %v1128, 16
        %v1133 = vshll.u32 %v1129, 16
        %v1134 = vshrl.u32 %v1129, 16
        %vm1135 = vc.u32 %v1127, %v1131
        %v1136 = vsel %vm1135, 1, 0
        %v1137 = vadd.s32 %v1127, %v1131
        %v1138 = vadd.s32 %v1130, %v1136
        %vm1139 = vc.u32 %v1137, %v1133
        %v1140 = vsel %vm1139, 1, 0
        %v1141 = vadd.s32 %v1137, %v1133
        %v1142 = vadd.s32 %v1138, %v1140
        %v1143 = vadd.s32 %v1142, %v1132
        %v1144 = vadd.s32 %v1143, %v1134
        %v1145 = vand.u32 %v1122, 65535
        %v1146 = vshrl.u32 %v1122, 16
        %v1147 = vand.u32 %v1117, 65535
        %v1148 = vshrl.u32 %v1117, 16
        %v1149 = vmul.u32 %v1145, %v1147
        %v1150 = vmul.u32 %v1145, %v1148
        %v1151 = vmul.u32 %v1146, %v1147
        %v1152 = vmul.u32 %v1146, %v1148
        %v1153 = vshll.u32 %v1150, 16
        %v1154 = vshrl.u32 %v1150, 16
        %v1155 = vshll.u32 %v1151, 16
        %v1156 = vshrl.u32 %v1151, 16
        %vm1157 = vc.u32 %v1149, %v1153
        %v1158 = vsel %vm1157, 1, 0
        %v1159 = vadd.s32 %v1149, %v1153
        %v1160 = vadd.s32 %v1152, %v1158
        %vm1161 = vc.u32 %v1159, %v1155
        %v1162 = vsel %vm1161, 1, 0
        %v1163 = vadd.s32 %v1159, %v1155
        %v1164 = vadd.s32 %v1160, %v1162
        %v1165 = vadd.s32 %v1164, %v1154
        %v1166 = vadd.s32 %v1165, %v1156
        %v1167 = vmul.u32 %v1122, %v1113
        %v1168 = vadd.s32 %v1144, %v1163
        %vm1169 = vc.u32 %v1144, %v1163
        %v1170 = vadd.s32 %v1166, 1
        %v1171 = vsel %vm1169, %v1170, %v1166
        %v1172 = vadd.s32 %v1167, %v1171
        %v1173 = vadd.s32 %v1172, 536870912
        %v1174 = vshrl.u32 %v1173, 30
        %v1175 = vshll.u32 %v1174, 30
        %v1176 = vsub.s32 %v1172, %v1175
        %vm1177 = vcmp.lt.s32.totalorder %v1176, 0
        %v1178 = vsub.s32 0, %v1176
        %v1179 = vsel %vm1177, %v1178, %v1176
        %v1180 = vclz %v1179
        %v1181 = vsub.s32 %v1180, 2
        %vm1182 = vcmp.gt.s32.totalorder 0, %v1181
        %v1183 = vsel %vm1182, 0, %v1181
        %v1184 = vsub.s32 32, %v1183
        %v1185 = vshll.u32 %v1176, %v1183
        %v1186 = vshrl.u32 %v1168, %v1184
        %v1187 = vor.u32 %v1185, %v1186
        %v1188 = vsub.s32 4294967266, %v1183
        %v1189 = vadd.s32 %v1188, 127
        %v1190 = vshll.u32 %v1189, 23
        %v1191 = vor.u32 4788187, %v1190
        %v1192 = vand.u32 2147483647, %v1191
        %v1194 = vcvt.s32.f32 %v1187
        %v1195 = vmul.f32 %v1194, %v1192
        %v1196 = vxor.u32 %v1195, 2147483648
        %v1197 = vsel %vm1076, %v1196, %v1195
        %v1198 = vsub.s32 4, %v1174
        %v1199 = vsel %vm1076, %v1198, %v1174
        %v1200 = vsel %vm1075, %v450, %v1197
        %v1201 = vsel %vm1075, 0, %v1199
        %v1202 = vmul.f32 %v1200, %v1200
        %v1203 = vmul.f32 %v1202, -0.001358992
        %v1204 = vadd.f32 %v1203, 0.041655596
        %v1205 = vmul.f32 %v1202, %v1204
        %v1206 = vadd.f32 %v1205, -0.4999988
        %v1207 = vmul.f32 %v1202, %v1206
        %v1208 = vadd.f32 1.0, %v1207
        %v1209 = vmul.f32 %v1200, %v1200
        %v1210 = vmul.f32 %v1209, -0.00019511016
        %v1211 = vadd.f32 %v1210, 0.008332121
        %v1212 = vmul.f32 %v1209, %v1211
        %v1213 = vadd.f32 %v1212, -0.16666654
        %v1214 = vmul.f32 %v1209, %v1213
        %v1215 = vadd.f32 %v1214, 1.0
        %v1216 = vmul.f32 %v1215, %v1200
        %vm1217 = vweird.f32 %v450
        %v1218 = vadd.s32 %v1201, 3
        %v1219 = vand.u32 %v1218, 3
        %vm1220 = vcmp.lt.s32.totalorder %v1219, 2
        %vm1221 = vcmp.eq.s32.totalorder %v1219, 0
        %v1222 = vxor.u32 %v1216, 2147483648
        %v1223 = vsel %vm1221, %v1208, %v1222
        %vm1224 = vcmp.eq.s32.totalorder %v1219, 2
        %v1225 = vxor.u32 %v1208, 2147483648
        %v1226 = vsel %vm1224, %v1225, %v1216
        %v1227 = vsel %vm1220, %v1223, %v1226
        %v1228 = vsel %vm1217, nan, %v1227
        %v1229 = vand.u32 2147483647, %v451
        %vm1230 = vcmp.le.f32.partialorder %v1229, 0.7853982
        %vm1231 = vcmp.lt.s32.totalorder %v451, 0
        %v1232 = vand.u32 %v451, 2139095040
        %v1233 = vshrl.u32 %v1232, 23
        %v1234 = vsub.s32 %v1233, 127
        %v1235 = vand.u32 2147483647, %v451
        %v1236 = vand.u32 %v1235, 8388607
        %v1237 = vor.u32 %v1236, 8388608
        %v1238 = vsub.s32 0, %v1237
        %v1239 = vadd.s32 %v1234, 1
        %vm1240 = vcmp.gt.s32.totalorder %v1239, 0
        %v1241 = vsel %vm1240, %v1239, 0
        %v1242 = vshrl.u32 %v1241, 5
        %v1243 = vand.u32 %v1241, 31
        %v1244 = vsub.s32 32, %v1243
        %v1245 = vshrl.u32 683565275, %v1244
        %v1246 = vshll.u32 683565275, %v1243
        %v1247 = vshrl.u32 2475754826, %v1244
        %v1248 = vor.u32 %v1246, %v1247
        %v1249 = vshll.u32 2475754826, %v1243
        %v1250 = vshrl.u32 2131351028, %v1244
        %v1251 = vor.u32 %v1249, %v1250
        %v1252 = vshll.u32 2131351028, %v1243
        %v1253 = vshrl.u32 2102212464, %v1244
        %v1254 = vor.u32 %v1252, %v1253
        %v1255 = vshll.u32 2102212464, %v1243
        %v1256 = vshrl.u32 920167782, %v1244
        %v1257 = vor.u32 %v1255, %v1256
        %v1258 = vshll.u32 920167782, %v1243
        %v1259 = vshrl.u32 1326507024, %v1244
        %v1260 = vor.u32 %v1258, %v1259
        %vm1261 = vcmp.lt.s32.totalorder %v1242, 1
        %vm1262 = vcmp.lt.s32.totalorder %v1242, 2
        %vm1263 = vcmp.lt.s32.totalorder %v1242, 3
        %vm1264 = vcmp.lt.s32.totalorder %v1242, 4
        %v1265 = vsel %vm1261, %v1245, %v1248
        %v1266 = vsel %vm1264, %v1254, 2102212464
        %v1267 = vsel %vm1263, %v1251, %v1266
        %v1268 = vsel %vm1262, %v1265, %v1267
        %v1269 = vsel %vm1261, %v1248, %v1251
        %v1270 = vsel %vm1264, %v1257, 920167782
        %v1271 = vsel %vm1263, %v1254, %v1270
        %v1272 = vsel %vm1262, %v1269, %v1271
        %v1273 = vsel %vm1261, %v1251, %v1254
        %v1274 = vsel %vm1264, %v1260, 1326507024
        %v1275 = vsel %vm1263, %v1257, %v1274
        %v1276 = vsel %vm1262, %v1273, %v1275
        %v1277 = vshll.u32 %v1237, 8
        %v1278 = vand.u32 %v1277, 65535
        %v1279 = vshrl.u32 %v1277, 16
        %v1280 = vand.u32 %v1276, 65535
        %v1281 = vshrl.u32 %v1276, 16
        %v1282 = vmul.u32 %v1278, %v1280
        %v1283 = vmul.u32 %v1278, %v1281
        %v1284 = vmul.u32 %v1279, %v1280
        %v1285 = vmul.u32 %v1279, %v1281
        %v1286 = vshll.u32 %v1283, 16
        %v1287 = vshrl.u32 %v1283, 16
        %v1288 = vshll.u32 %v1284, 16
        %v1289 = vshrl.u32 %v1284, 16
        %vm1290 = vc.u32 %v1282, %v1286
        %v1291 = vsel %vm1290, 1, 0
        %v1292 = vadd.s32 %v1282, %v1286
        %v1293 = vadd.s32 %v1285, %v1291
        %vm1294 = vc.u32 %v1292, %v1288
        %v1295 = vsel %vm1294, 1, 0
        %v1296 = vadd.s32 %v1292, %v1288
        %v1297 = vadd.s32 %v1293, %v1295
        %v1298 = vadd.s32 %v1297, %v1287
        %v1299 = vadd.s32 %v1298, %v1289
        %v1300 = vand.u32 %v1277, 65535
        %v1301 = vshrl.u32 %v1277, 16
        %v1302 = vand.u32 %v1272, 65535
        %v1303 = vshrl.u32 %v1272, 16
        %v1304 = vmul.u32 %v1300, %v1302
        %v1305 = vmul.u32 %v1300, %v1303
        %v1306 = vmul.u32 %v1301, %v1302
        %v1307 = vmul.u32 %v1301, %v1303
        %v1308 = vshll.u32 %v1305, 16
        %v1309 = vshrl.u32 %v1305, 16
        %v1310 = vshll.u32 %v1306, 16
        %v1311 = vshrl.u32 %v1306, 16
        %vm1312 = vc.u32 %v1304, %v1308
        %v1313 = vsel %vm1312, 1, 0
        %v1314 = vadd.s32 %v1304, %v1308
        %v1315 = vadd.s32 %v1307, %v1313
        %vm1316 = vc.u32 %v1314, %v1310
        %v1317 = vsel %vm1316, 1, 0
        %v1318 = vadd.s32 %v1314, %v1310
        %v1319 = vadd.s32 %v1315, %v1317
        %v1320 = vadd.s32 %v1319, %v1309
        %v1321 = vadd.s32 %v1320, %v1311
        %v1322 = vmul.u32 %v1277, %v1268
        %v1323 = vadd.s32 %v1299, %v1318
        %vm1324 = vc.u32 %v1299, %v1318
        %v1325 = vadd.s32 %v1321, 1
        %v1326 = vsel %vm1324, %v1325, %v1321
        %v1327 = vadd.s32 %v1322, %v1326
        %v1328 = vadd.s32 %v1327, 536870912
        %v1329 = vshrl.u32 %v1328, 30
        %v1330 = vshll.u32 %v1329, 30
        %v1331 = vsub.s32 %v1327, %v1330
        %vm1332 = vcmp.lt.s32.totalorder %v1331, 0
        %v1333 = vsub.s32 0, %v1331
        %v1334 = vsel %vm1332, %v1333, %v1331
        %v1335 = vclz %v1334
        %v1336 = vsub.s32 %v1335, 2
        %vm1337 = vcmp.gt.s32.totalorder 0, %v1336
        %v1338 = vsel %vm1337, 0, %v1336
        %v1339 = vsub.s32 32, %v1338
        %v1340 = vshll.u32 %v1331, %v1338
        %v1341 = vshrl.u32 %v1323, %v1339
        %v1342 = vor.u32 %v1340, %v1341
        %v1343 = vsub.s32 4294967266, %v1338
        %v1344 = vadd.s32 %v1343, 127
        %v1345 = vshll.u32 %v1344, 23
        %v1346 = vor.u32 4788187, %v1345
        %v1347 = vand.u32 2147483647, %v1346
        %v1349 = vcvt.s32.f32 %v1342
        %v1350 = vmul.f32 %v1349, %v1347
        %v1351 = vxor.u32 %v1350, 2147483648
        %v1352 = vsel %vm1231, %v1351, %v1350
        %v1353 = vsub.s32 4, %v1329
        %v1354 = vsel %vm1231, %v1353, %v1329
        %v1355 = vsel %vm1230, %v451, %v1352
        %v1356 = vsel %vm1230, 0, %v1354
        %v1357 = vmul.f32 %v1355, %v1355
        %v1358 = vmul.f32 %v1357, -0.001358992
        %v1359 = vadd.f32 %v1358, 0.041655596
        %v1360 = vmul.f32 %v1357, %v1359
        %v1361 = vadd.f32 %v1360, -0.4999988
        %v1362 = vmul.f32 %v1357, %v1361
        %v1363 = vadd.f32 1.0, %v1362
        %v1364 = vmul.f32 %v1355, %v1355
        %v1365 = vmul.f32 %v1364, -0.00019511016
        %v1366 = vadd.f32 %v1365, 0.008332121
        %v1367 = vmul.f32 %v1364, %v1366
        %v1368 = vadd.f32 %v1367, -0.16666654
        %v1369 = vmul.f32 %v1364, %v1368
        %v1370 = vadd.f32 %v1369, 1.0
        %v1371 = vmul.f32 %v1370, %v1355
        %vm1372 = vweird.f32 %v451
        %v1373 = vadd.s32 %v1356, 3
        %v1374 = vand.u32 %v1373, 3
        %vm1375 = vcmp.lt.s32.totalorder %v1374, 2
        %vm1376 = vcmp.eq.s32.totalorder %v1374, 0
        %v1377 = vxor.u32 %v1371, 2147483648
        %v1378 = vsel %vm1376, %v1363, %v1377
        %vm1379 = vcmp.eq.s32.totalorder %v1374, 2
        %v1380 = vxor.u32 %v1363, 2147483648
        %v1381 = vsel %vm1379, %v1380, %v1371
        %v1382 = vsel %vm1375, %v1378, %v1381
        %v1383 = vsel %vm1372, nan, %v1382
        %v1384 = vand.u32 2147483647, %v452
        %vm1385 = vcmp.le.f32.partialorder %v1384, 0.7853982
        %vm1386 = vcmp.lt.s32.totalorder %v452, 0
        %v1387 = vand.u32 %v452, 2139095040
        %v1388 = vshrl.u32 %v1387, 23
        %v1389 = vsub.s32 %v1388, 127
        %v1390 = vand.u32 2147483647, %v452
        %v1391 = vand.u32 %v1390, 8388607
        %v1392 = vor.u32 %v1391, 8388608
        %v1393 = vsub.s32 0, %v1392
        %v1394 = vadd.s32 %v1389, 1
        %vm1395 = vcmp.gt.s32.totalorder %v1394, 0
        %v1396 = vsel %vm1395, %v1394, 0
        %v1397 = vshrl.u32 %v1396, 5
        %v1398 = vand.u32 %v1396, 31
        %v1399 = vsub.s32 32, %v1398
        %v1400 = vshrl.u32 683565275, %v1399
        %v1401 = vshll.u32 683565275, %v1398
        %v1402 = vshrl.u32 2475754826, %v1399
        %v1403 = vor.u32 %v1401, %v1402
        %v1404 = vshll.u32 2475754826, %v1398
        %v1405 = vshrl.u32 2131351028, %v1399
        %v1406 = vor.u32 %v1404, %v1405
        %v1407 = vshll.u32 2131351028, %v1398
        %v1408 = vshrl.u32 2102212464, %v1399
        %v1409 = vor.u32 %v1407, %v1408
        %v1410 = vshll.u32 2102212464, %v1398
        %v1411 = vshrl.u32 920167782, %v1399
        %v1412 = vor.u32 %v1410, %v1411
        %v1413 = vshll.u32 920167782, %v1398
        %v1414 = vshrl.u32 1326507024, %v1399
        %v1415 = vor.u32 %v1413, %v1414
        %vm1416 = vcmp.lt.s32.totalorder %v1397, 1
        %vm1417 = vcmp.lt.s32.totalorder %v1397, 2
        %vm1418 = vcmp.lt.s32.totalorder %v1397, 3
        %vm1419 = vcmp.lt.s32.totalorder %v1397, 4
        %v1420 = vsel %vm1416, %v1400, %v1403
        %v1421 = vsel %vm1419, %v1409, 2102212464
        %v1422 = vsel %vm1418, %v1406, %v1421
        %v1423 = vsel %vm1417, %v1420, %v1422
        %v1424 = vsel %vm1416, %v1403, %v1406
        %v1425 = vsel %vm1419, %v1412, 920167782
        %v1426 = vsel %vm1418, %v1409, %v1425
        %v1427 = vsel %vm1417, %v1424, %v1426
        %v1428 = vsel %vm1416, %v1406, %v1409
        %v1429 = vsel %vm1419, %v1415, 1326507024
        %v1430 = vsel %vm1418, %v1412, %v1429
        %v1431 = vsel %vm1417, %v1428, %v1430
        %v1432 = vshll.u32 %v1392, 8
        %v1433 = vand.u32 %v1432, 65535
        %v1434 = vshrl.u32 %v1432, 16
        %v1435 = vand.u32 %v1431, 65535
        %v1436 = vshrl.u32 %v1431, 16
        %v1437 = vmul.u32 %v1433, %v1435
        %v1438 = vmul.u32 %v1433, %v1436
        %v1439 = vmul.u32 %v1434, %v1435
        %v1440 = vmul.u32 %v1434, %v1436
        %v1441 = vshll.u32 %v1438, 16
        %v1442 = vshrl.u32 %v1438, 16
        %v1443 = vshll.u32 %v1439, 16
        %v1444 = vshrl.u32 %v1439, 16
        %vm1445 = vc.u32 %v1437, %v1441
        %v1446 = vsel %vm1445, 1, 0
        %v1447 = vadd.s32 %v1437, %v1441
        %v1448 = vadd.s32 %v1440, %v1446
        %vm1449 = vc.u32 %v1447, %v1443
        %v1450 = vsel %vm1449, 1, 0
        %v1451 = vadd.s32 %v1447, %v1443
        %v1452 = vadd.s32 %v1448, %v1450
        %v1453 = vadd.s32 %v1452, %v1442
        %v1454 = vadd.s32 %v1453, %v1444
        %v1455 = vand.u32 %v1432, 65535
        %v1456 = vshrl.u32 %v1432, 16
        %v1457 = vand.u32 %v1427, 65535
        %v1458 = vshrl.u32 %v1427, 16
        %v1459 = vmul.u32 %v1455, %v1457
        %v1460 = vmul.u32 %v1455, %v1458
        %v1461 = vmul.u32 %v1456, %v1457
        %v1462 = vmul.u32 %v1456, %v1458
        %v1463 = vshll.u32 %v1460, 16
        %v1464 = vshrl.u32 %v1460, 16
        %v1465 = vshll.u32 %v1461, 16
        %v1466 = vshrl.u32 %v1461, 16
        %vm1467 = vc.u32 %v1459, %v1463
        %v1468 = vsel %vm1467, 1, 0
        %v1469 = vadd.s32 %v1459, %v1463
        %v1470 = vadd.s32 %v1462, %v1468
        %vm1471 = vc.u32 %v1469, %v1465
        %v1472 = vsel %vm1471, 1, 0
        %v1473 = vadd.s32 %v1469, %v1465
        %v1474 = vadd.s32 %v1470, %v1472
        %v1475 = vadd.s32 %v1474, %v1464
        %v1476 = vadd.s32 %v1475, %v1466
        %v1477 = vmul.u32 %v1432, %v1423
        %v1478 = vadd.s32 %v1454, %v1473
        %vm1479 = vc.u32 %v1454, %v1473
        %v1480 = vadd.s32 %v1476, 1
        %v1481 = vsel %vm1479, %v1480, %v1476
        %v1482 = vadd.s32 %v1477, %v1481
        %v1483 = vadd.s32 %v1482, 536870912
        %v1484 = vshrl.u32 %v1483, 30
        %v1485 = vshll.u32 %v1484, 30
        %v1486 = vsub.s32 %v1482, %v1485
        %vm1487 = vcmp.lt.s32.totalorder %v1486, 0
        %v1488 = vsub.s32 0, %v1486
        %v1489 = vsel %vm1487, %v1488, %v1486
        %v1490 = vclz %v1489
        %v1491 = vsub.s32 %v1490, 2
        %vm1492 = vcmp.gt.s32.totalorder 0, %v1491
        %v1493 = vsel %vm1492, 0, %v1491
        %v1494 = vsub.s32 32, %v1493
        %v1495 = vshll.u32 %v1486, %v1493
        %v1496 = vshrl.u32 %v1478, %v1494
        %v1497 = vor.u32 %v1495, %v1496
        %v1498 = vsub.s32 4294967266, %v1493
        %v1499 = vadd.s32 %v1498, 127
        %v1500 = vshll.u32 %v1499, 23
        %v1501 = vor.u32 4788187, %v1500
        %v1502 = vand.u32 2147483647, %v1501
        %v1504 = vcvt.s32.f32 %v1497
        %v1505 = vmul.f32 %v1504, %v1502
        %v1506 = vxor.u32 %v1505, 2147483648
        %v1507 = vsel %vm1386, %v1506, %v1505
        %v1508 = vsub.s32 4, %v1484
        %v1509 = vsel %vm1386, %v1508, %v1484
        %v1510 = vsel %vm1385, %v452, %v1507
        %v1511 = vsel %vm1385, 0, %v1509
        %v1512 = vmul.f32 %v1510, %v1510
        %v1513 = vmul.f32 %v1512, -0.001358992
        %v1514 = vadd.f32 %v1513, 0.041655596
        %v1515 = vmul.f32 %v1512, %v1514
        %v1516 = vadd.f32 %v1515, -0.4999988
        %v1517 = vmul.f32 %v1512, %v1516
        %v1518 = vadd.f32 1.0, %v1517
        %v1519 = vmul.f32 %v1510, %v1510
        %v1520 = vmul.f32 %v1519, -0.00019511016
        %v1521 = vadd.f32 %v1520, 0.008332121
        %v1522 = vmul.f32 %v1519, %v1521
        %v1523 = vadd.f32 %v1522, -0.16666654
        %v1524 = vmul.f32 %v1519, %v1523
        %v1525 = vadd.f32 %v1524, 1.0
        %v1526 = vmul.f32 %v1525, %v1510
        %vm1527 = vweird.f32 %v452
        %v1528 = vadd.s32 %v1511, 3
        %v1529 = vand.u32 %v1528, 3
        %vm1530 = vcmp.lt.s32.totalorder %v1529, 2
        %vm1531 = vcmp.eq.s32.totalorder %v1529, 0
        %v1532 = vxor.u32 %v1526, 2147483648
        %v1533 = vsel %vm1531, %v1518, %v1532
        %vm1534 = vcmp.eq.s32.totalorder %v1529, 2
        %v1535 = vxor.u32 %v1518, 2147483648
        %v1536 = vsel %vm1534, %v1535, %v1526
        %v1537 = vsel %vm1530, %v1533, %v1536
        %v1538 = vsel %vm1527, nan, %v1537
        %v1539 = vand.u32 2147483647, %v453
        %vm1540 = vcmp.le.f32.partialorder %v1539, 0.7853982
        %vm1541 = vcmp.lt.s32.totalorder %v453, 0
        %v1542 = vand.u32 %v453, 2139095040
        %v1543 = vshrl.u32 %v1542, 23
        %v1544 = vsub.s32 %v1543, 127
        %v1545 = vand.u32 2147483647, %v453
        %v1546 = vand.u32 %v1545, 8388607
        %v1547 = vor.u32 %v1546, 8388608
        %v1548 = vsub.s32 0, %v1547
        %v1549 = vadd.s32 %v1544, 1
        %vm1550 = vcmp.gt.s32.totalorder %v1549, 0
        %v1551 = vsel %vm1550, %v1549, 0
        %v1552 = vshrl.u32 %v1551, 5
        %v1553 = vand.u32 %v1551, 31
        %v1554 = vsub.s32 32, %v1553
        %v1555 = vshrl.u32 683565275, %v1554
        %v1556 = vshll.u32 683565275, %v1553
        %v1557 = vshrl.u32 2475754826, %v1554
        %v1558 = vor.u32 %v1556, %v1557
        %v1559 = vshll.u32 2475754826, %v1553
        %v1560 = vshrl.u32 2131351028, %v1554
        %v1561 = vor.u32 %v1559, %v1560
        %v1562 = vshll.u32 2131351028, %v1553
        %v1563 = vshrl.u32 2102212464, %v1554
        %v1564 = vor.u32 %v1562, %v1563
        %v1565 = vshll.u32 2102212464, %v1553
        %v1566 = vshrl.u32 920167782, %v1554
        %v1567 = vor.u32 %v1565, %v1566
        %v1568 = vshll.u32 920167782, %v1553
        %v1569 = vshrl.u32 1326507024, %v1554
        %v1570 = vor.u32 %v1568, %v1569
        %vm1571 = vcmp.lt.s32.totalorder %v1552, 1
        %vm1572 = vcmp.lt.s32.totalorder %v1552, 2
        %vm1573 = vcmp.lt.s32.totalorder %v1552, 3
        %vm1574 = vcmp.lt.s32.totalorder %v1552, 4
        %v1575 = vsel %vm1571, %v1555, %v1558
        %v1576 = vsel %vm1574, %v1564, 2102212464
        %v1577 = vsel %vm1573, %v1561, %v1576
        %v1578 = vsel %vm1572, %v1575, %v1577
        %v1579 = vsel %vm1571, %v1558, %v1561
        %v1580 = vsel %vm1574, %v1567, 920167782
        %v1581 = vsel %vm1573, %v1564, %v1580
        %v1582 = vsel %vm1572, %v1579, %v1581
        %v1583 = vsel %vm1571, %v1561, %v1564
        %v1584 = vsel %vm1574, %v1570, 1326507024
        %v1585 = vsel %vm1573, %v1567, %v1584
        %v1586 = vsel %vm1572, %v1583, %v1585
        %v1587 = vshll.u32 %v1547, 8
        %v1588 = vand.u32 %v1587, 65535
        %v1589 = vshrl.u32 %v1587, 16
        %v1590 = vand.u32 %v1586, 65535
        %v1591 = vshrl.u32 %v1586, 16
        %v1592 = vmul.u32 %v1588, %v1590
        %v1593 = vmul.u32 %v1588, %v1591
        %v1594 = vmul.u32 %v1589, %v1590
        %v1595 = vmul.u32 %v1589, %v1591
        %v1596 = vshll.u32 %v1593, 16
        %v1597 = vshrl.u32 %v1593, 16
        %v1598 = vshll.u32 %v1594, 16
        %v1599 = vshrl.u32 %v1594, 16
        %vm1600 = vc.u32 %v1592, %v1596
        %v1601 = vsel %vm1600, 1, 0
        %v1602 = vadd.s32 %v1592, %v1596
        %v1603 = vadd.s32 %v1595, %v1601
        %vm1604 = vc.u32 %v1602, %v1598
        %v1605 = vsel %vm1604, 1, 0
        %v1606 = vadd.s32 %v1602, %v1598
        %v1607 = vadd.s32 %v1603, %v1605
        %v1608 = vadd.s32 %v1607, %v1597
        %v1609 = vadd.s32 %v1608, %v1599
        %v1610 = vand.u32 %v1587, 65535
        %v1611 = vshrl.u32 %v1587, 16
        %v1612 = vand.u32 %v1582, 65535
        %v1613 = vshrl.u32 %v1582, 16
        %v1614 = vmul.u32 %v1610, %v1612
        %v1615 = vmul.u32 %v1610, %v1613
        %v1616 = vmul.u32 %v1611, %v1612
        %v1617 = vmul.u32 %v1611, %v1613
        %v1618 = vshll.u32 %v1615, 16
        %v1619 = vshrl.u32 %v1615, 16
        %v1620 = vshll.u32 %v1616, 16
        %v1621 = vshrl.u32 %v1616, 16
        %vm1622 = vc.u32 %v1614, %v1618
        %v1623 = vsel %vm1622, 1, 0
        %v1624 = vadd.s32 %v1614, %v1618
        %v1625 = vadd.s32 %v1617, %v1623
        %vm1626 = vc.u32 %v1624, %v1620
        %v1627 = vsel %vm1626, 1, 0
        %v1628 = vadd.s32 %v1624, %v1620
        %v1629 = vadd.s32 %v1625, %v1627
        %v1630 = vadd.s32 %v1629, %v1619
        %v1631 = vadd.s32 %v1630, %v1621
        %v1632 = vmul.u32 %v1587, %v1578
        %v1633 = vadd.s32 %v1609, %v1628
        %vm1634 = vc.u32 %v1609, %v1628
        %v1635 = vadd.s32 %v1631, 1
        %v1636 = vsel %vm1634, %v1635, %v1631
        %v1637 = vadd.s32 %v1632, %v1636
        %v1638 = vadd.s32 %v1637, 536870912
        %v1639 = vshrl.u32 %v1638, 30
        %v1640 = vshll.u32 %v1639, 30
        %v1641 = vsub.s32 %v1637, %v1640
        %vm1642 = vcmp.lt.s32.totalorder %v1641, 0
        %v1643 = vsub.s32 0, %v1641
        %v1644 = vsel %vm1642, %v1643, %v1641
        %v1645 = vclz %v1644
        %v1646 = vsub.s32 %v1645, 2
        %vm1647 = vcmp.gt.s32.totalorder 0, %v1646
        %v1648 = vsel %vm1647, 0, %v1646
        %v1649 = vsub.s32 32, %v1648
        %v1650 = vshll.u32 %v1641, %v1648
        %v1651 = vshrl.u32 %v1633, %v1649
        %v1652 = vor.u32 %v1650, %v1651
        %v1653 = vsub.s32 4294967266, %v1648
        %v1654 = vadd.s32 %v1653, 127
        %v1655 = vshll.u32 %v1654, 23
        %v1656 = vor.u32 4788187, %v1655
        %v1657 = vand.u32 2147483647, %v1656
        %v1659 = vcvt.s32.f32 %v1652
        %v1660 = vmul.f32 %v1659, %v1657
        %v1661 = vxor.u32 %v1660, 2147483648
        %v1662 = vsel %vm1541, %v1661, %v1660
        %v1663 = vsub.s32 4, %v1639
        %v1664 = vsel %vm1541, %v1663, %v1639
        %v1665 = vsel %vm1540, %v453, %v1662
        %v1666 = vsel %vm1540, 0, %v1664
        %v1667 = vmul.f32 %v1665, %v1665
        %v1668 = vmul.f32 %v1667, -0.001358992
        %v1669 = vadd.f32 %v1668, 0.041655596
        %v1670 = vmul.f32 %v1667, %v1669
        %v1671 = vadd.f32 %v1670, -0.4999988
        %v1672 = vmul.f32 %v1667, %v1671
        %v1673 = vadd.f32 1.0, %v1672
        %v1674 = vmul.f32 %v1665, %v1665
        %v1675 = vmul.f32 %v1674, -0.00019511016
        %v1676 = vadd.f32 %v1675, 0.008332121
        %v1677 = vmul.f32 %v1674, %v1676
        %v1678 = vadd.f32 %v1677, -0.16666654
        %v1679 = vmul.f32 %v1674, %v1678
        %v1680 = vadd.f32 %v1679, 1.0
        %v1681 = vmul.f32 %v1680, %v1665
        %vm1682 = vweird.f32 %v453
        %v1683 = vadd.s32 %v1666, 3
        %v1684 = vand.u32 %v1683, 3
        %vm1685 = vcmp.lt.s32.totalorder %v1684, 2
        %vm1686 = vcmp.eq.s32.totalorder %v1684, 0
        %v1687 = vxor.u32 %v1681, 2147483648
        %v1688 = vsel %vm1686, %v1673, %v1687
        %vm1689 = vcmp.eq.s32.totalorder %v1684, 2
        %v1690 = vxor.u32 %v1673, 2147483648
        %v1691 = vsel %vm1689, %v1690, %v1681
        %v1692 = vsel %vm1685, %v1688, %v1691
        %v1693 = vsel %vm1682, nan, %v1692
        %v1694 = vld [vmem:[%s3] sm:$0xff]
        %v1695 = vld [vmem:[%s3 + $0x8] sm:$0xff]
        %v1696 = vld [vmem:[%s3 + $0x10] sm:$0xff]
        %v1697 = vld [vmem:[%s3 + $0x18] sm:$0xff]
        %v1698 = vld [vmem:[%s4] sm:$0xff]
        %v1699 = vld [vmem:[%s4 + $0x8] sm:$0xff]
        %v1700 = vld [vmem:[%s4 + $0x10] sm:$0xff]
        %v1701 = vld [vmem:[%s4 + $0x18] sm:$0xff]
        %1703 = vset.pattern.permute.xlu0 0
        %1704 = vperm.xlu0 %1703, %v1698
        %v1705 = vpop.permute.xlu0 %1704
        %1708 = vset.pattern.permute.xlu0 0
        %1709 = vperm.xlu0 %1708, %v1699
        %v1710 = vpop.permute.xlu0 %1709
        %1713 = vset.pattern.permute.xlu0 0
        %1714 = vperm.xlu0 %1713, %v1700
        %v1715 = vpop.permute.xlu0 %1714
        %1718 = vset.pattern.permute.xlu0 0
        %1719 = vperm.xlu0 %1718, %v1701
        %v1720 = vpop.permute.xlu0 %1719
        %vm1722 = vcmask 261120
        %v1724 = vsel %vm1722, %v1694, 0
        %v1727 = vsel %vm1722, %v1695, 0
        %v1730 = vsel %vm1722, %v1696, 0
        %v1733 = vsel %vm1722, %v1697, 0
        %1735 = vmatpush.msra.mxu0 0.0
        %1736 = vmatpush.msra.mxu0 0.0
        %1737 = vmatpush.msra.mxu0 0.0
        %1738 = vmatpush.msra.mxu0 0.0
        %1739 = vmatpush.msra.mxu0 0.0
        %1740 = vmatpush.msra.mxu0 0.0
        %1741 = vmatpush.msra.mxu0 0.0
        %1742 = vmatpush.msra.mxu0 0.0
        %1743 = vmatpush.msra.mxu0 0.0
        %1744 = vmatpush.msra.mxu0 0.0
        %1745 = vmatpush.msra.mxu0 0.0
        %1746 = vmatpush.msra.mxu0 0.0
        %1747 = vmatpush.msra.mxu0 %v1538
        %1748 = vmatpush.msra.mxu0 %v1228
        %1749 = vmatpush.msra.mxu0 %v918
        %1750 = vmatpush.msra.mxu0 %v608
        %1751 = vmatmul.f32.gmra.mxu0 %v1724
        %v1752 = vpop.f32.mrf.mxu0
        %v1753 = vadd.f32 %v1705, %v1752
        %1754 = vmatmul.f32.gmra.mxu0 %v1727
        %v1755 = vpop.f32.mrf.mxu0
        %v1756 = vadd.f32 %v1710, %v1755
        %1757 = vmatmul.f32.gmra.mxu0 %v1730
        %v1758 = vpop.f32.mrf.mxu0
        %v1759 = vadd.f32 %v1715, %v1758
        %1760 = vmatmul.f32.gmra.mxu0 %v1733
        %v1761 = vpop.f32.mrf.mxu0
        %v1762 = vadd.f32 %v1720, %v1761
        %1763 = vdwg.mxu0
        %1764 = vmatpush.msra.mxu0 0.0
        %1765 = vmatpush.msra.mxu0 0.0
        %1766 = vmatpush.msra.mxu0 0.0
        %1767 = vmatpush.msra.mxu0 0.0
        %1768 = vmatpush.msra.mxu0 0.0
        %1769 = vmatpush.msra.mxu0 0.0
        %1770 = vmatpush.msra.mxu0 0.0
        %1771 = vmatpush.msra.mxu0 0.0
        %1772 = vmatpush.msra.mxu0 0.0
        %1773 = vmatpush.msra.mxu0 0.0
        %1774 = vmatpush.msra.mxu0 0.0
        %1775 = vmatpush.msra.mxu0 0.0
        %1776 = vmatpush.msra.mxu0 %v1693
        %1777 = vmatpush.msra.mxu0 %v1383
        %1778 = vmatpush.msra.mxu0 %v1073
        %1779 = vmatpush.msra.mxu0 %v763
        %1780 = vmatmul.f32.gmra.mxu0 %v1724
        %v1781 = vpop.f32.mrf.mxu0
        %v1782 = vadd.f32 %v1705, %v1781
        %1783 = vmatmul.f32.gmra.mxu0 %v1727
        %v1784 = vpop.f32.mrf.mxu0
        %v1785 = vadd.f32 %v1710, %v1784
        %1786 = vmatmul.f32.gmra.mxu0 %v1730
        %v1787 = vpop.f32.mrf.mxu0
        %v1788 = vadd.f32 %v1715, %v1787
        %1789 = vmatmul.f32.gmra.mxu0 %v1733
        %v1790 = vpop.f32.mrf.mxu0
        %v1791 = vadd.f32 %v1720, %v1790
        %1792 = vdwg.mxu0
        %v1793 = vmul.f32 %v1753, 30.0
        %v1794 = vmul.f32 %v1782, 30.0
        %v1795 = vmul.f32 %v1756, 30.0
        %v1796 = vmul.f32 %v1785, 30.0
        %v1797 = vmul.f32 %v1759, 30.0
        %v1798 = vmul.f32 %v1788, 30.0
        %v1799 = vmul.f32 %v1762, 30.0
        %v1800 = vmul.f32 %v1791, 30.0
        %v1801 = vand.u32 2147483647, %v1793
        %vm1802 = vcmp.le.f32.partialorder %v1801, 0.7853982
        %vm1803 = vcmp.lt.s32.totalorder %v1793, 0
        %v1804 = vand.u32 %v1793, 2139095040
        %v1805 = vshrl.u32 %v1804, 23
        %v1806 = vsub.s32 %v1805, 127
        %v1807 = vand.u32 2147483647, %v1793
        %v1808 = vand.u32 %v1807, 8388607
        %v1809 = vor.u32 %v1808, 8388608
        %v1810 = vsub.s32 0, %v1809
        %v1811 = vadd.s32 %v1806, 1
        %vm1812 = vcmp.gt.s32.totalorder %v1811, 0
        %v1813 = vsel %vm1812, %v1811, 0
        %v1814 = vshrl.u32 %v1813, 5
        %v1815 = vand.u32 %v1813, 31
        %v1816 = vsub.s32 32, %v1815
        %v1817 = vshrl.u32 683565275, %v1816
        %v1818 = vshll.u32 683565275, %v1815
        %v1819 = vshrl.u32 2475754826, %v1816
        %v1820 = vor.u32 %v1818, %v1819
        %v1821 = vshll.u32 2475754826, %v1815
        %v1822 = vshrl.u32 2131351028, %v1816
        %v1823 = vor.u32 %v1821, %v1822
        %v1824 = vshll.u32 2131351028, %v1815
        %v1825 = vshrl.u32 2102212464, %v1816
        %v1826 = vor.u32 %v1824, %v1825
        %v1827 = vshll.u32 2102212464, %v1815
        %v1828 = vshrl.u32 920167782, %v1816
        %v1829 = vor.u32 %v1827, %v1828
        %v1830 = vshll.u32 920167782, %v1815
        %v1831 = vshrl.u32 1326507024, %v1816
        %v1832 = vor.u32 %v1830, %v1831
        %vm1833 = vcmp.lt.s32.totalorder %v1814, 1
        %vm1834 = vcmp.lt.s32.totalorder %v1814, 2
        %vm1835 = vcmp.lt.s32.totalorder %v1814, 3
        %vm1836 = vcmp.lt.s32.totalorder %v1814, 4
        %v1837 = vsel %vm1833, %v1817, %v1820
        %v1838 = vsel %vm1836, %v1826, 2102212464
        %v1839 = vsel %vm1835, %v1823, %v1838
        %v1840 = vsel %vm1834, %v1837, %v1839
        %v1841 = vsel %vm1833, %v1820, %v1823
        %v1842 = vsel %vm1836, %v1829, 920167782
        %v1843 = vsel %vm1835, %v1826, %v1842
        %v1844 = vsel %vm1834, %v1841, %v1843
        %v1845 = vsel %vm1833, %v1823, %v1826
        %v1846 = vsel %vm1836, %v1832, 1326507024
        %v1847 = vsel %vm1835, %v1829, %v1846
        %v1848 = vsel %vm1834, %v1845, %v1847
        %v1849 = vshll.u32 %v1809, 8
        %v1850 = vand.u32 %v1849, 65535
        %v1851 = vshrl.u32 %v1849, 16
        %v1852 = vand.u32 %v1848, 65535
        %v1853 = vshrl.u32 %v1848, 16
        %v1854 = vmul.u32 %v1850, %v1852
        %v1855 = vmul.u32 %v1850, %v1853
        %v1856 = vmul.u32 %v1851, %v1852
        %v1857 = vmul.u32 %v1851, %v1853
        %v1858 = vshll.u32 %v1855, 16
        %v1859 = vshrl.u32 %v1855, 16
        %v1860 = vshll.u32 %v1856, 16
        %v1861 = vshrl.u32 %v1856, 16
        %vm1862 = vc.u32 %v1854, %v1858
        %v1863 = vsel %vm1862, 1, 0
        %v1864 = vadd.s32 %v1854, %v1858
        %v1865 = vadd.s32 %v1857, %v1863
        %vm1866 = vc.u32 %v1864, %v1860
        %v1867 = vsel %vm1866, 1, 0
        %v1868 = vadd.s32 %v1864, %v1860
        %v1869 = vadd.s32 %v1865, %v1867
        %v1870 = vadd.s32 %v1869, %v1859
        %v1871 = vadd.s32 %v1870, %v1861
        %v1872 = vand.u32 %v1849, 65535
        %v1873 = vshrl.u32 %v1849, 16
        %v1874 = vand.u32 %v1844, 65535
        %v1875 = vshrl.u32 %v1844, 16
        %v1876 = vmul.u32 %v1872, %v1874
        %v1877 = vmul.u32 %v1872, %v1875
        %v1878 = vmul.u32 %v1873, %v1874
        %v1879 = vmul.u32 %v1873, %v1875
        %v1880 = vshll.u32 %v1877, 16
        %v1881 = vshrl.u32 %v1877, 16
        %v1882 = vshll.u32 %v1878, 16
        %v1883 = vshrl.u32 %v1878, 16
        %vm1884 = vc.u32 %v1876, %v1880
        %v1885 = vsel %vm1884, 1, 0
        %v1886 = vadd.s32 %v1876, %v1880
        %v1887 = vadd.s32 %v1879, %v1885
        %vm1888 = vc.u32 %v1886, %v1882
        %v1889 = vsel %vm1888, 1, 0
        %v1890 = vadd.s32 %v1886, %v1882
        %v1891 = vadd.s32 %v1887, %v1889
        %v1892 = vadd.s32 %v1891, %v1881
        %v1893 = vadd.s32 %v1892, %v1883
        %v1894 = vmul.u32 %v1849, %v1840
        %v1895 = vadd.s32 %v1871, %v1890
        %vm1896 = vc.u32 %v1871, %v1890
        %v1897 = vadd.s32 %v1893, 1
        %v1898 = vsel %vm1896, %v1897, %v1893
        %v1899 = vadd.s32 %v1894, %v1898
        %v1900 = vadd.s32 %v1899, 536870912
        %v1901 = vshrl.u32 %v1900, 30
        %v1902 = vshll.u32 %v1901, 30
        %v1903 = vsub.s32 %v1899, %v1902
        %vm1904 = vcmp.lt.s32.totalorder %v1903, 0
        %v1905 = vsub.s32 0, %v1903
        %v1906 = vsel %vm1904, %v1905, %v1903
        %v1907 = vclz %v1906
        %v1908 = vsub.s32 %v1907, 2
        %vm1909 = vcmp.gt.s32.totalorder 0, %v1908
        %v1910 = vsel %vm1909, 0, %v1908
        %v1911 = vsub.s32 32, %v1910
        %v1912 = vshll.u32 %v1903, %v1910
        %v1913 = vshrl.u32 %v1895, %v1911
        %v1914 = vor.u32 %v1912, %v1913
        %v1915 = vsub.s32 4294967266, %v1910
        %v1916 = vadd.s32 %v1915, 127
        %v1917 = vshll.u32 %v1916, 23
        %v1918 = vor.u32 4788187, %v1917
        %v1919 = vand.u32 2147483647, %v1918
        %v1921 = vcvt.s32.f32 %v1914
        %v1922 = vmul.f32 %v1921, %v1919
        %v1923 = vxor.u32 %v1922, 2147483648
        %v1924 = vsel %vm1803, %v1923, %v1922
        %v1925 = vsub.s32 4, %v1901
        %v1926 = vsel %vm1803, %v1925, %v1901
        %v1927 = vsel %vm1802, %v1793, %v1924
        %v1928 = vsel %vm1802, 0, %v1926
        %v1929 = vmul.f32 %v1927, %v1927
        %v1930 = vmul.f32 %v1929, -0.001358992
        %v1931 = vadd.f32 %v1930, 0.041655596
        %v1932 = vmul.f32 %v1929, %v1931
        %v1933 = vadd.f32 %v1932, -0.4999988
        %v1934 = vmul.f32 %v1929, %v1933
        %v1935 = vadd.f32 1.0, %v1934
        %v1936 = vmul.f32 %v1927, %v1927
        %v1937 = vmul.f32 %v1936, -0.00019511016
        %v1938 = vadd.f32 %v1937, 0.008332121
        %v1939 = vmul.f32 %v1936, %v1938
        %v1940 = vadd.f32 %v1939, -0.16666654
        %v1941 = vmul.f32 %v1936, %v1940
        %v1942 = vadd.f32 %v1941, 1.0
        %v1943 = vmul.f32 %v1942, %v1927
        %vm1944 = vweird.f32 %v1793
        %v1945 = vadd.s32 %v1928, 3
        %v1946 = vand.u32 %v1945, 3
        %vm1947 = vcmp.lt.s32.totalorder %v1946, 2
        %vm1948 = vcmp.eq.s32.totalorder %v1946, 0
        %v1949 = vxor.u32 %v1943, 2147483648
        %v1950 = vsel %vm1948, %v1935, %v1949
        %vm1951 = vcmp.eq.s32.totalorder %v1946, 2
        %v1952 = vxor.u32 %v1935, 2147483648
        %v1953 = vsel %vm1951, %v1952, %v1943
        %v1954 = vsel %vm1947, %v1950, %v1953
        %v1955 = vsel %vm1944, nan, %v1954
        %v1956 = vand.u32 2147483647, %v1794
        %vm1957 = vcmp.le.f32.partialorder %v1956, 0.7853982
        %vm1958 = vcmp.lt.s32.totalorder %v1794, 0
        %v1959 = vand.u32 %v1794, 2139095040
        %v1960 = vshrl.u32 %v1959, 23
        %v1961 = vsub.s32 %v1960, 127
        %v1962 = vand.u32 2147483647, %v1794
        %v1963 = vand.u32 %v1962, 8388607
        %v1964 = vor.u32 %v1963, 8388608
        %v1965 = vsub.s32 0, %v1964
        %v1966 = vadd.s32 %v1961, 1
        %vm1967 = vcmp.gt.s32.totalorder %v1966, 0
        %v1968 = vsel %vm1967, %v1966, 0
        %v1969 = vshrl.u32 %v1968, 5
        %v1970 = vand.u32 %v1968, 31
        %v1971 = vsub.s32 32, %v1970
        %v1972 = vshrl.u32 683565275, %v1971
        %v1973 = vshll.u32 683565275, %v1970
        %v1974 = vshrl.u32 2475754826, %v1971
        %v1975 = vor.u32 %v1973, %v1974
        %v1976 = vshll.u32 2475754826, %v1970
        %v1977 = vshrl.u32 2131351028, %v1971
        %v1978 = vor.u32 %v1976, %v1977
        %v1979 = vshll.u32 2131351028, %v1970
        %v1980 = vshrl.u32 2102212464, %v1971
        %v1981 = vor.u32 %v1979, %v1980
        %v1982 = vshll.u32 2102212464, %v1970
        %v1983 = vshrl.u32 920167782, %v1971
        %v1984 = vor.u32 %v1982, %v1983
        %v1985 = vshll.u32 920167782, %v1970
        %v1986 = vshrl.u32 1326507024, %v1971
        %v1987 = vor.u32 %v1985, %v1986
        %vm1988 = vcmp.lt.s32.totalorder %v1969, 1
        %vm1989 = vcmp.lt.s32.totalorder %v1969, 2
        %vm1990 = vcmp.lt.s32.totalorder %v1969, 3
        %vm1991 = vcmp.lt.s32.totalorder %v1969, 4
        %v1992 = vsel %vm1988, %v1972, %v1975
        %v1993 = vsel %vm1991, %v1981, 2102212464
        %v1994 = vsel %vm1990, %v1978, %v1993
        %v1995 = vsel %vm1989, %v1992, %v1994
        %v1996 = vsel %vm1988, %v1975, %v1978
        %v1997 = vsel %vm1991, %v1984, 920167782
        %v1998 = vsel %vm1990, %v1981, %v1997
        %v1999 = vsel %vm1989, %v1996, %v1998
        %v2000 = vsel %vm1988, %v1978, %v1981
        %v2001 = vsel %vm1991, %v1987, 1326507024
        %v2002 = vsel %vm1990, %v1984, %v2001
        %v2003 = vsel %vm1989, %v2000, %v2002
        %v2004 = vshll.u32 %v1964, 8
        %v2005 = vand.u32 %v2004, 65535
        %v2006 = vshrl.u32 %v2004, 16
        %v2007 = vand.u32 %v2003, 65535
        %v2008 = vshrl.u32 %v2003, 16
        %v2009 = vmul.u32 %v2005, %v2007
        %v2010 = vmul.u32 %v2005, %v2008
        %v2011 = vmul.u32 %v2006, %v2007
        %v2012 = vmul.u32 %v2006, %v2008
        %v2013 = vshll.u32 %v2010, 16
        %v2014 = vshrl.u32 %v2010, 16
        %v2015 = vshll.u32 %v2011, 16
        %v2016 = vshrl.u32 %v2011, 16
        %vm2017 = vc.u32 %v2009, %v2013
        %v2018 = vsel %vm2017, 1, 0
        %v2019 = vadd.s32 %v2009, %v2013
        %v2020 = vadd.s32 %v2012, %v2018
        %vm2021 = vc.u32 %v2019, %v2015
        %v2022 = vsel %vm2021, 1, 0
        %v2023 = vadd.s32 %v2019, %v2015
        %v2024 = vadd.s32 %v2020, %v2022
        %v2025 = vadd.s32 %v2024, %v2014
        %v2026 = vadd.s32 %v2025, %v2016
        %v2027 = vand.u32 %v2004, 65535
        %v2028 = vshrl.u32 %v2004, 16
        %v2029 = vand.u32 %v1999, 65535
        %v2030 = vshrl.u32 %v1999, 16
        %v2031 = vmul.u32 %v2027, %v2029
        %v2032 = vmul.u32 %v2027, %v2030
        %v2033 = vmul.u32 %v2028, %v2029
        %v2034 = vmul.u32 %v2028, %v2030
        %v2035 = vshll.u32 %v2032, 16
        %v2036 = vshrl.u32 %v2032, 16
        %v2037 = vshll.u32 %v2033, 16
        %v2038 = vshrl.u32 %v2033, 16
        %vm2039 = vc.u32 %v2031, %v2035
        %v2040 = vsel %vm2039, 1, 0
        %v2041 = vadd.s32 %v2031, %v2035
        %v2042 = vadd.s32 %v2034, %v2040
        %vm2043 = vc.u32 %v2041, %v2037
        %v2044 = vsel %vm2043, 1, 0
        %v2045 = vadd.s32 %v2041, %v2037
        %v2046 = vadd.s32 %v2042, %v2044
        %v2047 = vadd.s32 %v2046, %v2036
        %v2048 = vadd.s32 %v2047, %v2038
        %v2049 = vmul.u32 %v2004, %v1995
        %v2050 = vadd.s32 %v2026, %v2045
        %vm2051 = vc.u32 %v2026, %v2045
        %v2052 = vadd.s32 %v2048, 1
        %v2053 = vsel %vm2051, %v2052, %v2048
        %v2054 = vadd.s32 %v2049, %v2053
        %v2055 = vadd.s32 %v2054, 536870912
        %v2056 = vshrl.u32 %v2055, 30
        %v2057 = vshll.u32 %v2056, 30
        %v2058 = vsub.s32 %v2054, %v2057
        %vm2059 = vcmp.lt.s32.totalorder %v2058, 0
        %v2060 = vsub.s32 0, %v2058
        %v2061 = vsel %vm2059, %v2060, %v2058
        %v2062 = vclz %v2061
        %v2063 = vsub.s32 %v2062, 2
        %vm2064 = vcmp.gt.s32.totalorder 0, %v2063
        %v2065 = vsel %vm2064, 0, %v2063
        %v2066 = vsub.s32 32, %v2065
        %v2067 = vshll.u32 %v2058, %v2065
        %v2068 = vshrl.u32 %v2050, %v2066
        %v2069 = vor.u32 %v2067, %v2068
        %v2070 = vsub.s32 4294967266, %v2065
        %v2071 = vadd.s32 %v2070, 127
        %v2072 = vshll.u32 %v2071, 23
        %v2073 = vor.u32 4788187, %v2072
        %v2074 = vand.u32 2147483647, %v2073
        %v2076 = vcvt.s32.f32 %v2069
        %v2077 = vmul.f32 %v2076, %v2074
        %v2078 = vxor.u32 %v2077, 2147483648
        %v2079 = vsel %vm1958, %v2078, %v2077
        %v2080 = vsub.s32 4, %v2056
        %v2081 = vsel %vm1958, %v2080, %v2056
        %v2082 = vsel %vm1957, %v1794, %v2079
        %v2083 = vsel %vm1957, 0, %v2081
        %v2084 = vmul.f32 %v2082, %v2082
        %v2085 = vmul.f32 %v2084, -0.001358992
        %v2086 = vadd.f32 %v2085, 0.041655596
        %v2087 = vmul.f32 %v2084, %v2086
        %v2088 = vadd.f32 %v2087, -0.4999988
        %v2089 = vmul.f32 %v2084, %v2088
        %v2090 = vadd.f32 1.0, %v2089
        %v2091 = vmul.f32 %v2082, %v2082
        %v2092 = vmul.f32 %v2091, -0.00019511016
        %v2093 = vadd.f32 %v2092, 0.008332121
        %v2094 = vmul.f32 %v2091, %v2093
        %v2095 = vadd.f32 %v2094, -0.16666654
        %v2096 = vmul.f32 %v2091, %v2095
        %v2097 = vadd.f32 %v2096, 1.0
        %v2098 = vmul.f32 %v2097, %v2082
        %vm2099 = vweird.f32 %v1794
        %v2100 = vadd.s32 %v2083, 3
        %v2101 = vand.u32 %v2100, 3
        %vm2102 = vcmp.lt.s32.totalorder %v2101, 2
        %vm2103 = vcmp.eq.s32.totalorder %v2101, 0
        %v2104 = vxor.u32 %v2098, 2147483648
        %v2105 = vsel %vm2103, %v2090, %v2104
        %vm2106 = vcmp.eq.s32.totalorder %v2101, 2
        %v2107 = vxor.u32 %v2090, 2147483648
        %v2108 = vsel %vm2106, %v2107, %v2098
        %v2109 = vsel %vm2102, %v2105, %v2108
        %v2110 = vsel %vm2099, nan, %v2109
        %v2111 = vand.u32 2147483647, %v1795
        %vm2112 = vcmp.le.f32.partialorder %v2111, 0.7853982
        %vm2113 = vcmp.lt.s32.totalorder %v1795, 0
        %v2114 = vand.u32 %v1795, 2139095040
        %v2115 = vshrl.u32 %v2114, 23
        %v2116 = vsub.s32 %v2115, 127
        %v2117 = vand.u32 2147483647, %v1795
        %v2118 = vand.u32 %v2117, 8388607
        %v2119 = vor.u32 %v2118, 8388608
        %v2120 = vsub.s32 0, %v2119
        %v2121 = vadd.s32 %v2116, 1
        %vm2122 = vcmp.gt.s32.totalorder %v2121, 0
        %v2123 = vsel %vm2122, %v2121, 0
        %v2124 = vshrl.u32 %v2123, 5
        %v2125 = vand.u32 %v2123, 31
        %v2126 = vsub.s32 32, %v2125
        %v2127 = vshrl.u32 683565275, %v2126
        %v2128 = vshll.u32 683565275, %v2125
        %v2129 = vshrl.u32 2475754826, %v2126
        %v2130 = vor.u32 %v2128, %v2129
        %v2131 = vshll.u32 2475754826, %v2125
        %v2132 = vshrl.u32 2131351028, %v2126
        %v2133 = vor.u32 %v2131, %v2132
        %v2134 = vshll.u32 2131351028, %v2125
        %v2135 = vshrl.u32 2102212464, %v2126
        %v2136 = vor.u32 %v2134, %v2135
        %v2137 = vshll.u32 2102212464, %v2125
        %v2138 = vshrl.u32 920167782, %v2126
        %v2139 = vor.u32 %v2137, %v2138
        %v2140 = vshll.u32 920167782, %v2125
        %v2141 = vshrl.u32 1326507024, %v2126
        %v2142 = vor.u32 %v2140, %v2141
        %vm2143 = vcmp.lt.s32.totalorder %v2124, 1
        %vm2144 = vcmp.lt.s32.totalorder %v2124, 2
        %vm2145 = vcmp.lt.s32.totalorder %v2124, 3
        %vm2146 = vcmp.lt.s32.totalorder %v2124, 4
        %v2147 = vsel %vm2143, %v2127, %v2130
        %v2148 = vsel %vm2146, %v2136, 2102212464
        %v2149 = vsel %vm2145, %v2133, %v2148
        %v2150 = vsel %vm2144, %v2147, %v2149
        %v2151 = vsel %vm2143, %v2130, %v2133
        %v2152 = vsel %vm2146, %v2139, 920167782
        %v2153 = vsel %vm2145, %v2136, %v2152
        %v2154 = vsel %vm2144, %v2151, %v2153
        %v2155 = vsel %vm2143, %v2133, %v2136
        %v2156 = vsel %vm2146, %v2142, 1326507024
        %v2157 = vsel %vm2145, %v2139, %v2156
        %v2158 = vsel %vm2144, %v2155, %v2157
        %v2159 = vshll.u32 %v2119, 8
        %v2160 = vand.u32 %v2159, 65535
        %v2161 = vshrl.u32 %v2159, 16
        %v2162 = vand.u32 %v2158, 65535
        %v2163 = vshrl.u32 %v2158, 16
        %v2164 = vmul.u32 %v2160, %v2162
        %v2165 = vmul.u32 %v2160, %v2163
        %v2166 = vmul.u32 %v2161, %v2162
        %v2167 = vmul.u32 %v2161, %v2163
        %v2168 = vshll.u32 %v2165, 16
        %v2169 = vshrl.u32 %v2165, 16
        %v2170 = vshll.u32 %v2166, 16
        %v2171 = vshrl.u32 %v2166, 16
        %vm2172 = vc.u32 %v2164, %v2168
        %v2173 = vsel %vm2172, 1, 0
        %v2174 = vadd.s32 %v2164, %v2168
        %v2175 = vadd.s32 %v2167, %v2173
        %vm2176 = vc.u32 %v2174, %v2170
        %v2177 = vsel %vm2176, 1, 0
        %v2178 = vadd.s32 %v2174, %v2170
        %v2179 = vadd.s32 %v2175, %v2177
        %v2180 = vadd.s32 %v2179, %v2169
        %v2181 = vadd.s32 %v2180, %v2171
        %v2182 = vand.u32 %v2159, 65535
        %v2183 = vshrl.u32 %v2159, 16
        %v2184 = vand.u32 %v2154, 65535
        %v2185 = vshrl.u32 %v2154, 16
        %v2186 = vmul.u32 %v2182, %v2184
        %v2187 = vmul.u32 %v2182, %v2185
        %v2188 = vmul.u32 %v2183, %v2184
        %v2189 = vmul.u32 %v2183, %v2185
        %v2190 = vshll.u32 %v2187, 16
        %v2191 = vshrl.u32 %v2187, 16
        %v2192 = vshll.u32 %v2188, 16
        %v2193 = vshrl.u32 %v2188, 16
        %vm2194 = vc.u32 %v2186, %v2190
        %v2195 = vsel %vm2194, 1, 0
        %v2196 = vadd.s32 %v2186, %v2190
        %v2197 = vadd.s32 %v2189, %v2195
        %vm2198 = vc.u32 %v2196, %v2192
        %v2199 = vsel %vm2198, 1, 0
        %v2200 = vadd.s32 %v2196, %v2192
        %v2201 = vadd.s32 %v2197, %v2199
        %v2202 = vadd.s32 %v2201, %v2191
        %v2203 = vadd.s32 %v2202, %v2193
        %v2204 = vmul.u32 %v2159, %v2150
        %v2205 = vadd.s32 %v2181, %v2200
        %vm2206 = vc.u32 %v2181, %v2200
        %v2207 = vadd.s32 %v2203, 1
        %v2208 = vsel %vm2206, %v2207, %v2203
        %v2209 = vadd.s32 %v2204, %v2208
        %v2210 = vadd.s32 %v2209, 536870912
        %v2211 = vshrl.u32 %v2210, 30
        %v2212 = vshll.u32 %v2211, 30
        %v2213 = vsub.s32 %v2209, %v2212
        %vm2214 = vcmp.lt.s32.totalorder %v2213, 0
        %v2215 = vsub.s32 0, %v2213
        %v2216 = vsel %vm2214, %v2215, %v2213
        %v2217 = vclz %v2216
        %v2218 = vsub.s32 %v2217, 2
        %vm2219 = vcmp.gt.s32.totalorder 0, %v2218
        %v2220 = vsel %vm2219, 0, %v2218
        %v2221 = vsub.s32 32, %v2220
        %v2222 = vshll.u32 %v2213, %v2220
        %v2223 = vshrl.u32 %v2205, %v2221
        %v2224 = vor.u32 %v2222, %v2223
        %v2225 = vsub.s32 4294967266, %v2220
        %v2226 = vadd.s32 %v2225, 127
        %v2227 = vshll.u32 %v2226, 23
        %v2228 = vor.u32 4788187, %v2227
        %v2229 = vand.u32 2147483647, %v2228
        %v2231 = vcvt.s32.f32 %v2224
        %v2232 = vmul.f32 %v2231, %v2229
        %v2233 = vxor.u32 %v2232, 2147483648
        %v2234 = vsel %vm2113, %v2233, %v2232
        %v2235 = vsub.s32 4, %v2211
        %v2236 = vsel %vm2113, %v2235, %v2211
        %v2237 = vsel %vm2112, %v1795, %v2234
        %v2238 = vsel %vm2112, 0, %v2236
        %v2239 = vmul.f32 %v2237, %v2237
        %v2240 = vmul.f32 %v2239, -0.001358992
        %v2241 = vadd.f32 %v2240, 0.041655596
        %v2242 = vmul.f32 %v2239, %v2241
        %v2243 = vadd.f32 %v2242, -0.4999988
        %v2244 = vmul.f32 %v2239, %v2243
        %v2245 = vadd.f32 1.0, %v2244
        %v2246 = vmul.f32 %v2237, %v2237
        %v2247 = vmul.f32 %v2246, -0.00019511016
        %v2248 = vadd.f32 %v2247, 0.008332121
        %v2249 = vmul.f32 %v2246, %v2248
        %v2250 = vadd.f32 %v2249, -0.16666654
        %v2251 = vmul.f32 %v2246, %v2250
        %v2252 = vadd.f32 %v2251, 1.0
        %v2253 = vmul.f32 %v2252, %v2237
        %vm2254 = vweird.f32 %v1795
        %v2255 = vadd.s32 %v2238, 3
        %v2256 = vand.u32 %v2255, 3
        %vm2257 = vcmp.lt.s32.totalorder %v2256, 2
        %vm2258 = vcmp.eq.s32.totalorder %v2256, 0
        %v2259 = vxor.u32 %v2253, 2147483648
        %v2260 = vsel %vm2258, %v2245, %v2259
        %vm2261 = vcmp.eq.s32.totalorder %v2256, 2
        %v2262 = vxor.u32 %v2245, 2147483648
        %v2263 = vsel %vm2261, %v2262, %v2253
        %v2264 = vsel %vm2257, %v2260, %v2263
        %v2265 = vsel %vm2254, nan, %v2264
        %v2266 = vand.u32 2147483647, %v1796
        %vm2267 = vcmp.le.f32.partialorder %v2266, 0.7853982
        %vm2268 = vcmp.lt.s32.totalorder %v1796, 0
        %v2269 = vand.u32 %v1796, 2139095040
        %v2270 = vshrl.u32 %v2269, 23
        %v2271 = vsub.s32 %v2270, 127
        %v2272 = vand.u32 2147483647, %v1796
        %v2273 = vand.u32 %v2272, 8388607
        %v2274 = vor.u32 %v2273, 8388608
        %v2275 = vsub.s32 0, %v2274
        %v2276 = vadd.s32 %v2271, 1
        %vm2277 = vcmp.gt.s32.totalorder %v2276, 0
        %v2278 = vsel %vm2277, %v2276, 0
        %v2279 = vshrl.u32 %v2278, 5
        %v2280 = vand.u32 %v2278, 31
        %v2281 = vsub.s32 32, %v2280
        %v2282 = vshrl.u32 683565275, %v2281
        %v2283 = vshll.u32 683565275, %v2280
        %v2284 = vshrl.u32 2475754826, %v2281
        %v2285 = vor.u32 %v2283, %v2284
        %v2286 = vshll.u32 2475754826, %v2280
        %v2287 = vshrl.u32 2131351028, %v2281
        %v2288 = vor.u32 %v2286, %v2287
        %v2289 = vshll.u32 2131351028, %v2280
        %v2290 = vshrl.u32 2102212464, %v2281
        %v2291 = vor.u32 %v2289, %v2290
        %v2292 = vshll.u32 2102212464, %v2280
        %v2293 = vshrl.u32 920167782, %v2281
        %v2294 = vor.u32 %v2292, %v2293
        %v2295 = vshll.u32 920167782, %v2280
        %v2296 = vshrl.u32 1326507024, %v2281
        %v2297 = vor.u32 %v2295, %v2296
        %vm2298 = vcmp.lt.s32.totalorder %v2279, 1
        %vm2299 = vcmp.lt.s32.totalorder %v2279, 2
        %vm2300 = vcmp.lt.s32.totalorder %v2279, 3
        %vm2301 = vcmp.lt.s32.totalorder %v2279, 4
        %v2302 = vsel %vm2298, %v2282, %v2285
        %v2303 = vsel %vm2301, %v2291, 2102212464
        %v2304 = vsel %vm2300, %v2288, %v2303
        %v2305 = vsel %vm2299, %v2302, %v2304
        %v2306 = vsel %vm2298, %v2285, %v2288
        %v2307 = vsel %vm2301, %v2294, 920167782
        %v2308 = vsel %vm2300, %v2291, %v2307
        %v2309 = vsel %vm2299, %v2306, %v2308
        %v2310 = vsel %vm2298, %v2288, %v2291
        %v2311 = vsel %vm2301, %v2297, 1326507024
        %v2312 = vsel %vm2300, %v2294, %v2311
        %v2313 = vsel %vm2299, %v2310, %v2312
        %v2314 = vshll.u32 %v2274, 8
        %v2315 = vand.u32 %v2314, 65535
        %v2316 = vshrl.u32 %v2314, 16
        %v2317 = vand.u32 %v2313, 65535
        %v2318 = vshrl.u32 %v2313, 16
        %v2319 = vmul.u32 %v2315, %v2317
        %v2320 = vmul.u32 %v2315, %v2318
        %v2321 = vmul.u32 %v2316, %v2317
        %v2322 = vmul.u32 %v2316, %v2318
        %v2323 = vshll.u32 %v2320, 16
        %v2324 = vshrl.u32 %v2320, 16
        %v2325 = vshll.u32 %v2321, 16
        %v2326 = vshrl.u32 %v2321, 16
        %vm2327 = vc.u32 %v2319, %v2323
        %v2328 = vsel %vm2327, 1, 0
        %v2329 = vadd.s32 %v2319, %v2323
        %v2330 = vadd.s32 %v2322, %v2328
        %vm2331 = vc.u32 %v2329, %v2325
        %v2332 = vsel %vm2331, 1, 0
        %v2333 = vadd.s32 %v2329, %v2325
        %v2334 = vadd.s32 %v2330, %v2332
        %v2335 = vadd.s32 %v2334, %v2324
        %v2336 = vadd.s32 %v2335, %v2326
        %v2337 = vand.u32 %v2314, 65535
        %v2338 = vshrl.u32 %v2314, 16
        %v2339 = vand.u32 %v2309, 65535
        %v2340 = vshrl.u32 %v2309, 16
        %v2341 = vmul.u32 %v2337, %v2339
        %v2342 = vmul.u32 %v2337, %v2340
        %v2343 = vmul.u32 %v2338, %v2339
        %v2344 = vmul.u32 %v2338, %v2340
        %v2345 = vshll.u32 %v2342, 16
        %v2346 = vshrl.u32 %v2342, 16
        %v2347 = vshll.u32 %v2343, 16
        %v2348 = vshrl.u32 %v2343, 16
        %vm2349 = vc.u32 %v2341, %v2345
        %v2350 = vsel %vm2349, 1, 0
        %v2351 = vadd.s32 %v2341, %v2345
        %v2352 = vadd.s32 %v2344, %v2350
        %vm2353 = vc.u32 %v2351, %v2347
        %v2354 = vsel %vm2353, 1, 0
        %v2355 = vadd.s32 %v2351, %v2347
        %v2356 = vadd.s32 %v2352, %v2354
        %v2357 = vadd.s32 %v2356, %v2346
        %v2358 = vadd.s32 %v2357, %v2348
        %v2359 = vmul.u32 %v2314, %v2305
        %v2360 = vadd.s32 %v2336, %v2355
        %vm2361 = vc.u32 %v2336, %v2355
        %v2362 = vadd.s32 %v2358, 1
        %v2363 = vsel %vm2361, %v2362, %v2358
        %v2364 = vadd.s32 %v2359, %v2363
        %v2365 = vadd.s32 %v2364, 536870912
        %v2366 = vshrl.u32 %v2365, 30
        %v2367 = vshll.u32 %v2366, 30
        %v2368 = vsub.s32 %v2364, %v2367
        %vm2369 = vcmp.lt.s32.totalorder %v2368, 0
        %v2370 = vsub.s32 0, %v2368
        %v2371 = vsel %vm2369, %v2370, %v2368
        %v2372 = vclz %v2371
        %v2373 = vsub.s32 %v2372, 2
        %vm2374 = vcmp.gt.s32.totalorder 0, %v2373
        %v2375 = vsel %vm2374, 0, %v2373
        %v2376 = vsub.s32 32, %v2375
        %v2377 = vshll.u32 %v2368, %v2375
        %v2378 = vshrl.u32 %v2360, %v2376
        %v2379 = vor.u32 %v2377, %v2378
        %v2380 = vsub.s32 4294967266, %v2375
        %v2381 = vadd.s32 %v2380, 127
        %v2382 = vshll.u32 %v2381, 23
        %v2383 = vor.u32 4788187, %v2382
        %v2384 = vand.u32 2147483647, %v2383
        %v2386 = vcvt.s32.f32 %v2379
        %v2387 = vmul.f32 %v2386, %v2384
        %v2388 = vxor.u32 %v2387, 2147483648
        %v2389 = vsel %vm2268, %v2388, %v2387
        %v2390 = vsub.s32 4, %v2366
        %v2391 = vsel %vm2268, %v2390, %v2366
        %v2392 = vsel %vm2267, %v1796, %v2389
        %v2393 = vsel %vm2267, 0, %v2391
        %v2394 = vmul.f32 %v2392, %v2392
        %v2395 = vmul.f32 %v2394, -0.001358992
        %v2396 = vadd.f32 %v2395, 0.041655596
        %v2397 = vmul.f32 %v2394, %v2396
        %v2398 = vadd.f32 %v2397, -0.4999988
        %v2399 = vmul.f32 %v2394, %v2398
        %v2400 = vadd.f32 1.0, %v2399
        %v2401 = vmul.f32 %v2392, %v2392
        %v2402 = vmul.f32 %v2401, -0.00019511016
        %v2403 = vadd.f32 %v2402, 0.008332121
        %v2404 = vmul.f32 %v2401, %v2403
        %v2405 = vadd.f32 %v2404, -0.16666654
        %v2406 = vmul.f32 %v2401, %v2405
        %v2407 = vadd.f32 %v2406, 1.0
        %v2408 = vmul.f32 %v2407, %v2392
        %vm2409 = vweird.f32 %v1796
        %v2410 = vadd.s32 %v2393, 3
        %v2411 = vand.u32 %v2410, 3
        %vm2412 = vcmp.lt.s32.totalorder %v2411, 2
        %vm2413 = vcmp.eq.s32.totalorder %v2411, 0
        %v2414 = vxor.u32 %v2408, 2147483648
        %v2415 = vsel %vm2413, %v2400, %v2414
        %vm2416 = vcmp.eq.s32.totalorder %v2411, 2
        %v2417 = vxor.u32 %v2400, 2147483648
        %v2418 = vsel %vm2416, %v2417, %v2408
        %v2419 = vsel %vm2412, %v2415, %v2418
        %v2420 = vsel %vm2409, nan, %v2419
        %v2421 = vand.u32 2147483647, %v1797
        %vm2422 = vcmp.le.f32.partialorder %v2421, 0.7853982
        %vm2423 = vcmp.lt.s32.totalorder %v1797, 0
        %v2424 = vand.u32 %v1797, 2139095040
        %v2425 = vshrl.u32 %v2424, 23
        %v2426 = vsub.s32 %v2425, 127
        %v2427 = vand.u32 2147483647, %v1797
        %v2428 = vand.u32 %v2427, 8388607
        %v2429 = vor.u32 %v2428, 8388608
        %v2430 = vsub.s32 0, %v2429
        %v2431 = vadd.s32 %v2426, 1
        %vm2432 = vcmp.gt.s32.totalorder %v2431, 0
        %v2433 = vsel %vm2432, %v2431, 0
        %v2434 = vshrl.u32 %v2433, 5
        %v2435 = vand.u32 %v2433, 31
        %v2436 = vsub.s32 32, %v2435
        %v2437 = vshrl.u32 683565275, %v2436
        %v2438 = vshll.u32 683565275, %v2435
        %v2439 = vshrl.u32 2475754826, %v2436
        %v2440 = vor.u32 %v2438, %v2439
        %v2441 = vshll.u32 2475754826, %v2435
        %v2442 = vshrl.u32 2131351028, %v2436
        %v2443 = vor.u32 %v2441, %v2442
        %v2444 = vshll.u32 2131351028, %v2435
        %v2445 = vshrl.u32 2102212464, %v2436
        %v2446 = vor.u32 %v2444, %v2445
        %v2447 = vshll.u32 2102212464, %v2435
        %v2448 = vshrl.u32 920167782, %v2436
        %v2449 = vor.u32 %v2447, %v2448
        %v2450 = vshll.u32 920167782, %v2435
        %v2451 = vshrl.u32 1326507024, %v2436
        %v2452 = vor.u32 %v2450, %v2451
        %vm2453 = vcmp.lt.s32.totalorder %v2434, 1
        %vm2454 = vcmp.lt.s32.totalorder %v2434, 2
        %vm2455 = vcmp.lt.s32.totalorder %v2434, 3
        %vm2456 = vcmp.lt.s32.totalorder %v2434, 4
        %v2457 = vsel %vm2453, %v2437, %v2440
        %v2458 = vsel %vm2456, %v2446, 2102212464
        %v2459 = vsel %vm2455, %v2443, %v2458
        %v2460 = vsel %vm2454, %v2457, %v2459
        %v2461 = vsel %vm2453, %v2440, %v2443
        %v2462 = vsel %vm2456, %v2449, 920167782
        %v2463 = vsel %vm2455, %v2446, %v2462
        %v2464 = vsel %vm2454, %v2461, %v2463
        %v2465 = vsel %vm2453, %v2443, %v2446
        %v2466 = vsel %vm2456, %v2452, 1326507024
        %v2467 = vsel %vm2455, %v2449, %v2466
        %v2468 = vsel %vm2454, %v2465, %v2467
        %v2469 = vshll.u32 %v2429, 8
        %v2470 = vand.u32 %v2469, 65535
        %v2471 = vshrl.u32 %v2469, 16
        %v2472 = vand.u32 %v2468, 65535
        %v2473 = vshrl.u32 %v2468, 16
        %v2474 = vmul.u32 %v2470, %v2472
        %v2475 = vmul.u32 %v2470, %v2473
        %v2476 = vmul.u32 %v2471, %v2472
        %v2477 = vmul.u32 %v2471, %v2473
        %v2478 = vshll.u32 %v2475, 16
        %v2479 = vshrl.u32 %v2475, 16
        %v2480 = vshll.u32 %v2476, 16
        %v2481 = vshrl.u32 %v2476, 16
        %vm2482 = vc.u32 %v2474, %v2478
        %v2483 = vsel %vm2482, 1, 0
        %v2484 = vadd.s32 %v2474, %v2478
        %v2485 = vadd.s32 %v2477, %v2483
        %vm2486 = vc.u32 %v2484, %v2480
        %v2487 = vsel %vm2486, 1, 0
        %v2488 = vadd.s32 %v2484, %v2480
        %v2489 = vadd.s32 %v2485, %v2487
        %v2490 = vadd.s32 %v2489, %v2479
        %v2491 = vadd.s32 %v2490, %v2481
        %v2492 = vand.u32 %v2469, 65535
        %v2493 = vshrl.u32 %v2469, 16
        %v2494 = vand.u32 %v2464, 65535
        %v2495 = vshrl.u32 %v2464, 16
        %v2496 = vmul.u32 %v2492, %v2494
        %v2497 = vmul.u32 %v2492, %v2495
        %v2498 = vmul.u32 %v2493, %v2494
        %v2499 = vmul.u32 %v2493, %v2495
        %v2500 = vshll.u32 %v2497, 16
        %v2501 = vshrl.u32 %v2497, 16
        %v2502 = vshll.u32 %v2498, 16
        %v2503 = vshrl.u32 %v2498, 16
        %vm2504 = vc.u32 %v2496, %v2500
        %v2505 = vsel %vm2504, 1, 0
        %v2506 = vadd.s32 %v2496, %v2500
        %v2507 = vadd.s32 %v2499, %v2505
        %vm2508 = vc.u32 %v2506, %v2502
        %v2509 = vsel %vm2508, 1, 0
        %v2510 = vadd.s32 %v2506, %v2502
        %v2511 = vadd.s32 %v2507, %v2509
        %v2512 = vadd.s32 %v2511, %v2501
        %v2513 = vadd.s32 %v2512, %v2503
        %v2514 = vmul.u32 %v2469, %v2460
        %v2515 = vadd.s32 %v2491, %v2510
        %vm2516 = vc.u32 %v2491, %v2510
        %v2517 = vadd.s32 %v2513, 1
        %v2518 = vsel %vm2516, %v2517, %v2513
        %v2519 = vadd.s32 %v2514, %v2518
        %v2520 = vadd.s32 %v2519, 536870912
        %v2521 = vshrl.u32 %v2520, 30
        %v2522 = vshll.u32 %v2521, 30
        %v2523 = vsub.s32 %v2519, %v2522
        %vm2524 = vcmp.lt.s32.totalorder %v2523, 0
        %v2525 = vsub.s32 0, %v2523
        %v2526 = vsel %vm2524, %v2525, %v2523
        %v2527 = vclz %v2526
        %v2528 = vsub.s32 %v2527, 2
        %vm2529 = vcmp.gt.s32.totalorder 0, %v2528
        %v2530 = vsel %vm2529, 0, %v2528
        %v2531 = vsub.s32 32, %v2530
        %v2532 = vshll.u32 %v2523, %v2530
        %v2533 = vshrl.u32 %v2515, %v2531
        %v2534 = vor.u32 %v2532, %v2533
        %v2535 = vsub.s32 4294967266, %v2530
        %v2536 = vadd.s32 %v2535, 127
        %v2537 = vshll.u32 %v2536, 23
        %v2538 = vor.u32 4788187, %v2537
        %v2539 = vand.u32 2147483647, %v2538
        %v2541 = vcvt.s32.f32 %v2534
        %v2542 = vmul.f32 %v2541, %v2539
        %v2543 = vxor.u32 %v2542, 2147483648
        %v2544 = vsel %vm2423, %v2543, %v2542
        %v2545 = vsub.s32 4, %v2521
        %v2546 = vsel %vm2423, %v2545, %v2521
        %v2547 = vsel %vm2422, %v1797, %v2544
        %v2548 = vsel %vm2422, 0, %v2546
        %v2549 = vmul.f32 %v2547, %v2547
        %v2550 = vmul.f32 %v2549, -0.001358992
        %v2551 = vadd.f32 %v2550, 0.041655596
        %v2552 = vmul.f32 %v2549, %v2551
        %v2553 = vadd.f32 %v2552, -0.4999988
        %v2554 = vmul.f32 %v2549, %v2553
        %v2555 = vadd.f32 1.0, %v2554
        %v2556 = vmul.f32 %v2547, %v2547
        %v2557 = vmul.f32 %v2556, -0.00019511016
        %v2558 = vadd.f32 %v2557, 0.008332121
        %v2559 = vmul.f32 %v2556, %v2558
        %v2560 = vadd.f32 %v2559, -0.16666654
        %v2561 = vmul.f32 %v2556, %v2560
        %v2562 = vadd.f32 %v2561, 1.0
        %v2563 = vmul.f32 %v2562, %v2547
        %vm2564 = vweird.f32 %v1797
        %v2565 = vadd.s32 %v2548, 3
        %v2566 = vand.u32 %v2565, 3
        %vm2567 = vcmp.lt.s32.totalorder %v2566, 2
        %vm2568 = vcmp.eq.s32.totalorder %v2566, 0
        %v2569 = vxor.u32 %v2563, 2147483648
        %v2570 = vsel %vm2568, %v2555, %v2569
        %vm2571 = vcmp.eq.s32.totalorder %v2566, 2
        %v2572 = vxor.u32 %v2555, 2147483648
        %v2573 = vsel %vm2571, %v2572, %v2563
        %v2574 = vsel %vm2567, %v2570, %v2573
        %v2575 = vsel %vm2564, nan, %v2574
        %v2576 = vand.u32 2147483647, %v1798
        %vm2577 = vcmp.le.f32.partialorder %v2576, 0.7853982
        %vm2578 = vcmp.lt.s32.totalorder %v1798, 0
        %v2579 = vand.u32 %v1798, 2139095040
        %v2580 = vshrl.u32 %v2579, 23
        %v2581 = vsub.s32 %v2580, 127
        %v2582 = vand.u32 2147483647, %v1798
        %v2583 = vand.u32 %v2582, 8388607
        %v2584 = vor.u32 %v2583, 8388608
        %v2585 = vsub.s32 0, %v2584
        %v2586 = vadd.s32 %v2581, 1
        %vm2587 = vcmp.gt.s32.totalorder %v2586, 0
        %v2588 = vsel %vm2587, %v2586, 0
        %v2589 = vshrl.u32 %v2588, 5
        %v2590 = vand.u32 %v2588, 31
        %v2591 = vsub.s32 32, %v2590
        %v2592 = vshrl.u32 683565275, %v2591
        %v2593 = vshll.u32 683565275, %v2590
        %v2594 = vshrl.u32 2475754826, %v2591
        %v2595 = vor.u32 %v2593, %v2594
        %v2596 = vshll.u32 2475754826, %v2590
        %v2597 = vshrl.u32 2131351028, %v2591
        %v2598 = vor.u32 %v2596, %v2597
        %v2599 = vshll.u32 2131351028, %v2590
        %v2600 = vshrl.u32 2102212464, %v2591
        %v2601 = vor.u32 %v2599, %v2600
        %v2602 = vshll.u32 2102212464, %v2590
        %v2603 = vshrl.u32 920167782, %v2591
        %v2604 = vor.u32 %v2602, %v2603
        %v2605 = vshll.u32 920167782, %v2590
        %v2606 = vshrl.u32 1326507024, %v2591
        %v2607 = vor.u32 %v2605, %v2606
        %vm2608 = vcmp.lt.s32.totalorder %v2589, 1
        %vm2609 = vcmp.lt.s32.totalorder %v2589, 2
        %vm2610 = vcmp.lt.s32.totalorder %v2589, 3
        %vm2611 = vcmp.lt.s32.totalorder %v2589, 4
        %v2612 = vsel %vm2608, %v2592, %v2595
        %v2613 = vsel %vm2611, %v2601, 2102212464
        %v2614 = vsel %vm2610, %v2598, %v2613
        %v2615 = vsel %vm2609, %v2612, %v2614
        %v2616 = vsel %vm2608, %v2595, %v2598
        %v2617 = vsel %vm2611, %v2604, 920167782
        %v2618 = vsel %vm2610, %v2601, %v2617
        %v2619 = vsel %vm2609, %v2616, %v2618
        %v2620 = vsel %vm2608, %v2598, %v2601
        %v2621 = vsel %vm2611, %v2607, 1326507024
        %v2622 = vsel %vm2610, %v2604, %v2621
        %v2623 = vsel %vm2609, %v2620, %v2622
        %v2624 = vshll.u32 %v2584, 8
        %v2625 = vand.u32 %v2624, 65535
        %v2626 = vshrl.u32 %v2624, 16
        %v2627 = vand.u32 %v2623, 65535
        %v2628 = vshrl.u32 %v2623, 16
        %v2629 = vmul.u32 %v2625, %v2627
        %v2630 = vmul.u32 %v2625, %v2628
        %v2631 = vmul.u32 %v2626, %v2627
        %v2632 = vmul.u32 %v2626, %v2628
        %v2633 = vshll.u32 %v2630, 16
        %v2634 = vshrl.u32 %v2630, 16
        %v2635 = vshll.u32 %v2631, 16
        %v2636 = vshrl.u32 %v2631, 16
        %vm2637 = vc.u32 %v2629, %v2633
        %v2638 = vsel %vm2637, 1, 0
        %v2639 = vadd.s32 %v2629, %v2633
        %v2640 = vadd.s32 %v2632, %v2638
        %vm2641 = vc.u32 %v2639, %v2635
        %v2642 = vsel %vm2641, 1, 0
        %v2643 = vadd.s32 %v2639, %v2635
        %v2644 = vadd.s32 %v2640, %v2642
        %v2645 = vadd.s32 %v2644, %v2634
        %v2646 = vadd.s32 %v2645, %v2636
        %v2647 = vand.u32 %v2624, 65535
        %v2648 = vshrl.u32 %v2624, 16
        %v2649 = vand.u32 %v2619, 65535
        %v2650 = vshrl.u32 %v2619, 16
        %v2651 = vmul.u32 %v2647, %v2649
        %v2652 = vmul.u32 %v2647, %v2650
        %v2653 = vmul.u32 %v2648, %v2649
        %v2654 = vmul.u32 %v2648, %v2650
        %v2655 = vshll.u32 %v2652, 16
        %v2656 = vshrl.u32 %v2652, 16
        %v2657 = vshll.u32 %v2653, 16
        %v2658 = vshrl.u32 %v2653, 16
        %vm2659 = vc.u32 %v2651, %v2655
        %v2660 = vsel %vm2659, 1, 0
        %v2661 = vadd.s32 %v2651, %v2655
        %v2662 = vadd.s32 %v2654, %v2660
        %vm2663 = vc.u32 %v2661, %v2657
        %v2664 = vsel %vm2663, 1, 0
        %v2665 = vadd.s32 %v2661, %v2657
        %v2666 = vadd.s32 %v2662, %v2664
        %v2667 = vadd.s32 %v2666, %v2656
        %v2668 = vadd.s32 %v2667, %v2658
        %v2669 = vmul.u32 %v2624, %v2615
        %v2670 = vadd.s32 %v2646, %v2665
        %vm2671 = vc.u32 %v2646, %v2665
        %v2672 = vadd.s32 %v2668, 1
        %v2673 = vsel %vm2671, %v2672, %v2668
        %v2674 = vadd.s32 %v2669, %v2673
        %v2675 = vadd.s32 %v2674, 536870912
        %v2676 = vshrl.u32 %v2675, 30
        %v2677 = vshll.u32 %v2676, 30
        %v2678 = vsub.s32 %v2674, %v2677
        %vm2679 = vcmp.lt.s32.totalorder %v2678, 0
        %v2680 = vsub.s32 0, %v2678
        %v2681 = vsel %vm2679, %v2680, %v2678
        %v2682 = vclz %v2681
        %v2683 = vsub.s32 %v2682, 2
        %vm2684 = vcmp.gt.s32.totalorder 0, %v2683
        %v2685 = vsel %vm2684, 0, %v2683
        %v2686 = vsub.s32 32, %v2685
        %v2687 = vshll.u32 %v2678, %v2685
        %v2688 = vshrl.u32 %v2670, %v2686
        %v2689 = vor.u32 %v2687, %v2688
        %v2690 = vsub.s32 4294967266, %v2685
        %v2691 = vadd.s32 %v2690, 127
        %v2692 = vshll.u32 %v2691, 23
        %v2693 = vor.u32 4788187, %v2692
        %v2694 = vand.u32 2147483647, %v2693
        %v2696 = vcvt.s32.f32 %v2689
        %v2697 = vmul.f32 %v2696, %v2694
        %v2698 = vxor.u32 %v2697, 2147483648
        %v2699 = vsel %vm2578, %v2698, %v2697
        %v2700 = vsub.s32 4, %v2676
        %v2701 = vsel %vm2578, %v2700, %v2676
        %v2702 = vsel %vm2577, %v1798, %v2699
        %v2703 = vsel %vm2577, 0, %v2701
        %v2704 = vmul.f32 %v2702, %v2702
        %v2705 = vmul.f32 %v2704, -0.001358992
        %v2706 = vadd.f32 %v2705, 0.041655596
        %v2707 = vmul.f32 %v2704, %v2706
        %v2708 = vadd.f32 %v2707, -0.4999988
        %v2709 = vmul.f32 %v2704, %v2708
        %v2710 = vadd.f32 1.0, %v2709
        %v2711 = vmul.f32 %v2702, %v2702
        %v2712 = vmul.f32 %v2711, -0.00019511016
        %v2713 = vadd.f32 %v2712, 0.008332121
        %v2714 = vmul.f32 %v2711, %v2713
        %v2715 = vadd.f32 %v2714, -0.16666654
        %v2716 = vmul.f32 %v2711, %v2715
        %v2717 = vadd.f32 %v2716, 1.0
        %v2718 = vmul.f32 %v2717, %v2702
        %vm2719 = vweird.f32 %v1798
        %v2720 = vadd.s32 %v2703, 3
        %v2721 = vand.u32 %v2720, 3
        %vm2722 = vcmp.lt.s32.totalorder %v2721, 2
        %vm2723 = vcmp.eq.s32.totalorder %v2721, 0
        %v2724 = vxor.u32 %v2718, 2147483648
        %v2725 = vsel %vm2723, %v2710, %v2724
        %vm2726 = vcmp.eq.s32.totalorder %v2721, 2
        %v2727 = vxor.u32 %v2710, 2147483648
        %v2728 = vsel %vm2726, %v2727, %v2718
        %v2729 = vsel %vm2722, %v2725, %v2728
        %v2730 = vsel %vm2719, nan, %v2729
        %v2731 = vand.u32 2147483647, %v1799
        %vm2732 = vcmp.le.f32.partialorder %v2731, 0.7853982
        %vm2733 = vcmp.lt.s32.totalorder %v1799, 0
        %v2734 = vand.u32 %v1799, 2139095040
        %v2735 = vshrl.u32 %v2734, 23
        %v2736 = vsub.s32 %v2735, 127
        %v2737 = vand.u32 2147483647, %v1799
        %v2738 = vand.u32 %v2737, 8388607
        %v2739 = vor.u32 %v2738, 8388608
        %v2740 = vsub.s32 0, %v2739
        %v2741 = vadd.s32 %v2736, 1
        %vm2742 = vcmp.gt.s32.totalorder %v2741, 0
        %v2743 = vsel %vm2742, %v2741, 0
        %v2744 = vshrl.u32 %v2743, 5
        %v2745 = vand.u32 %v2743, 31
        %v2746 = vsub.s32 32, %v2745
        %v2747 = vshrl.u32 683565275, %v2746
        %v2748 = vshll.u32 683565275, %v2745
        %v2749 = vshrl.u32 2475754826, %v2746
        %v2750 = vor.u32 %v2748, %v2749
        %v2751 = vshll.u32 2475754826, %v2745
        %v2752 = vshrl.u32 2131351028, %v2746
        %v2753 = vor.u32 %v2751, %v2752
        %v2754 = vshll.u32 2131351028, %v2745
        %v2755 = vshrl.u32 2102212464, %v2746
        %v2756 = vor.u32 %v2754, %v2755
        %v2757 = vshll.u32 2102212464, %v2745
        %v2758 = vshrl.u32 920167782, %v2746
        %v2759 = vor.u32 %v2757, %v2758
        %v2760 = vshll.u32 920167782, %v2745
        %v2761 = vshrl.u32 1326507024, %v2746
        %v2762 = vor.u32 %v2760, %v2761
        %vm2763 = vcmp.lt.s32.totalorder %v2744, 1
        %vm2764 = vcmp.lt.s32.totalorder %v2744, 2
        %vm2765 = vcmp.lt.s32.totalorder %v2744, 3
        %vm2766 = vcmp.lt.s32.totalorder %v2744, 4
        %v2767 = vsel %vm2763, %v2747, %v2750
        %v2768 = vsel %vm2766, %v2756, 2102212464
        %v2769 = vsel %vm2765, %v2753, %v2768
        %v2770 = vsel %vm2764, %v2767, %v2769
        %v2771 = vsel %vm2763, %v2750, %v2753
        %v2772 = vsel %vm2766, %v2759, 920167782
        %v2773 = vsel %vm2765, %v2756, %v2772
        %v2774 = vsel %vm2764, %v2771, %v2773
        %v2775 = vsel %vm2763, %v2753, %v2756
        %v2776 = vsel %vm2766, %v2762, 1326507024
        %v2777 = vsel %vm2765, %v2759, %v2776
        %v2778 = vsel %vm2764, %v2775, %v2777
        %v2779 = vshll.u32 %v2739, 8
        %v2780 = vand.u32 %v2779, 65535
        %v2781 = vshrl.u32 %v2779, 16
        %v2782 = vand.u32 %v2778, 65535
        %v2783 = vshrl.u32 %v2778, 16
        %v2784 = vmul.u32 %v2780, %v2782
        %v2785 = vmul.u32 %v2780, %v2783
        %v2786 = vmul.u32 %v2781, %v2782
        %v2787 = vmul.u32 %v2781, %v2783
        %v2788 = vshll.u32 %v2785, 16
        %v2789 = vshrl.u32 %v2785, 16
        %v2790 = vshll.u32 %v2786, 16
        %v2791 = vshrl.u32 %v2786, 16
        %vm2792 = vc.u32 %v2784, %v2788
        %v2793 = vsel %vm2792, 1, 0
        %v2794 = vadd.s32 %v2784, %v2788
        %v2795 = vadd.s32 %v2787, %v2793
        %vm2796 = vc.u32 %v2794, %v2790
        %v2797 = vsel %vm2796, 1, 0
        %v2798 = vadd.s32 %v2794, %v2790
        %v2799 = vadd.s32 %v2795, %v2797
        %v2800 = vadd.s32 %v2799, %v2789
        %v2801 = vadd.s32 %v2800, %v2791
        %v2802 = vand.u32 %v2779, 65535
        %v2803 = vshrl.u32 %v2779, 16
        %v2804 = vand.u32 %v2774, 65535
        %v2805 = vshrl.u32 %v2774, 16
        %v2806 = vmul.u32 %v2802, %v2804
        %v2807 = vmul.u32 %v2802, %v2805
        %v2808 = vmul.u32 %v2803, %v2804
        %v2809 = vmul.u32 %v2803, %v2805
        %v2810 = vshll.u32 %v2807, 16
        %v2811 = vshrl.u32 %v2807, 16
        %v2812 = vshll.u32 %v2808, 16
        %v2813 = vshrl.u32 %v2808, 16
        %vm2814 = vc.u32 %v2806, %v2810
        %v2815 = vsel %vm2814, 1, 0
        %v2816 = vadd.s32 %v2806, %v2810
        %v2817 = vadd.s32 %v2809, %v2815
        %vm2818 = vc.u32 %v2816, %v2812
        %v2819 = vsel %vm2818, 1, 0
        %v2820 = vadd.s32 %v2816, %v2812
        %v2821 = vadd.s32 %v2817, %v2819
        %v2822 = vadd.s32 %v2821, %v2811
        %v2823 = vadd.s32 %v2822, %v2813
        %v2824 = vmul.u32 %v2779, %v2770
        %v2825 = vadd.s32 %v2801, %v2820
        %vm2826 = vc.u32 %v2801, %v2820
        %v2827 = vadd.s32 %v2823, 1
        %v2828 = vsel %vm2826, %v2827, %v2823
        %v2829 = vadd.s32 %v2824, %v2828
        %v2830 = vadd.s32 %v2829, 536870912
        %v2831 = vshrl.u32 %v2830, 30
        %v2832 = vshll.u32 %v2831, 30
        %v2833 = vsub.s32 %v2829, %v2832
        %vm2834 = vcmp.lt.s32.totalorder %v2833, 0
        %v2835 = vsub.s32 0, %v2833
        %v2836 = vsel %vm2834, %v2835, %v2833
        %v2837 = vclz %v2836
        %v2838 = vsub.s32 %v2837, 2
        %vm2839 = vcmp.gt.s32.totalorder 0, %v2838
        %v2840 = vsel %vm2839, 0, %v2838
        %v2841 = vsub.s32 32, %v2840
        %v2842 = vshll.u32 %v2833, %v2840
        %v2843 = vshrl.u32 %v2825, %v2841
        %v2844 = vor.u32 %v2842, %v2843
        %v2845 = vsub.s32 4294967266, %v2840
        %v2846 = vadd.s32 %v2845, 127
        %v2847 = vshll.u32 %v2846, 23
        %v2848 = vor.u32 4788187, %v2847
        %v2849 = vand.u32 2147483647, %v2848
        %v2851 = vcvt.s32.f32 %v2844
        %v2852 = vmul.f32 %v2851, %v2849
        %v2853 = vxor.u32 %v2852, 2147483648
        %v2854 = vsel %vm2733, %v2853, %v2852
        %v2855 = vsub.s32 4, %v2831
        %v2856 = vsel %vm2733, %v2855, %v2831
        %v2857 = vsel %vm2732, %v1799, %v2854
        %v2858 = vsel %vm2732, 0, %v2856
        %v2859 = vmul.f32 %v2857, %v2857
        %v2860 = vmul.f32 %v2859, -0.001358992
        %v2861 = vadd.f32 %v2860, 0.041655596
        %v2862 = vmul.f32 %v2859, %v2861
        %v2863 = vadd.f32 %v2862, -0.4999988
        %v2864 = vmul.f32 %v2859, %v2863
        %v2865 = vadd.f32 1.0, %v2864
        %v2866 = vmul.f32 %v2857, %v2857
        %v2867 = vmul.f32 %v2866, -0.00019511016
        %v2868 = vadd.f32 %v2867, 0.008332121
        %v2869 = vmul.f32 %v2866, %v2868
        %v2870 = vadd.f32 %v2869, -0.16666654
        %v2871 = vmul.f32 %v2866, %v2870
        %v2872 = vadd.f32 %v2871, 1.0
        %v2873 = vmul.f32 %v2872, %v2857
        %vm2874 = vweird.f32 %v1799
        %v2875 = vadd.s32 %v2858, 3
        %v2876 = vand.u32 %v2875, 3
        %vm2877 = vcmp.lt.s32.totalorder %v2876, 2
        %vm2878 = vcmp.eq.s32.totalorder %v2876, 0
        %v2879 = vxor.u32 %v2873, 2147483648
        %v2880 = vsel %vm2878, %v2865, %v2879
        %vm2881 = vcmp.eq.s32.totalorder %v2876, 2
        %v2882 = vxor.u32 %v2865, 2147483648
        %v2883 = vsel %vm2881, %v2882, %v2873
        %v2884 = vsel %vm2877, %v2880, %v2883
        %v2885 = vsel %vm2874, nan, %v2884
        %v2886 = vand.u32 2147483647, %v1800
        %vm2887 = vcmp.le.f32.partialorder %v2886, 0.7853982
        %vm2888 = vcmp.lt.s32.totalorder %v1800, 0
        %v2889 = vand.u32 %v1800, 2139095040
        %v2890 = vshrl.u32 %v2889, 23
        %v2891 = vsub.s32 %v2890, 127
        %v2892 = vand.u32 2147483647, %v1800
        %v2893 = vand.u32 %v2892, 8388607
        %v2894 = vor.u32 %v2893, 8388608
        %v2895 = vsub.s32 0, %v2894
        %v2896 = vadd.s32 %v2891, 1
        %vm2897 = vcmp.gt.s32.totalorder %v2896, 0
        %v2898 = vsel %vm2897, %v2896, 0
        %v2899 = vshrl.u32 %v2898, 5
        %v2900 = vand.u32 %v2898, 31
        %v2901 = vsub.s32 32, %v2900
        %v2902 = vshrl.u32 683565275, %v2901
        %v2903 = vshll.u32 683565275, %v2900
        %v2904 = vshrl.u32 2475754826, %v2901
        %v2905 = vor.u32 %v2903, %v2904
        %v2906 = vshll.u32 2475754826, %v2900
        %v2907 = vshrl.u32 2131351028, %v2901
        %v2908 = vor.u32 %v2906, %v2907
        %v2909 = vshll.u32 2131351028, %v2900
        %v2910 = vshrl.u32 2102212464, %v2901
        %v2911 = vor.u32 %v2909, %v2910
        %v2912 = vshll.u32 2102212464, %v2900
        %v2913 = vshrl.u32 920167782, %v2901
        %v2914 = vor.u32 %v2912, %v2913
        %v2915 = vshll.u32 920167782, %v2900
        %v2916 = vshrl.u32 1326507024, %v2901
        %v2917 = vor.u32 %v2915, %v2916
        %vm2918 = vcmp.lt.s32.totalorder %v2899, 1
        %vm2919 = vcmp.lt.s32.totalorder %v2899, 2
        %vm2920 = vcmp.lt.s32.totalorder %v2899, 3
        %vm2921 = vcmp.lt.s32.totalorder %v2899, 4
        %v2922 = vsel %vm2918, %v2902, %v2905
        %v2923 = vsel %vm2921, %v2911, 2102212464
        %v2924 = vsel %vm2920, %v2908, %v2923
        %v2925 = vsel %vm2919, %v2922, %v2924
        %v2926 = vsel %vm2918, %v2905, %v2908
        %v2927 = vsel %vm2921, %v2914, 920167782
        %v2928 = vsel %vm2920, %v2911, %v2927
        %v2929 = vsel %vm2919, %v2926, %v2928
        %v2930 = vsel %vm2918, %v2908, %v2911
        %v2931 = vsel %vm2921, %v2917, 1326507024
        %v2932 = vsel %vm2920, %v2914, %v2931
        %v2933 = vsel %vm2919, %v2930, %v2932
        %v2934 = vshll.u32 %v2894, 8
        %v2935 = vand.u32 %v2934, 65535
        %v2936 = vshrl.u32 %v2934, 16
        %v2937 = vand.u32 %v2933, 65535
        %v2938 = vshrl.u32 %v2933, 16
        %v2939 = vmul.u32 %v2935, %v2937
        %v2940 = vmul.u32 %v2935, %v2938
        %v2941 = vmul.u32 %v2936, %v2937
        %v2942 = vmul.u32 %v2936, %v2938
        %v2943 = vshll.u32 %v2940, 16
        %v2944 = vshrl.u32 %v2940, 16
        %v2945 = vshll.u32 %v2941, 16
        %v2946 = vshrl.u32 %v2941, 16
        %vm2947 = vc.u32 %v2939, %v2943
        %v2948 = vsel %vm2947, 1, 0
        %v2949 = vadd.s32 %v2939, %v2943
        %v2950 = vadd.s32 %v2942, %v2948
        %vm2951 = vc.u32 %v2949, %v2945
        %v2952 = vsel %vm2951, 1, 0
        %v2953 = vadd.s32 %v2949, %v2945
        %v2954 = vadd.s32 %v2950, %v2952
        %v2955 = vadd.s32 %v2954, %v2944
        %v2956 = vadd.s32 %v2955, %v2946
        %v2957 = vand.u32 %v2934, 65535
        %v2958 = vshrl.u32 %v2934, 16
        %v2959 = vand.u32 %v2929, 65535
        %v2960 = vshrl.u32 %v2929, 16
        %v2961 = vmul.u32 %v2957, %v2959
        %v2962 = vmul.u32 %v2957, %v2960
        %v2963 = vmul.u32 %v2958, %v2959
        %v2964 = vmul.u32 %v2958, %v2960
        %v2965 = vshll.u32 %v2962, 16
        %v2966 = vshrl.u32 %v2962, 16
        %v2967 = vshll.u32 %v2963, 16
        %v2968 = vshrl.u32 %v2963, 16
        %vm2969 = vc.u32 %v2961, %v2965
        %v2970 = vsel %vm2969, 1, 0
        %v2971 = vadd.s32 %v2961, %v2965
        %v2972 = vadd.s32 %v2964, %v2970
        %vm2973 = vc.u32 %v2971, %v2967
        %v2974 = vsel %vm2973, 1, 0
        %v2975 = vadd.s32 %v2971, %v2967
        %v2976 = vadd.s32 %v2972, %v2974
        %v2977 = vadd.s32 %v2976, %v2966
        %v2978 = vadd.s32 %v2977, %v2968
        %v2979 = vmul.u32 %v2934, %v2925
        %v2980 = vadd.s32 %v2956, %v2975
        %vm2981 = vc.u32 %v2956, %v2975
        %v2982 = vadd.s32 %v2978, 1
        %v2983 = vsel %vm2981, %v2982, %v2978
        %v2984 = vadd.s32 %v2979, %v2983
        %v2985 = vadd.s32 %v2984, 536870912
        %v2986 = vshrl.u32 %v2985, 30
        %v2987 = vshll.u32 %v2986, 30
        %v2988 = vsub.s32 %v2984, %v2987
        %vm2989 = vcmp.lt.s32.totalorder %v2988, 0
        %v2990 = vsub.s32 0, %v2988
        %v2991 = vsel %vm2989, %v2990, %v2988
        %v2992 = vclz %v2991
        %v2993 = vsub.s32 %v2992, 2
        %vm2994 = vcmp.gt.s32.totalorder 0, %v2993
        %v2995 = vsel %vm2994, 0, %v2993
        %v2996 = vsub.s32 32, %v2995
        %v2997 = vshll.u32 %v2988, %v2995
        %v2998 = vshrl.u32 %v2980, %v2996
        %v2999 = vor.u32 %v2997, %v2998
        %v3000 = vsub.s32 4294967266, %v2995
        %v3001 = vadd.s32 %v3000, 127
        %v3002 = vshll.u32 %v3001, 23
        %v3003 = vor.u32 4788187, %v3002
        %v3004 = vand.u32 2147483647, %v3003
        %v3006 = vcvt.s32.f32 %v2999
        %v3007 = vmul.f32 %v3006, %v3004
        %v3008 = vxor.u32 %v3007, 2147483648
        %v3009 = vsel %vm2888, %v3008, %v3007
        %v3010 = vsub.s32 4, %v2986
        %v3011 = vsel %vm2888, %v3010, %v2986
        %v3012 = vsel %vm2887, %v1800, %v3009
        %v3013 = vsel %vm2887, 0, %v3011
        %v3014 = vmul.f32 %v3012, %v3012
        %v3015 = vmul.f32 %v3014, -0.001358992
        %v3016 = vadd.f32 %v3015, 0.041655596
        %v3017 = vmul.f32 %v3014, %v3016
        %v3018 = vadd.f32 %v3017, -0.4999988
        %v3019 = vmul.f32 %v3014, %v3018
        %v3020 = vadd.f32 1.0, %v3019
        %v3021 = vmul.f32 %v3012, %v3012
        %v3022 = vmul.f32 %v3021, -0.00019511016
        %v3023 = vadd.f32 %v3022, 0.008332121
        %v3024 = vmul.f32 %v3021, %v3023
        %v3025 = vadd.f32 %v3024, -0.16666654
        %v3026 = vmul.f32 %v3021, %v3025
        %v3027 = vadd.f32 %v3026, 1.0
        %v3028 = vmul.f32 %v3027, %v3012
        %vm3029 = vweird.f32 %v1800
        %v3030 = vadd.s32 %v3013, 3
        %v3031 = vand.u32 %v3030, 3
        %vm3032 = vcmp.lt.s32.totalorder %v3031, 2
        %vm3033 = vcmp.eq.s32.totalorder %v3031, 0
        %v3034 = vxor.u32 %v3028, 2147483648
        %v3035 = vsel %vm3033, %v3020, %v3034
        %vm3036 = vcmp.eq.s32.totalorder %v3031, 2
        %v3037 = vxor.u32 %v3020, 2147483648
        %v3038 = vsel %vm3036, %v3037, %v3028
        %v3039 = vsel %vm3032, %v3035, %v3038
        %v3040 = vsel %vm3029, nan, %v3039
        %v3041 = vld [vmem:[%s5] sm:$0xff]
        %v3042 = vld [vmem:[%s5 + $0x8] sm:$0xff]
        %v3043 = vld [vmem:[%s5 + $0x10] sm:$0xff]
        %v3044 = vld [vmem:[%s5 + $0x18] sm:$0xff]
        %v3045 = vld [vmem:[%s6] sm:$0xff]
        %v3046 = vld [vmem:[%s6 + $0x8] sm:$0xff]
        %v3047 = vld [vmem:[%s6 + $0x10] sm:$0xff]
        %v3048 = vld [vmem:[%s6 + $0x18] sm:$0xff]
        %3050 = vset.pattern.permute.xlu0 0
        %3051 = vperm.xlu0 %3050, %v3045
        %v3052 = vpop.permute.xlu0 %3051
        %3055 = vset.pattern.permute.xlu0 0
        %3056 = vperm.xlu0 %3055, %v3046
        %v3057 = vpop.permute.xlu0 %3056
        %3060 = vset.pattern.permute.xlu0 0
        %3061 = vperm.xlu0 %3060, %v3047
        %v3062 = vpop.permute.xlu0 %3061
        %3065 = vset.pattern.permute.xlu0 0
        %3066 = vperm.xlu0 %3065, %v3048
        %v3067 = vpop.permute.xlu0 %3066
        %v3070 = vsel %vm1722, %v3041, 0
        %v3073 = vsel %vm1722, %v3042, 0
        %v3076 = vsel %vm1722, %v3043, 0
        %v3079 = vsel %vm1722, %v3044, 0
        %3081 = vmatpush.msra.mxu0 0.0
        %3082 = vmatpush.msra.mxu0 0.0
        %3083 = vmatpush.msra.mxu0 0.0
        %3084 = vmatpush.msra.mxu0 0.0
        %3085 = vmatpush.msra.mxu0 0.0
        %3086 = vmatpush.msra.mxu0 0.0
        %3087 = vmatpush.msra.mxu0 0.0
        %3088 = vmatpush.msra.mxu0 0.0
        %3089 = vmatpush.msra.mxu0 0.0
        %3090 = vmatpush.msra.mxu0 0.0
        %3091 = vmatpush.msra.mxu0 0.0
        %3092 = vmatpush.msra.mxu0 0.0
        %3093 = vmatpush.msra.mxu0 %v2885
        %3094 = vmatpush.msra.mxu0 %v2575
        %3095 = vmatpush.msra.mxu0 %v2265
        %3096 = vmatpush.msra.mxu0 %v1955
        %3097 = vmatmul.f32.gmra.mxu0 %v3070
        %v3098 = vpop.f32.mrf.mxu0
        %v3099 = vadd.f32 %v3052, %v3098
        %3100 = vmatmul.f32.gmra.mxu0 %v3073
        %v3101 = vpop.f32.mrf.mxu0
        %v3102 = vadd.f32 %v3057, %v3101
        %3103 = vmatmul.f32.gmra.mxu0 %v3076
        %v3104 = vpop.f32.mrf.mxu0
        %v3105 = vadd.f32 %v3062, %v3104
        %3106 = vmatmul.f32.gmra.mxu0 %v3079
        %v3107 = vpop.f32.mrf.mxu0
        %v3108 = vadd.f32 %v3067, %v3107
        %3109 = vdwg.mxu0
        %3110 = vmatpush.msra.mxu0 0.0
        %3111 = vmatpush.msra.mxu0 0.0
        %3112 = vmatpush.msra.mxu0 0.0
        %3113 = vmatpush.msra.mxu0 0.0
        %3114 = vmatpush.msra.mxu0 0.0
        %3115 = vmatpush.msra.mxu0 0.0
        %3116 = vmatpush.msra.mxu0 0.0
        %3117 = vmatpush.msra.mxu0 0.0
        %3118 = vmatpush.msra.mxu0 0.0
        %3119 = vmatpush.msra.mxu0 0.0
        %3120 = vmatpush.msra.mxu0 0.0
        %3121 = vmatpush.msra.mxu0 0.0
        %3122 = vmatpush.msra.mxu0 %v3040
        %3123 = vmatpush.msra.mxu0 %v2730
        %3124 = vmatpush.msra.mxu0 %v2420
        %3125 = vmatpush.msra.mxu0 %v2110
        %3126 = vmatmul.f32.gmra.mxu0 %v3070
        %v3127 = vpop.f32.mrf.mxu0
        %v3128 = vadd.f32 %v3052, %v3127
        %3129 = vmatmul.f32.gmra.mxu0 %v3073
        %v3130 = vpop.f32.mrf.mxu0
        %v3131 = vadd.f32 %v3057, %v3130
        %3132 = vmatmul.f32.gmra.mxu0 %v3076
        %v3133 = vpop.f32.mrf.mxu0
        %v3134 = vadd.f32 %v3062, %v3133
        %3135 = vmatmul.f32.gmra.mxu0 %v3079
        %v3136 = vpop.f32.mrf.mxu0
        %v3137 = vadd.f32 %v3067, %v3136
        %3138 = vdwg.mxu0
        %v3139 = vmul.f32 %v3099, 30.0
        %v3140 = vmul.f32 %v3128, 30.0
        %v3141 = vmul.f32 %v3102, 30.0
        %v3142 = vmul.f32 %v3131, 30.0
        %v3143 = vmul.f32 %v3105, 30.0
        %v3144 = vmul.f32 %v3134, 30.0
        %v3145 = vmul.f32 %v3108, 30.0
        %v3146 = vmul.f32 %v3137, 30.0
        %v3147 = vand.u32 2147483647, %v3139
        %vm3148 = vcmp.le.f32.partialorder %v3147, 0.7853982
        %vm3149 = vcmp.lt.s32.totalorder %v3139, 0
        %v3150 = vand.u32 %v3139, 2139095040
        %v3151 = vshrl.u32 %v3150, 23
        %v3152 = vsub.s32 %v3151, 127
        %v3153 = vand.u32 2147483647, %v3139
        %v3154 = vand.u32 %v3153, 8388607
        %v3155 = vor.u32 %v3154, 8388608
        %v3156 = vsub.s32 0, %v3155
        %v3157 = vadd.s32 %v3152, 1
        %vm3158 = vcmp.gt.s32.totalorder %v3157, 0
        %v3159 = vsel %vm3158, %v3157, 0
        %v3160 = vshrl.u32 %v3159, 5
        %v3161 = vand.u32 %v3159, 31
        %v3162 = vsub.s32 32, %v3161
        %v3163 = vshrl.u32 683565275, %v3162
        %v3164 = vshll.u32 683565275, %v3161
        %v3165 = vshrl.u32 2475754826, %v3162
        %v3166 = vor.u32 %v3164, %v3165
        %v3167 = vshll.u32 2475754826, %v3161
        %v3168 = vshrl.u32 2131351028, %v3162
        %v3169 = vor.u32 %v3167, %v3168
        %v3170 = vshll.u32 2131351028, %v3161
        %v3171 = vshrl.u32 2102212464, %v3162
        %v3172 = vor.u32 %v3170, %v3171
        %v3173 = vshll.u32 2102212464, %v3161
        %v3174 = vshrl.u32 920167782, %v3162
        %v3175 = vor.u32 %v3173, %v3174
        %v3176 = vshll.u32 920167782, %v3161
        %v3177 = vshrl.u32 1326507024, %v3162
        %v3178 = vor.u32 %v3176, %v3177
        %vm3179 = vcmp.lt.s32.totalorder %v3160, 1
        %vm3180 = vcmp.lt.s32.totalorder %v3160, 2
        %vm3181 = vcmp.lt.s32.totalorder %v3160, 3
        %vm3182 = vcmp.lt.s32.totalorder %v3160, 4
        %v3183 = vsel %vm3179, %v3163, %v3166
        %v3184 = vsel %vm3182, %v3172, 2102212464
        %v3185 = vsel %vm3181, %v3169, %v3184
        %v3186 = vsel %vm3180, %v3183, %v3185
        %v3187 = vsel %vm3179, %v3166, %v3169
        %v3188 = vsel %vm3182, %v3175, 920167782
        %v3189 = vsel %vm3181, %v3172, %v3188
        %v3190 = vsel %vm3180, %v3187, %v3189
        %v3191 = vsel %vm3179, %v3169, %v3172
        %v3192 = vsel %vm3182, %v3178, 1326507024
        %v3193 = vsel %vm3181, %v3175, %v3192
        %v3194 = vsel %vm3180, %v3191, %v3193
        %v3195 = vshll.u32 %v3155, 8
        %v3196 = vand.u32 %v3195, 65535
        %v3197 = vshrl.u32 %v3195, 16
        %v3198 = vand.u32 %v3194, 65535
        %v3199 = vshrl.u32 %v3194, 16
        %v3200 = vmul.u32 %v3196, %v3198
        %v3201 = vmul.u32 %v3196, %v3199
        %v3202 = vmul.u32 %v3197, %v3198
        %v3203 = vmul.u32 %v3197, %v3199
        %v3204 = vshll.u32 %v3201, 16
        %v3205 = vshrl.u32 %v3201, 16
        %v3206 = vshll.u32 %v3202, 16
        %v3207 = vshrl.u32 %v3202, 16
        %vm3208 = vc.u32 %v3200, %v3204
        %v3209 = vsel %vm3208, 1, 0
        %v3210 = vadd.s32 %v3200, %v3204
        %v3211 = vadd.s32 %v3203, %v3209
        %vm3212 = vc.u32 %v3210, %v3206
        %v3213 = vsel %vm3212, 1, 0
        %v3214 = vadd.s32 %v3210, %v3206
        %v3215 = vadd.s32 %v3211, %v3213
        %v3216 = vadd.s32 %v3215, %v3205
        %v3217 = vadd.s32 %v3216, %v3207
        %v3218 = vand.u32 %v3195, 65535
        %v3219 = vshrl.u32 %v3195, 16
        %v3220 = vand.u32 %v3190, 65535
        %v3221 = vshrl.u32 %v3190, 16
        %v3222 = vmul.u32 %v3218, %v3220
        %v3223 = vmul.u32 %v3218, %v3221
        %v3224 = vmul.u32 %v3219, %v3220
        %v3225 = vmul.u32 %v3219, %v3221
        %v3226 = vshll.u32 %v3223, 16
        %v3227 = vshrl.u32 %v3223, 16
        %v3228 = vshll.u32 %v3224, 16
        %v3229 = vshrl.u32 %v3224, 16
        %vm3230 = vc.u32 %v3222, %v3226
        %v3231 = vsel %vm3230, 1, 0
        %v3232 = vadd.s32 %v3222, %v3226
        %v3233 = vadd.s32 %v3225, %v3231
        %vm3234 = vc.u32 %v3232, %v3228
        %v3235 = vsel %vm3234, 1, 0
        %v3236 = vadd.s32 %v3232, %v3228
        %v3237 = vadd.s32 %v3233, %v3235
        %v3238 = vadd.s32 %v3237, %v3227
        %v3239 = vadd.s32 %v3238, %v3229
        %v3240 = vmul.u32 %v3195, %v3186
        %v3241 = vadd.s32 %v3217, %v3236
        %vm3242 = vc.u32 %v3217, %v3236
        %v3243 = vadd.s32 %v3239, 1
        %v3244 = vsel %vm3242, %v3243, %v3239
        %v3245 = vadd.s32 %v3240, %v3244
        %v3246 = vadd.s32 %v3245, 536870912
        %v3247 = vshrl.u32 %v3246, 30
        %v3248 = vshll.u32 %v3247, 30
        %v3249 = vsub.s32 %v3245, %v3248
        %vm3250 = vcmp.lt.s32.totalorder %v3249, 0
        %v3251 = vsub.s32 0, %v3249
        %v3252 = vsel %vm3250, %v3251, %v3249
        %v3253 = vclz %v3252
        %v3254 = vsub.s32 %v3253, 2
        %vm3255 = vcmp.gt.s32.totalorder 0, %v3254
        %v3256 = vsel %vm3255, 0, %v3254
        %v3257 = vsub.s32 32, %v3256
        %v3258 = vshll.u32 %v3249, %v3256
        %v3259 = vshrl.u32 %v3241, %v3257
        %v3260 = vor.u32 %v3258, %v3259
        %v3261 = vsub.s32 4294967266, %v3256
        %v3262 = vadd.s32 %v3261, 127
        %v3263 = vshll.u32 %v3262, 23
        %v3264 = vor.u32 4788187, %v3263
        %v3265 = vand.u32 2147483647, %v3264
        %v3267 = vcvt.s32.f32 %v3260
        %v3268 = vmul.f32 %v3267, %v3265
        %v3269 = vxor.u32 %v3268, 2147483648
        %v3270 = vsel %vm3149, %v3269, %v3268
        %v3271 = vsub.s32 4, %v3247
        %v3272 = vsel %vm3149, %v3271, %v3247
        %v3273 = vsel %vm3148, %v3139, %v3270
        %v3274 = vsel %vm3148, 0, %v3272
        %v3275 = vmul.f32 %v3273, %v3273
        %v3276 = vmul.f32 %v3275, -0.001358992
        %v3277 = vadd.f32 %v3276, 0.041655596
        %v3278 = vmul.f32 %v3275, %v3277
        %v3279 = vadd.f32 %v3278, -0.4999988
        %v3280 = vmul.f32 %v3275, %v3279
        %v3281 = vadd.f32 1.0, %v3280
        %v3282 = vmul.f32 %v3273, %v3273
        %v3283 = vmul.f32 %v3282, -0.00019511016
        %v3284 = vadd.f32 %v3283, 0.008332121
        %v3285 = vmul.f32 %v3282, %v3284
        %v3286 = vadd.f32 %v3285, -0.16666654
        %v3287 = vmul.f32 %v3282, %v3286
        %v3288 = vadd.f32 %v3287, 1.0
        %v3289 = vmul.f32 %v3288, %v3273
        %vm3290 = vweird.f32 %v3139
        %v3291 = vadd.s32 %v3274, 3
        %v3292 = vand.u32 %v3291, 3
        %vm3293 = vcmp.lt.s32.totalorder %v3292, 2
        %vm3294 = vcmp.eq.s32.totalorder %v3292, 0
        %v3295 = vxor.u32 %v3289, 2147483648
        %v3296 = vsel %vm3294, %v3281, %v3295
        %vm3297 = vcmp.eq.s32.totalorder %v3292, 2
        %v3298 = vxor.u32 %v3281, 2147483648
        %v3299 = vsel %vm3297, %v3298, %v3289
        %v3300 = vsel %vm3293, %v3296, %v3299
        %v3301 = vsel %vm3290, nan, %v3300
        %v3302 = vand.u32 2147483647, %v3140
        %vm3303 = vcmp.le.f32.partialorder %v3302, 0.7853982
        %vm3304 = vcmp.lt.s32.totalorder %v3140, 0
        %v3305 = vand.u32 %v3140, 2139095040
        %v3306 = vshrl.u32 %v3305, 23
        %v3307 = vsub.s32 %v3306, 127
        %v3308 = vand.u32 2147483647, %v3140
        %v3309 = vand.u32 %v3308, 8388607
        %v3310 = vor.u32 %v3309, 8388608
        %v3311 = vsub.s32 0, %v3310
        %v3312 = vadd.s32 %v3307, 1
        %vm3313 = vcmp.gt.s32.totalorder %v3312, 0
        %v3314 = vsel %vm3313, %v3312, 0
        %v3315 = vshrl.u32 %v3314, 5
        %v3316 = vand.u32 %v3314, 31
        %v3317 = vsub.s32 32, %v3316
        %v3318 = vshrl.u32 683565275, %v3317
        %v3319 = vshll.u32 683565275, %v3316
        %v3320 = vshrl.u32 2475754826, %v3317
        %v3321 = vor.u32 %v3319, %v3320
        %v3322 = vshll.u32 2475754826, %v3316
        %v3323 = vshrl.u32 2131351028, %v3317
        %v3324 = vor.u32 %v3322, %v3323
        %v3325 = vshll.u32 2131351028, %v3316
        %v3326 = vshrl.u32 2102212464, %v3317
        %v3327 = vor.u32 %v3325, %v3326
        %v3328 = vshll.u32 2102212464, %v3316
        %v3329 = vshrl.u32 920167782, %v3317
        %v3330 = vor.u32 %v3328, %v3329
        %v3331 = vshll.u32 920167782, %v3316
        %v3332 = vshrl.u32 1326507024, %v3317
        %v3333 = vor.u32 %v3331, %v3332
        %vm3334 = vcmp.lt.s32.totalorder %v3315, 1
        %vm3335 = vcmp.lt.s32.totalorder %v3315, 2
        %vm3336 = vcmp.lt.s32.totalorder %v3315, 3
        %vm3337 = vcmp.lt.s32.totalorder %v3315, 4
        %v3338 = vsel %vm3334, %v3318, %v3321
        %v3339 = vsel %vm3337, %v3327, 2102212464
        %v3340 = vsel %vm3336, %v3324, %v3339
        %v3341 = vsel %vm3335, %v3338, %v3340
        %v3342 = vsel %vm3334, %v3321, %v3324
        %v3343 = vsel %vm3337, %v3330, 920167782
        %v3344 = vsel %vm3336, %v3327, %v3343
        %v3345 = vsel %vm3335, %v3342, %v3344
        %v3346 = vsel %vm3334, %v3324, %v3327
        %v3347 = vsel %vm3337, %v3333, 1326507024
        %v3348 = vsel %vm3336, %v3330, %v3347
        %v3349 = vsel %vm3335, %v3346, %v3348
        %v3350 = vshll.u32 %v3310, 8
        %v3351 = vand.u32 %v3350, 65535
        %v3352 = vshrl.u32 %v3350, 16
        %v3353 = vand.u32 %v3349, 65535
        %v3354 = vshrl.u32 %v3349, 16
        %v3355 = vmul.u32 %v3351, %v3353
        %v3356 = vmul.u32 %v3351, %v3354
        %v3357 = vmul.u32 %v3352, %v3353
        %v3358 = vmul.u32 %v3352, %v3354
        %v3359 = vshll.u32 %v3356, 16
        %v3360 = vshrl.u32 %v3356, 16
        %v3361 = vshll.u32 %v3357, 16
        %v3362 = vshrl.u32 %v3357, 16
        %vm3363 = vc.u32 %v3355, %v3359
        %v3364 = vsel %vm3363, 1, 0
        %v3365 = vadd.s32 %v3355, %v3359
        %v3366 = vadd.s32 %v3358, %v3364
        %vm3367 = vc.u32 %v3365, %v3361
        %v3368 = vsel %vm3367, 1, 0
        %v3369 = vadd.s32 %v3365, %v3361
        %v3370 = vadd.s32 %v3366, %v3368
        %v3371 = vadd.s32 %v3370, %v3360
        %v3372 = vadd.s32 %v3371, %v3362
        %v3373 = vand.u32 %v3350, 65535
        %v3374 = vshrl.u32 %v3350, 16
        %v3375 = vand.u32 %v3345, 65535
        %v3376 = vshrl.u32 %v3345, 16
        %v3377 = vmul.u32 %v3373, %v3375
        %v3378 = vmul.u32 %v3373, %v3376
        %v3379 = vmul.u32 %v3374, %v3375
        %v3380 = vmul.u32 %v3374, %v3376
        %v3381 = vshll.u32 %v3378, 16
        %v3382 = vshrl.u32 %v3378, 16
        %v3383 = vshll.u32 %v3379, 16
        %v3384 = vshrl.u32 %v3379, 16
        %vm3385 = vc.u32 %v3377, %v3381
        %v3386 = vsel %vm3385, 1, 0
        %v3387 = vadd.s32 %v3377, %v3381
        %v3388 = vadd.s32 %v3380, %v3386
        %vm3389 = vc.u32 %v3387, %v3383
        %v3390 = vsel %vm3389, 1, 0
        %v3391 = vadd.s32 %v3387, %v3383
        %v3392 = vadd.s32 %v3388, %v3390
        %v3393 = vadd.s32 %v3392, %v3382
        %v3394 = vadd.s32 %v3393, %v3384
        %v3395 = vmul.u32 %v3350, %v3341
        %v3396 = vadd.s32 %v3372, %v3391
        %vm3397 = vc.u32 %v3372, %v3391
        %v3398 = vadd.s32 %v3394, 1
        %v3399 = vsel %vm3397, %v3398, %v3394
        %v3400 = vadd.s32 %v3395, %v3399
        %v3401 = vadd.s32 %v3400, 536870912
        %v3402 = vshrl.u32 %v3401, 30
        %v3403 = vshll.u32 %v3402, 30
        %v3404 = vsub.s32 %v3400, %v3403
        %vm3405 = vcmp.lt.s32.totalorder %v3404, 0
        %v3406 = vsub.s32 0, %v3404
        %v3407 = vsel %vm3405, %v3406, %v3404
        %v3408 = vclz %v3407
        %v3409 = vsub.s32 %v3408, 2
        %vm3410 = vcmp.gt.s32.totalorder 0, %v3409
        %v3411 = vsel %vm3410, 0, %v3409
        %v3412 = vsub.s32 32, %v3411
        %v3413 = vshll.u32 %v3404, %v3411
        %v3414 = vshrl.u32 %v3396, %v3412
        %v3415 = vor.u32 %v3413, %v3414
        %v3416 = vsub.s32 4294967266, %v3411
        %v3417 = vadd.s32 %v3416, 127
        %v3418 = vshll.u32 %v3417, 23
        %v3419 = vor.u32 4788187, %v3418
        %v3420 = vand.u32 2147483647, %v3419
        %v3422 = vcvt.s32.f32 %v3415
        %v3423 = vmul.f32 %v3422, %v3420
        %v3424 = vxor.u32 %v3423, 2147483648
        %v3425 = vsel %vm3304, %v3424, %v3423
        %v3426 = vsub.s32 4, %v3402
        %v3427 = vsel %vm3304, %v3426, %v3402
        %v3428 = vsel %vm3303, %v3140, %v3425
        %v3429 = vsel %vm3303, 0, %v3427
        %v3430 = vmul.f32 %v3428, %v3428
        %v3431 = vmul.f32 %v3430, -0.001358992
        %v3432 = vadd.f32 %v3431, 0.041655596
        %v3433 = vmul.f32 %v3430, %v3432
        %v3434 = vadd.f32 %v3433, -0.4999988
        %v3435 = vmul.f32 %v3430, %v3434
        %v3436 = vadd.f32 1.0, %v3435
        %v3437 = vmul.f32 %v3428, %v3428
        %v3438 = vmul.f32 %v3437, -0.00019511016
        %v3439 = vadd.f32 %v3438, 0.008332121
        %v3440 = vmul.f32 %v3437, %v3439
        %v3441 = vadd.f32 %v3440, -0.16666654
        %v3442 = vmul.f32 %v3437, %v3441
        %v3443 = vadd.f32 %v3442, 1.0
        %v3444 = vmul.f32 %v3443, %v3428
        %vm3445 = vweird.f32 %v3140
        %v3446 = vadd.s32 %v3429, 3
        %v3447 = vand.u32 %v3446, 3
        %vm3448 = vcmp.lt.s32.totalorder %v3447, 2
        %vm3449 = vcmp.eq.s32.totalorder %v3447, 0
        %v3450 = vxor.u32 %v3444, 2147483648
        %v3451 = vsel %vm3449, %v3436, %v3450
        %vm3452 = vcmp.eq.s32.totalorder %v3447, 2
        %v3453 = vxor.u32 %v3436, 2147483648
        %v3454 = vsel %vm3452, %v3453, %v3444
        %v3455 = vsel %vm3448, %v3451, %v3454
        %v3456 = vsel %vm3445, nan, %v3455
        %v3457 = vand.u32 2147483647, %v3141
        %vm3458 = vcmp.le.f32.partialorder %v3457, 0.7853982
        %vm3459 = vcmp.lt.s32.totalorder %v3141, 0
        %v3460 = vand.u32 %v3141, 2139095040
        %v3461 = vshrl.u32 %v3460, 23
        %v3462 = vsub.s32 %v3461, 127
        %v3463 = vand.u32 2147483647, %v3141
        %v3464 = vand.u32 %v3463, 8388607
        %v3465 = vor.u32 %v3464, 8388608
        %v3466 = vsub.s32 0, %v3465
        %v3467 = vadd.s32 %v3462, 1
        %vm3468 = vcmp.gt.s32.totalorder %v3467, 0
        %v3469 = vsel %vm3468, %v3467, 0
        %v3470 = vshrl.u32 %v3469, 5
        %v3471 = vand.u32 %v3469, 31
        %v3472 = vsub.s32 32, %v3471
        %v3473 = vshrl.u32 683565275, %v3472
        %v3474 = vshll.u32 683565275, %v3471
        %v3475 = vshrl.u32 2475754826, %v3472
        %v3476 = vor.u32 %v3474, %v3475
        %v3477 = vshll.u32 2475754826, %v3471
        %v3478 = vshrl.u32 2131351028, %v3472
        %v3479 = vor.u32 %v3477, %v3478
        %v3480 = vshll.u32 2131351028, %v3471
        %v3481 = vshrl.u32 2102212464, %v3472
        %v3482 = vor.u32 %v3480, %v3481
        %v3483 = vshll.u32 2102212464, %v3471
        %v3484 = vshrl.u32 920167782, %v3472
        %v3485 = vor.u32 %v3483, %v3484
        %v3486 = vshll.u32 920167782, %v3471
        %v3487 = vshrl.u32 1326507024, %v3472
        %v3488 = vor.u32 %v3486, %v3487
        %vm3489 = vcmp.lt.s32.totalorder %v3470, 1
        %vm3490 = vcmp.lt.s32.totalorder %v3470, 2
        %vm3491 = vcmp.lt.s32.totalorder %v3470, 3
        %vm3492 = vcmp.lt.s32.totalorder %v3470, 4
        %v3493 = vsel %vm3489, %v3473, %v3476
        %v3494 = vsel %vm3492, %v3482, 2102212464
        %v3495 = vsel %vm3491, %v3479, %v3494
        %v3496 = vsel %vm3490, %v3493, %v3495
        %v3497 = vsel %vm3489, %v3476, %v3479
        %v3498 = vsel %vm3492, %v3485, 920167782
        %v3499 = vsel %vm3491, %v3482, %v3498
        %v3500 = vsel %vm3490, %v3497, %v3499
        %v3501 = vsel %vm3489, %v3479, %v3482
        %v3502 = vsel %vm3492, %v3488, 1326507024
        %v3503 = vsel %vm3491, %v3485, %v3502
        %v3504 = vsel %vm3490, %v3501, %v3503
        %v3505 = vshll.u32 %v3465, 8
        %v3506 = vand.u32 %v3505, 65535
        %v3507 = vshrl.u32 %v3505, 16
        %v3508 = vand.u32 %v3504, 65535
        %v3509 = vshrl.u32 %v3504, 16
        %v3510 = vmul.u32 %v3506, %v3508
        %v3511 = vmul.u32 %v3506, %v3509
        %v3512 = vmul.u32 %v3507, %v3508
        %v3513 = vmul.u32 %v3507, %v3509
        %v3514 = vshll.u32 %v3511, 16
        %v3515 = vshrl.u32 %v3511, 16
        %v3516 = vshll.u32 %v3512, 16
        %v3517 = vshrl.u32 %v3512, 16
        %vm3518 = vc.u32 %v3510, %v3514
        %v3519 = vsel %vm3518, 1, 0
        %v3520 = vadd.s32 %v3510, %v3514
        %v3521 = vadd.s32 %v3513, %v3519
        %vm3522 = vc.u32 %v3520, %v3516
        %v3523 = vsel %vm3522, 1, 0
        %v3524 = vadd.s32 %v3520, %v3516
        %v3525 = vadd.s32 %v3521, %v3523
        %v3526 = vadd.s32 %v3525, %v3515
        %v3527 = vadd.s32 %v3526, %v3517
        %v3528 = vand.u32 %v3505, 65535
        %v3529 = vshrl.u32 %v3505, 16
        %v3530 = vand.u32 %v3500, 65535
        %v3531 = vshrl.u32 %v3500, 16
        %v3532 = vmul.u32 %v3528, %v3530
        %v3533 = vmul.u32 %v3528, %v3531
        %v3534 = vmul.u32 %v3529, %v3530
        %v3535 = vmul.u32 %v3529, %v3531
        %v3536 = vshll.u32 %v3533, 16
        %v3537 = vshrl.u32 %v3533, 16
        %v3538 = vshll.u32 %v3534, 16
        %v3539 = vshrl.u32 %v3534, 16
        %vm3540 = vc.u32 %v3532, %v3536
        %v3541 = vsel %vm3540, 1, 0
        %v3542 = vadd.s32 %v3532, %v3536
        %v3543 = vadd.s32 %v3535, %v3541
        %vm3544 = vc.u32 %v3542, %v3538
        %v3545 = vsel %vm3544, 1, 0
        %v3546 = vadd.s32 %v3542, %v3538
        %v3547 = vadd.s32 %v3543, %v3545
        %v3548 = vadd.s32 %v3547, %v3537
        %v3549 = vadd.s32 %v3548, %v3539
        %v3550 = vmul.u32 %v3505, %v3496
        %v3551 = vadd.s32 %v3527, %v3546
        %vm3552 = vc.u32 %v3527, %v3546
        %v3553 = vadd.s32 %v3549, 1
        %v3554 = vsel %vm3552, %v3553, %v3549
        %v3555 = vadd.s32 %v3550, %v3554
        %v3556 = vadd.s32 %v3555, 536870912
        %v3557 = vshrl.u32 %v3556, 30
        %v3558 = vshll.u32 %v3557, 30
        %v3559 = vsub.s32 %v3555, %v3558
        %vm3560 = vcmp.lt.s32.totalorder %v3559, 0
        %v3561 = vsub.s32 0, %v3559
        %v3562 = vsel %vm3560, %v3561, %v3559
        %v3563 = vclz %v3562
        %v3564 = vsub.s32 %v3563, 2
        %vm3565 = vcmp.gt.s32.totalorder 0, %v3564
        %v3566 = vsel %vm3565, 0, %v3564
        %v3567 = vsub.s32 32, %v3566
        %v3568 = vshll.u32 %v3559, %v3566
        %v3569 = vshrl.u32 %v3551, %v3567
        %v3570 = vor.u32 %v3568, %v3569
        %v3571 = vsub.s32 4294967266, %v3566
        %v3572 = vadd.s32 %v3571, 127
        %v3573 = vshll.u32 %v3572, 23
        %v3574 = vor.u32 4788187, %v3573
        %v3575 = vand.u32 2147483647, %v3574
        %v3577 = vcvt.s32.f32 %v3570
        %v3578 = vmul.f32 %v3577, %v3575
        %v3579 = vxor.u32 %v3578, 2147483648
        %v3580 = vsel %vm3459, %v3579, %v3578
        %v3581 = vsub.s32 4, %v3557
        %v3582 = vsel %vm3459, %v3581, %v3557
        %v3583 = vsel %vm3458, %v3141, %v3580
        %v3584 = vsel %vm3458, 0, %v3582
        %v3585 = vmul.f32 %v3583, %v3583
        %v3586 = vmul.f32 %v3585, -0.001358992
        %v3587 = vadd.f32 %v3586, 0.041655596
        %v3588 = vmul.f32 %v3585, %v3587
        %v3589 = vadd.f32 %v3588, -0.4999988
        %v3590 = vmul.f32 %v3585, %v3589
        %v3591 = vadd.f32 1.0, %v3590
        %v3592 = vmul.f32 %v3583, %v3583
        %v3593 = vmul.f32 %v3592, -0.00019511016
        %v3594 = vadd.f32 %v3593, 0.008332121
        %v3595 = vmul.f32 %v3592, %v3594
        %v3596 = vadd.f32 %v3595, -0.16666654
        %v3597 = vmul.f32 %v3592, %v3596
        %v3598 = vadd.f32 %v3597, 1.0
        %v3599 = vmul.f32 %v3598, %v3583
        %vm3600 = vweird.f32 %v3141
        %v3601 = vadd.s32 %v3584, 3
        %v3602 = vand.u32 %v3601, 3
        %vm3603 = vcmp.lt.s32.totalorder %v3602, 2
        %vm3604 = vcmp.eq.s32.totalorder %v3602, 0
        %v3605 = vxor.u32 %v3599, 2147483648
        %v3606 = vsel %vm3604, %v3591, %v3605
        %vm3607 = vcmp.eq.s32.totalorder %v3602, 2
        %v3608 = vxor.u32 %v3591, 2147483648
        %v3609 = vsel %vm3607, %v3608, %v3599
        %v3610 = vsel %vm3603, %v3606, %v3609
        %v3611 = vsel %vm3600, nan, %v3610
        %v3612 = vand.u32 2147483647, %v3142
        %vm3613 = vcmp.le.f32.partialorder %v3612, 0.7853982
        %vm3614 = vcmp.lt.s32.totalorder %v3142, 0
        %v3615 = vand.u32 %v3142, 2139095040
        %v3616 = vshrl.u32 %v3615, 23
        %v3617 = vsub.s32 %v3616, 127
        %v3618 = vand.u32 2147483647, %v3142
        %v3619 = vand.u32 %v3618, 8388607
        %v3620 = vor.u32 %v3619, 8388608
        %v3621 = vsub.s32 0, %v3620
        %v3622 = vadd.s32 %v3617, 1
        %vm3623 = vcmp.gt.s32.totalorder %v3622, 0
        %v3624 = vsel %vm3623, %v3622, 0
        %v3625 = vshrl.u32 %v3624, 5
        %v3626 = vand.u32 %v3624, 31
        %v3627 = vsub.s32 32, %v3626
        %v3628 = vshrl.u32 683565275, %v3627
        %v3629 = vshll.u32 683565275, %v3626
        %v3630 = vshrl.u32 2475754826, %v3627
        %v3631 = vor.u32 %v3629, %v3630
        %v3632 = vshll.u32 2475754826, %v3626
        %v3633 = vshrl.u32 2131351028, %v3627
        %v3634 = vor.u32 %v3632, %v3633
        %v3635 = vshll.u32 2131351028, %v3626
        %v3636 = vshrl.u32 2102212464, %v3627
        %v3637 = vor.u32 %v3635, %v3636
        %v3638 = vshll.u32 2102212464, %v3626
        %v3639 = vshrl.u32 920167782, %v3627
        %v3640 = vor.u32 %v3638, %v3639
        %v3641 = vshll.u32 920167782, %v3626
        %v3642 = vshrl.u32 1326507024, %v3627
        %v3643 = vor.u32 %v3641, %v3642
        %vm3644 = vcmp.lt.s32.totalorder %v3625, 1
        %vm3645 = vcmp.lt.s32.totalorder %v3625, 2
        %vm3646 = vcmp.lt.s32.totalorder %v3625, 3
        %vm3647 = vcmp.lt.s32.totalorder %v3625, 4
        %v3648 = vsel %vm3644, %v3628, %v3631
        %v3649 = vsel %vm3647, %v3637, 2102212464
        %v3650 = vsel %vm3646, %v3634, %v3649
        %v3651 = vsel %vm3645, %v3648, %v3650
        %v3652 = vsel %vm3644, %v3631, %v3634
        %v3653 = vsel %vm3647, %v3640, 920167782
        %v3654 = vsel %vm3646, %v3637, %v3653
        %v3655 = vsel %vm3645, %v3652, %v3654
        %v3656 = vsel %vm3644, %v3634, %v3637
        %v3657 = vsel %vm3647, %v3643, 1326507024
        %v3658 = vsel %vm3646, %v3640, %v3657
        %v3659 = vsel %vm3645, %v3656, %v3658
        %v3660 = vshll.u32 %v3620, 8
        %v3661 = vand.u32 %v3660, 65535
        %v3662 = vshrl.u32 %v3660, 16
        %v3663 = vand.u32 %v3659, 65535
        %v3664 = vshrl.u32 %v3659, 16
        %v3665 = vmul.u32 %v3661, %v3663
        %v3666 = vmul.u32 %v3661, %v3664
        %v3667 = vmul.u32 %v3662, %v3663
        %v3668 = vmul.u32 %v3662, %v3664
        %v3669 = vshll.u32 %v3666, 16
        %v3670 = vshrl.u32 %v3666, 16
        %v3671 = vshll.u32 %v3667, 16
        %v3672 = vshrl.u32 %v3667, 16
        %vm3673 = vc.u32 %v3665, %v3669
        %v3674 = vsel %vm3673, 1, 0
        %v3675 = vadd.s32 %v3665, %v3669
        %v3676 = vadd.s32 %v3668, %v3674
        %vm3677 = vc.u32 %v3675, %v3671
        %v3678 = vsel %vm3677, 1, 0
        %v3679 = vadd.s32 %v3675, %v3671
        %v3680 = vadd.s32 %v3676, %v3678
        %v3681 = vadd.s32 %v3680, %v3670
        %v3682 = vadd.s32 %v3681, %v3672
        %v3683 = vand.u32 %v3660, 65535
        %v3684 = vshrl.u32 %v3660, 16
        %v3685 = vand.u32 %v3655, 65535
        %v3686 = vshrl.u32 %v3655, 16
        %v3687 = vmul.u32 %v3683, %v3685
        %v3688 = vmul.u32 %v3683, %v3686
        %v3689 = vmul.u32 %v3684, %v3685
        %v3690 = vmul.u32 %v3684, %v3686
        %v3691 = vshll.u32 %v3688, 16
        %v3692 = vshrl.u32 %v3688, 16
        %v3693 = vshll.u32 %v3689, 16
        %v3694 = vshrl.u32 %v3689, 16
        %vm3695 = vc.u32 %v3687, %v3691
        %v3696 = vsel %vm3695, 1, 0
        %v3697 = vadd.s32 %v3687, %v3691
        %v3698 = vadd.s32 %v3690, %v3696
        %vm3699 = vc.u32 %v3697, %v3693
        %v3700 = vsel %vm3699, 1, 0
        %v3701 = vadd.s32 %v3697, %v3693
        %v3702 = vadd.s32 %v3698, %v3700
        %v3703 = vadd.s32 %v3702, %v3692
        %v3704 = vadd.s32 %v3703, %v3694
        %v3705 = vmul.u32 %v3660, %v3651
        %v3706 = vadd.s32 %v3682, %v3701
        %vm3707 = vc.u32 %v3682, %v3701
        %v3708 = vadd.s32 %v3704, 1
        %v3709 = vsel %vm3707, %v3708, %v3704
        %v3710 = vadd.s32 %v3705, %v3709
        %v3711 = vadd.s32 %v3710, 536870912
        %v3712 = vshrl.u32 %v3711, 30
        %v3713 = vshll.u32 %v3712, 30
        %v3714 = vsub.s32 %v3710, %v3713
        %vm3715 = vcmp.lt.s32.totalorder %v3714, 0
        %v3716 = vsub.s32 0, %v3714
        %v3717 = vsel %vm3715, %v3716, %v3714
        %v3718 = vclz %v3717
        %v3719 = vsub.s32 %v3718, 2
        %vm3720 = vcmp.gt.s32.totalorder 0, %v3719
        %v3721 = vsel %vm3720, 0, %v3719
        %v3722 = vsub.s32 32, %v3721
        %v3723 = vshll.u32 %v3714, %v3721
        %v3724 = vshrl.u32 %v3706, %v3722
        %v3725 = vor.u32 %v3723, %v3724
        %v3726 = vsub.s32 4294967266, %v3721
        %v3727 = vadd.s32 %v3726, 127
        %v3728 = vshll.u32 %v3727, 23
        %v3729 = vor.u32 4788187, %v3728
        %v3730 = vand.u32 2147483647, %v3729
        %v3732 = vcvt.s32.f32 %v3725
        %v3733 = vmul.f32 %v3732, %v3730
        %v3734 = vxor.u32 %v3733, 2147483648
        %v3735 = vsel %vm3614, %v3734, %v3733
        %v3736 = vsub.s32 4, %v3712
        %v3737 = vsel %vm3614, %v3736, %v3712
        %v3738 = vsel %vm3613, %v3142, %v3735
        %v3739 = vsel %vm3613, 0, %v3737
        %v3740 = vmul.f32 %v3738, %v3738
        %v3741 = vmul.f32 %v3740, -0.001358992
        %v3742 = vadd.f32 %v3741, 0.041655596
        %v3743 = vmul.f32 %v3740, %v3742
        %v3744 = vadd.f32 %v3743, -0.4999988
        %v3745 = vmul.f32 %v3740, %v3744
        %v3746 = vadd.f32 1.0, %v3745
        %v3747 = vmul.f32 %v3738, %v3738
        %v3748 = vmul.f32 %v3747, -0.00019511016
        %v3749 = vadd.f32 %v3748, 0.008332121
        %v3750 = vmul.f32 %v3747, %v3749
        %v3751 = vadd.f32 %v3750, -0.16666654
        %v3752 = vmul.f32 %v3747, %v3751
        %v3753 = vadd.f32 %v3752, 1.0
        %v3754 = vmul.f32 %v3753, %v3738
        %vm3755 = vweird.f32 %v3142
        %v3756 = vadd.s32 %v3739, 3
        %v3757 = vand.u32 %v3756, 3
        %vm3758 = vcmp.lt.s32.totalorder %v3757, 2
        %vm3759 = vcmp.eq.s32.totalorder %v3757, 0
        %v3760 = vxor.u32 %v3754, 2147483648
        %v3761 = vsel %vm3759, %v3746, %v3760
        %vm3762 = vcmp.eq.s32.totalorder %v3757, 2
        %v3763 = vxor.u32 %v3746, 2147483648
        %v3764 = vsel %vm3762, %v3763, %v3754
        %v3765 = vsel %vm3758, %v3761, %v3764
        %v3766 = vsel %vm3755, nan, %v3765
        %v3767 = vand.u32 2147483647, %v3143
        %vm3768 = vcmp.le.f32.partialorder %v3767, 0.7853982
        %vm3769 = vcmp.lt.s32.totalorder %v3143, 0
        %v3770 = vand.u32 %v3143, 2139095040
        %v3771 = vshrl.u32 %v3770, 23
        %v3772 = vsub.s32 %v3771, 127
        %v3773 = vand.u32 2147483647, %v3143
        %v3774 = vand.u32 %v3773, 8388607
        %v3775 = vor.u32 %v3774, 8388608
        %v3776 = vsub.s32 0, %v3775
        %v3777 = vadd.s32 %v3772, 1
        %vm3778 = vcmp.gt.s32.totalorder %v3777, 0
        %v3779 = vsel %vm3778, %v3777, 0
        %v3780 = vshrl.u32 %v3779, 5
        %v3781 = vand.u32 %v3779, 31
        %v3782 = vsub.s32 32, %v3781
        %v3783 = vshrl.u32 683565275, %v3782
        %v3784 = vshll.u32 683565275, %v3781
        %v3785 = vshrl.u32 2475754826, %v3782
        %v3786 = vor.u32 %v3784, %v3785
        %v3787 = vshll.u32 2475754826, %v3781
        %v3788 = vshrl.u32 2131351028, %v3782
        %v3789 = vor.u32 %v3787, %v3788
        %v3790 = vshll.u32 2131351028, %v3781
        %v3791 = vshrl.u32 2102212464, %v3782
        %v3792 = vor.u32 %v3790, %v3791
        %v3793 = vshll.u32 2102212464, %v3781
        %v3794 = vshrl.u32 920167782, %v3782
        %v3795 = vor.u32 %v3793, %v3794
        %v3796 = vshll.u32 920167782, %v3781
        %v3797 = vshrl.u32 1326507024, %v3782
        %v3798 = vor.u32 %v3796, %v3797
        %vm3799 = vcmp.lt.s32.totalorder %v3780, 1
        %vm3800 = vcmp.lt.s32.totalorder %v3780, 2
        %vm3801 = vcmp.lt.s32.totalorder %v3780, 3
        %vm3802 = vcmp.lt.s32.totalorder %v3780, 4
        %v3803 = vsel %vm3799, %v3783, %v3786
        %v3804 = vsel %vm3802, %v3792, 2102212464
        %v3805 = vsel %vm3801, %v3789, %v3804
        %v3806 = vsel %vm3800, %v3803, %v3805
        %v3807 = vsel %vm3799, %v3786, %v3789
        %v3808 = vsel %vm3802, %v3795, 920167782
        %v3809 = vsel %vm3801, %v3792, %v3808
        %v3810 = vsel %vm3800, %v3807, %v3809
        %v3811 = vsel %vm3799, %v3789, %v3792
        %v3812 = vsel %vm3802, %v3798, 1326507024
        %v3813 = vsel %vm3801, %v3795, %v3812
        %v3814 = vsel %vm3800, %v3811, %v3813
        %v3815 = vshll.u32 %v3775, 8
        %v3816 = vand.u32 %v3815, 65535
        %v3817 = vshrl.u32 %v3815, 16
        %v3818 = vand.u32 %v3814, 65535
        %v3819 = vshrl.u32 %v3814, 16
        %v3820 = vmul.u32 %v3816, %v3818
        %v3821 = vmul.u32 %v3816, %v3819
        %v3822 = vmul.u32 %v3817, %v3818
        %v3823 = vmul.u32 %v3817, %v3819
        %v3824 = vshll.u32 %v3821, 16
        %v3825 = vshrl.u32 %v3821, 16
        %v3826 = vshll.u32 %v3822, 16
        %v3827 = vshrl.u32 %v3822, 16
        %vm3828 = vc.u32 %v3820, %v3824
        %v3829 = vsel %vm3828, 1, 0
        %v3830 = vadd.s32 %v3820, %v3824
        %v3831 = vadd.s32 %v3823, %v3829
        %vm3832 = vc.u32 %v3830, %v3826
        %v3833 = vsel %vm3832, 1, 0
        %v3834 = vadd.s32 %v3830, %v3826
        %v3835 = vadd.s32 %v3831, %v3833
        %v3836 = vadd.s32 %v3835, %v3825
        %v3837 = vadd.s32 %v3836, %v3827
        %v3838 = vand.u32 %v3815, 65535
        %v3839 = vshrl.u32 %v3815, 16
        %v3840 = vand.u32 %v3810, 65535
        %v3841 = vshrl.u32 %v3810, 16
        %v3842 = vmul.u32 %v3838, %v3840
        %v3843 = vmul.u32 %v3838, %v3841
        %v3844 = vmul.u32 %v3839, %v3840
        %v3845 = vmul.u32 %v3839, %v3841
        %v3846 = vshll.u32 %v3843, 16
        %v3847 = vshrl.u32 %v3843, 16
        %v3848 = vshll.u32 %v3844, 16
        %v3849 = vshrl.u32 %v3844, 16
        %vm3850 = vc.u32 %v3842, %v3846
        %v3851 = vsel %vm3850, 1, 0
        %v3852 = vadd.s32 %v3842, %v3846
        %v3853 = vadd.s32 %v3845, %v3851
        %vm3854 = vc.u32 %v3852, %v3848
        %v3855 = vsel %vm3854, 1, 0
        %v3856 = vadd.s32 %v3852, %v3848
        %v3857 = vadd.s32 %v3853, %v3855
        %v3858 = vadd.s32 %v3857, %v3847
        %v3859 = vadd.s32 %v3858, %v3849
        %v3860 = vmul.u32 %v3815, %v3806
        %v3861 = vadd.s32 %v3837, %v3856
        %vm3862 = vc.u32 %v3837, %v3856
        %v3863 = vadd.s32 %v3859, 1
        %v3864 = vsel %vm3862, %v3863, %v3859
        %v3865 = vadd.s32 %v3860, %v3864
        %v3866 = vadd.s32 %v3865, 536870912
        %v3867 = vshrl.u32 %v3866, 30
        %v3868 = vshll.u32 %v3867, 30
        %v3869 = vsub.s32 %v3865, %v3868
        %vm3870 = vcmp.lt.s32.totalorder %v3869, 0
        %v3871 = vsub.s32 0, %v3869
        %v3872 = vsel %vm3870, %v3871, %v3869
        %v3873 = vclz %v3872
        %v3874 = vsub.s32 %v3873, 2
        %vm3875 = vcmp.gt.s32.totalorder 0, %v3874
        %v3876 = vsel %vm3875, 0, %v3874
        %v3877 = vsub.s32 32, %v3876
        %v3878 = vshll.u32 %v3869, %v3876
        %v3879 = vshrl.u32 %v3861, %v3877
        %v3880 = vor.u32 %v3878, %v3879
        %v3881 = vsub.s32 4294967266, %v3876
        %v3882 = vadd.s32 %v3881, 127
        %v3883 = vshll.u32 %v3882, 23
        %v3884 = vor.u32 4788187, %v3883
        %v3885 = vand.u32 2147483647, %v3884
        %v3887 = vcvt.s32.f32 %v3880
        %v3888 = vmul.f32 %v3887, %v3885
        %v3889 = vxor.u32 %v3888, 2147483648
        %v3890 = vsel %vm3769, %v3889, %v3888
        %v3891 = vsub.s32 4, %v3867
        %v3892 = vsel %vm3769, %v3891, %v3867
        %v3893 = vsel %vm3768, %v3143, %v3890
        %v3894 = vsel %vm3768, 0, %v3892
        %v3895 = vmul.f32 %v3893, %v3893
        %v3896 = vmul.f32 %v3895, -0.001358992
        %v3897 = vadd.f32 %v3896, 0.041655596
        %v3898 = vmul.f32 %v3895, %v3897
        %v3899 = vadd.f32 %v3898, -0.4999988
        %v3900 = vmul.f32 %v3895, %v3899
        %v3901 = vadd.f32 1.0, %v3900
        %v3902 = vmul.f32 %v3893, %v3893
        %v3903 = vmul.f32 %v3902, -0.00019511016
        %v3904 = vadd.f32 %v3903, 0.008332121
        %v3905 = vmul.f32 %v3902, %v3904
        %v3906 = vadd.f32 %v3905, -0.16666654
        %v3907 = vmul.f32 %v3902, %v3906
        %v3908 = vadd.f32 %v3907, 1.0
        %v3909 = vmul.f32 %v3908, %v3893
        %vm3910 = vweird.f32 %v3143
        %v3911 = vadd.s32 %v3894, 3
        %v3912 = vand.u32 %v3911, 3
        %vm3913 = vcmp.lt.s32.totalorder %v3912, 2
        %vm3914 = vcmp.eq.s32.totalorder %v3912, 0
        %v3915 = vxor.u32 %v3909, 2147483648
        %v3916 = vsel %vm3914, %v3901, %v3915
        %vm3917 = vcmp.eq.s32.totalorder %v3912, 2
        %v3918 = vxor.u32 %v3901, 2147483648
        %v3919 = vsel %vm3917, %v3918, %v3909
        %v3920 = vsel %vm3913, %v3916, %v3919
        %v3921 = vsel %vm3910, nan, %v3920
        %v3922 = vand.u32 2147483647, %v3144
        %vm3923 = vcmp.le.f32.partialorder %v3922, 0.7853982
        %vm3924 = vcmp.lt.s32.totalorder %v3144, 0
        %v3925 = vand.u32 %v3144, 2139095040
        %v3926 = vshrl.u32 %v3925, 23
        %v3927 = vsub.s32 %v3926, 127
        %v3928 = vand.u32 2147483647, %v3144
        %v3929 = vand.u32 %v3928, 8388607
        %v3930 = vor.u32 %v3929, 8388608
        %v3931 = vsub.s32 0, %v3930
        %v3932 = vadd.s32 %v3927, 1
        %vm3933 = vcmp.gt.s32.totalorder %v3932, 0
        %v3934 = vsel %vm3933, %v3932, 0
        %v3935 = vshrl.u32 %v3934, 5
        %v3936 = vand.u32 %v3934, 31
        %v3937 = vsub.s32 32, %v3936
        %v3938 = vshrl.u32 683565275, %v3937
        %v3939 = vshll.u32 683565275, %v3936
        %v3940 = vshrl.u32 2475754826, %v3937
        %v3941 = vor.u32 %v3939, %v3940
        %v3942 = vshll.u32 2475754826, %v3936
        %v3943 = vshrl.u32 2131351028, %v3937
        %v3944 = vor.u32 %v3942, %v3943
        %v3945 = vshll.u32 2131351028, %v3936
        %v3946 = vshrl.u32 2102212464, %v3937
        %v3947 = vor.u32 %v3945, %v3946
        %v3948 = vshll.u32 2102212464, %v3936
        %v3949 = vshrl.u32 920167782, %v3937
        %v3950 = vor.u32 %v3948, %v3949
        %v3951 = vshll.u32 920167782, %v3936
        %v3952 = vshrl.u32 1326507024, %v3937
        %v3953 = vor.u32 %v3951, %v3952
        %vm3954 = vcmp.lt.s32.totalorder %v3935, 1
        %vm3955 = vcmp.lt.s32.totalorder %v3935, 2
        %vm3956 = vcmp.lt.s32.totalorder %v3935, 3
        %vm3957 = vcmp.lt.s32.totalorder %v3935, 4
        %v3958 = vsel %vm3954, %v3938, %v3941
        %v3959 = vsel %vm3957, %v3947, 2102212464
        %v3960 = vsel %vm3956, %v3944, %v3959
        %v3961 = vsel %vm3955, %v3958, %v3960
        %v3962 = vsel %vm3954, %v3941, %v3944
        %v3963 = vsel %vm3957, %v3950, 920167782
        %v3964 = vsel %vm3956, %v3947, %v3963
        %v3965 = vsel %vm3955, %v3962, %v3964
        %v3966 = vsel %vm3954, %v3944, %v3947
        %v3967 = vsel %vm3957, %v3953, 1326507024
        %v3968 = vsel %vm3956, %v3950, %v3967
        %v3969 = vsel %vm3955, %v3966, %v3968
        %v3970 = vshll.u32 %v3930, 8
        %v3971 = vand.u32 %v3970, 65535
        %v3972 = vshrl.u32 %v3970, 16
        %v3973 = vand.u32 %v3969, 65535
        %v3974 = vshrl.u32 %v3969, 16
        %v3975 = vmul.u32 %v3971, %v3973
        %v3976 = vmul.u32 %v3971, %v3974
        %v3977 = vmul.u32 %v3972, %v3973
        %v3978 = vmul.u32 %v3972, %v3974
        %v3979 = vshll.u32 %v3976, 16
        %v3980 = vshrl.u32 %v3976, 16
        %v3981 = vshll.u32 %v3977, 16
        %v3982 = vshrl.u32 %v3977, 16
        %vm3983 = vc.u32 %v3975, %v3979
        %v3984 = vsel %vm3983, 1, 0
        %v3985 = vadd.s32 %v3975, %v3979
        %v3986 = vadd.s32 %v3978, %v3984
        %vm3987 = vc.u32 %v3985, %v3981
        %v3988 = vsel %vm3987, 1, 0
        %v3989 = vadd.s32 %v3985, %v3981
        %v3990 = vadd.s32 %v3986, %v3988
        %v3991 = vadd.s32 %v3990, %v3980
        %v3992 = vadd.s32 %v3991, %v3982
        %v3993 = vand.u32 %v3970, 65535
        %v3994 = vshrl.u32 %v3970, 16
        %v3995 = vand.u32 %v3965, 65535
        %v3996 = vshrl.u32 %v3965, 16
        %v3997 = vmul.u32 %v3993, %v3995
        %v3998 = vmul.u32 %v3993, %v3996
        %v3999 = vmul.u32 %v3994, %v3995
        %v4000 = vmul.u32 %v3994, %v3996
        %v4001 = vshll.u32 %v3998, 16
        %v4002 = vshrl.u32 %v3998, 16
        %v4003 = vshll.u32 %v3999, 16
        %v4004 = vshrl.u32 %v3999, 16
        %vm4005 = vc.u32 %v3997, %v4001
        %v4006 = vsel %vm4005, 1, 0
        %v4007 = vadd.s32 %v3997, %v4001
        %v4008 = vadd.s32 %v4000, %v4006
        %vm4009 = vc.u32 %v4007, %v4003
        %v4010 = vsel %vm4009, 1, 0
        %v4011 = vadd.s32 %v4007, %v4003
        %v4012 = vadd.s32 %v4008, %v4010
        %v4013 = vadd.s32 %v4012, %v4002
        %v4014 = vadd.s32 %v4013, %v4004
        %v4015 = vmul.u32 %v3970, %v3961
        %v4016 = vadd.s32 %v3992, %v4011
        %vm4017 = vc.u32 %v3992, %v4011
        %v4018 = vadd.s32 %v4014, 1
        %v4019 = vsel %vm4017, %v4018, %v4014
        %v4020 = vadd.s32 %v4015, %v4019
        %v4021 = vadd.s32 %v4020, 536870912
        %v4022 = vshrl.u32 %v4021, 30
        %v4023 = vshll.u32 %v4022, 30
        %v4024 = vsub.s32 %v4020, %v4023
        %vm4025 = vcmp.lt.s32.totalorder %v4024, 0
        %v4026 = vsub.s32 0, %v4024
        %v4027 = vsel %vm4025, %v4026, %v4024
        %v4028 = vclz %v4027
        %v4029 = vsub.s32 %v4028, 2
        %vm4030 = vcmp.gt.s32.totalorder 0, %v4029
        %v4031 = vsel %vm4030, 0, %v4029
        %v4032 = vsub.s32 32, %v4031
        %v4033 = vshll.u32 %v4024, %v4031
        %v4034 = vshrl.u32 %v4016, %v4032
        %v4035 = vor.u32 %v4033, %v4034
        %v4036 = vsub.s32 4294967266, %v4031
        %v4037 = vadd.s32 %v4036, 127
        %v4038 = vshll.u32 %v4037, 23
        %v4039 = vor.u32 4788187, %v4038
        %v4040 = vand.u32 2147483647, %v4039
        %v4042 = vcvt.s32.f32 %v4035
        %v4043 = vmul.f32 %v4042, %v4040
        %v4044 = vxor.u32 %v4043, 2147483648
        %v4045 = vsel %vm3924, %v4044, %v4043
        %v4046 = vsub.s32 4, %v4022
        %v4047 = vsel %vm3924, %v4046, %v4022
        %v4048 = vsel %vm3923, %v3144, %v4045
        %v4049 = vsel %vm3923, 0, %v4047
        %v4050 = vmul.f32 %v4048, %v4048
        %v4051 = vmul.f32 %v4050, -0.001358992
        %v4052 = vadd.f32 %v4051, 0.041655596
        %v4053 = vmul.f32 %v4050, %v4052
        %v4054 = vadd.f32 %v4053, -0.4999988
        %v4055 = vmul.f32 %v4050, %v4054
        %v4056 = vadd.f32 1.0, %v4055
        %v4057 = vmul.f32 %v4048, %v4048
        %v4058 = vmul.f32 %v4057, -0.00019511016
        %v4059 = vadd.f32 %v4058, 0.008332121
        %v4060 = vmul.f32 %v4057, %v4059
        %v4061 = vadd.f32 %v4060, -0.16666654
        %v4062 = vmul.f32 %v4057, %v4061
        %v4063 = vadd.f32 %v4062, 1.0
        %v4064 = vmul.f32 %v4063, %v4048
        %vm4065 = vweird.f32 %v3144
        %v4066 = vadd.s32 %v4049, 3
        %v4067 = vand.u32 %v4066, 3
        %vm4068 = vcmp.lt.s32.totalorder %v4067, 2
        %vm4069 = vcmp.eq.s32.totalorder %v4067, 0
        %v4070 = vxor.u32 %v4064, 2147483648
        %v4071 = vsel %vm4069, %v4056, %v4070
        %vm4072 = vcmp.eq.s32.totalorder %v4067, 2
        %v4073 = vxor.u32 %v4056, 2147483648
        %v4074 = vsel %vm4072, %v4073, %v4064
        %v4075 = vsel %vm4068, %v4071, %v4074
        %v4076 = vsel %vm4065, nan, %v4075
        %v4077 = vand.u32 2147483647, %v3145
        %vm4078 = vcmp.le.f32.partialorder %v4077, 0.7853982
        %vm4079 = vcmp.lt.s32.totalorder %v3145, 0
        %v4080 = vand.u32 %v3145, 2139095040
        %v4081 = vshrl.u32 %v4080, 23
        %v4082 = vsub.s32 %v4081, 127
        %v4083 = vand.u32 2147483647, %v3145
        %v4084 = vand.u32 %v4083, 8388607
        %v4085 = vor.u32 %v4084, 8388608
        %v4086 = vsub.s32 0, %v4085
        %v4087 = vadd.s32 %v4082, 1
        %vm4088 = vcmp.gt.s32.totalorder %v4087, 0
        %v4089 = vsel %vm4088, %v4087, 0
        %v4090 = vshrl.u32 %v4089, 5
        %v4091 = vand.u32 %v4089, 31
        %v4092 = vsub.s32 32, %v4091
        %v4093 = vshrl.u32 683565275, %v4092
        %v4094 = vshll.u32 683565275, %v4091
        %v4095 = vshrl.u32 2475754826, %v4092
        %v4096 = vor.u32 %v4094, %v4095
        %v4097 = vshll.u32 2475754826, %v4091
        %v4098 = vshrl.u32 2131351028, %v4092
        %v4099 = vor.u32 %v4097, %v4098
        %v4100 = vshll.u32 2131351028, %v4091
        %v4101 = vshrl.u32 2102212464, %v4092
        %v4102 = vor.u32 %v4100, %v4101
        %v4103 = vshll.u32 2102212464, %v4091
        %v4104 = vshrl.u32 920167782, %v4092
        %v4105 = vor.u32 %v4103, %v4104
        %v4106 = vshll.u32 920167782, %v4091
        %v4107 = vshrl.u32 1326507024, %v4092
        %v4108 = vor.u32 %v4106, %v4107
        %vm4109 = vcmp.lt.s32.totalorder %v4090, 1
        %vm4110 = vcmp.lt.s32.totalorder %v4090, 2
        %vm4111 = vcmp.lt.s32.totalorder %v4090, 3
        %vm4112 = vcmp.lt.s32.totalorder %v4090, 4
        %v4113 = vsel %vm4109, %v4093, %v4096
        %v4114 = vsel %vm4112, %v4102, 2102212464
        %v4115 = vsel %vm4111, %v4099, %v4114
        %v4116 = vsel %vm4110, %v4113, %v4115
        %v4117 = vsel %vm4109, %v4096, %v4099
        %v4118 = vsel %vm4112, %v4105, 920167782
        %v4119 = vsel %vm4111, %v4102, %v4118
        %v4120 = vsel %vm4110, %v4117, %v4119
        %v4121 = vsel %vm4109, %v4099, %v4102
        %v4122 = vsel %vm4112, %v4108, 1326507024
        %v4123 = vsel %vm4111, %v4105, %v4122
        %v4124 = vsel %vm4110, %v4121, %v4123
        %v4125 = vshll.u32 %v4085, 8
        %v4126 = vand.u32 %v4125, 65535
        %v4127 = vshrl.u32 %v4125, 16
        %v4128 = vand.u32 %v4124, 65535
        %v4129 = vshrl.u32 %v4124, 16
        %v4130 = vmul.u32 %v4126, %v4128
        %v4131 = vmul.u32 %v4126, %v4129
        %v4132 = vmul.u32 %v4127, %v4128
        %v4133 = vmul.u32 %v4127, %v4129
        %v4134 = vshll.u32 %v4131, 16
        %v4135 = vshrl.u32 %v4131, 16
        %v4136 = vshll.u32 %v4132, 16
        %v4137 = vshrl.u32 %v4132, 16
        %vm4138 = vc.u32 %v4130, %v4134
        %v4139 = vsel %vm4138, 1, 0
        %v4140 = vadd.s32 %v4130, %v4134
        %v4141 = vadd.s32 %v4133, %v4139
        %vm4142 = vc.u32 %v4140, %v4136
        %v4143 = vsel %vm4142, 1, 0
        %v4144 = vadd.s32 %v4140, %v4136
        %v4145 = vadd.s32 %v4141, %v4143
        %v4146 = vadd.s32 %v4145, %v4135
        %v4147 = vadd.s32 %v4146, %v4137
        %v4148 = vand.u32 %v4125, 65535
        %v4149 = vshrl.u32 %v4125, 16
        %v4150 = vand.u32 %v4120, 65535
        %v4151 = vshrl.u32 %v4120, 16
        %v4152 = vmul.u32 %v4148, %v4150
        %v4153 = vmul.u32 %v4148, %v4151
        %v4154 = vmul.u32 %v4149, %v4150
        %v4155 = vmul.u32 %v4149, %v4151
        %v4156 = vshll.u32 %v4153, 16
        %v4157 = vshrl.u32 %v4153, 16
        %v4158 = vshll.u32 %v4154, 16
        %v4159 = vshrl.u32 %v4154, 16
        %vm4160 = vc.u32 %v4152, %v4156
        %v4161 = vsel %vm4160, 1, 0
        %v4162 = vadd.s32 %v4152, %v4156
        %v4163 = vadd.s32 %v4155, %v4161
        %vm4164 = vc.u32 %v4162, %v4158
        %v4165 = vsel %vm4164, 1, 0
        %v4166 = vadd.s32 %v4162, %v4158
        %v4167 = vadd.s32 %v4163, %v4165
        %v4168 = vadd.s32 %v4167, %v4157
        %v4169 = vadd.s32 %v4168, %v4159
        %v4170 = vmul.u32 %v4125, %v4116
        %v4171 = vadd.s32 %v4147, %v4166
        %vm4172 = vc.u32 %v4147, %v4166
        %v4173 = vadd.s32 %v4169, 1
        %v4174 = vsel %vm4172, %v4173, %v4169
        %v4175 = vadd.s32 %v4170, %v4174
        %v4176 = vadd.s32 %v4175, 536870912
        %v4177 = vshrl.u32 %v4176, 30
        %v4178 = vshll.u32 %v4177, 30
        %v4179 = vsub.s32 %v4175, %v4178
        %vm4180 = vcmp.lt.s32.totalorder %v4179, 0
        %v4181 = vsub.s32 0, %v4179
        %v4182 = vsel %vm4180, %v4181, %v4179
        %v4183 = vclz %v4182
        %v4184 = vsub.s32 %v4183, 2
        %vm4185 = vcmp.gt.s32.totalorder 0, %v4184
        %v4186 = vsel %vm4185, 0, %v4184
        %v4187 = vsub.s32 32, %v4186
        %v4188 = vshll.u32 %v4179, %v4186
        %v4189 = vshrl.u32 %v4171, %v4187
        %v4190 = vor.u32 %v4188, %v4189
        %v4191 = vsub.s32 4294967266, %v4186
        %v4192 = vadd.s32 %v4191, 127
        %v4193 = vshll.u32 %v4192, 23
        %v4194 = vor.u32 4788187, %v4193
        %v4195 = vand.u32 2147483647, %v4194
        %v4197 = vcvt.s32.f32 %v4190
        %v4198 = vmul.f32 %v4197, %v4195
        %v4199 = vxor.u32 %v4198, 2147483648
        %v4200 = vsel %vm4079, %v4199, %v4198
        %v4201 = vsub.s32 4, %v4177
        %v4202 = vsel %vm4079, %v4201, %v4177
        %v4203 = vsel %vm4078, %v3145, %v4200
        %v4204 = vsel %vm4078, 0, %v4202
        %v4205 = vmul.f32 %v4203, %v4203
        %v4206 = vmul.f32 %v4205, -0.001358992
        %v4207 = vadd.f32 %v4206, 0.041655596
        %v4208 = vmul.f32 %v4205, %v4207
        %v4209 = vadd.f32 %v4208, -0.4999988
        %v4210 = vmul.f32 %v4205, %v4209
        %v4211 = vadd.f32 1.0, %v4210
        %v4212 = vmul.f32 %v4203, %v4203
        %v4213 = vmul.f32 %v4212, -0.00019511016
        %v4214 = vadd.f32 %v4213, 0.008332121
        %v4215 = vmul.f32 %v4212, %v4214
        %v4216 = vadd.f32 %v4215, -0.16666654
        %v4217 = vmul.f32 %v4212, %v4216
        %v4218 = vadd.f32 %v4217, 1.0
        %v4219 = vmul.f32 %v4218, %v4203
        %vm4220 = vweird.f32 %v3145
        %v4221 = vadd.s32 %v4204, 3
        %v4222 = vand.u32 %v4221, 3
        %vm4223 = vcmp.lt.s32.totalorder %v4222, 2
        %vm4224 = vcmp.eq.s32.totalorder %v4222, 0
        %v4225 = vxor.u32 %v4219, 2147483648
        %v4226 = vsel %vm4224, %v4211, %v4225
        %vm4227 = vcmp.eq.s32.totalorder %v4222, 2
        %v4228 = vxor.u32 %v4211, 2147483648
        %v4229 = vsel %vm4227, %v4228, %v4219
        %v4230 = vsel %vm4223, %v4226, %v4229
        %v4231 = vsel %vm4220, nan, %v4230
        %v4232 = vand.u32 2147483647, %v3146
        %vm4233 = vcmp.le.f32.partialorder %v4232, 0.7853982
        %vm4234 = vcmp.lt.s32.totalorder %v3146, 0
        %v4235 = vand.u32 %v3146, 2139095040
        %v4236 = vshrl.u32 %v4235, 23
        %v4237 = vsub.s32 %v4236, 127
        %v4238 = vand.u32 2147483647, %v3146
        %v4239 = vand.u32 %v4238, 8388607
        %v4240 = vor.u32 %v4239, 8388608
        %v4241 = vsub.s32 0, %v4240
        %v4242 = vadd.s32 %v4237, 1
        %vm4243 = vcmp.gt.s32.totalorder %v4242, 0
        %v4244 = vsel %vm4243, %v4242, 0
        %v4245 = vshrl.u32 %v4244, 5
        %v4246 = vand.u32 %v4244, 31
        %v4247 = vsub.s32 32, %v4246
        %v4248 = vshrl.u32 683565275, %v4247
        %v4249 = vshll.u32 683565275, %v4246
        %v4250 = vshrl.u32 2475754826, %v4247
        %v4251 = vor.u32 %v4249, %v4250
        %v4252 = vshll.u32 2475754826, %v4246
        %v4253 = vshrl.u32 2131351028, %v4247
        %v4254 = vor.u32 %v4252, %v4253
        %v4255 = vshll.u32 2131351028, %v4246
        %v4256 = vshrl.u32 2102212464, %v4247
        %v4257 = vor.u32 %v4255, %v4256
        %v4258 = vshll.u32 2102212464, %v4246
        %v4259 = vshrl.u32 920167782, %v4247
        %v4260 = vor.u32 %v4258, %v4259
        %v4261 = vshll.u32 920167782, %v4246
        %v4262 = vshrl.u32 1326507024, %v4247
        %v4263 = vor.u32 %v4261, %v4262
        %vm4264 = vcmp.lt.s32.totalorder %v4245, 1
        %vm4265 = vcmp.lt.s32.totalorder %v4245, 2
        %vm4266 = vcmp.lt.s32.totalorder %v4245, 3
        %vm4267 = vcmp.lt.s32.totalorder %v4245, 4
        %v4268 = vsel %vm4264, %v4248, %v4251
        %v4269 = vsel %vm4267, %v4257, 2102212464
        %v4270 = vsel %vm4266, %v4254, %v4269
        %v4271 = vsel %vm4265, %v4268, %v4270
        %v4272 = vsel %vm4264, %v4251, %v4254
        %v4273 = vsel %vm4267, %v4260, 920167782
        %v4274 = vsel %vm4266, %v4257, %v4273
        %v4275 = vsel %vm4265, %v4272, %v4274
        %v4276 = vsel %vm4264, %v4254, %v4257
        %v4277 = vsel %vm4267, %v4263, 1326507024
        %v4278 = vsel %vm4266, %v4260, %v4277
        %v4279 = vsel %vm4265, %v4276, %v4278
        %v4280 = vshll.u32 %v4240, 8
        %v4281 = vand.u32 %v4280, 65535
        %v4282 = vshrl.u32 %v4280, 16
        %v4283 = vand.u32 %v4279, 65535
        %v4284 = vshrl.u32 %v4279, 16
        %v4285 = vmul.u32 %v4281, %v4283
        %v4286 = vmul.u32 %v4281, %v4284
        %v4287 = vmul.u32 %v4282, %v4283
        %v4288 = vmul.u32 %v4282, %v4284
        %v4289 = vshll.u32 %v4286, 16
        %v4290 = vshrl.u32 %v4286, 16
        %v4291 = vshll.u32 %v4287, 16
        %v4292 = vshrl.u32 %v4287, 16
        %vm4293 = vc.u32 %v4285, %v4289
        %v4294 = vsel %vm4293, 1, 0
        %v4295 = vadd.s32 %v4285, %v4289
        %v4296 = vadd.s32 %v4288, %v4294
        %vm4297 = vc.u32 %v4295, %v4291
        %v4298 = vsel %vm4297, 1, 0
        %v4299 = vadd.s32 %v4295, %v4291
        %v4300 = vadd.s32 %v4296, %v4298
        %v4301 = vadd.s32 %v4300, %v4290
        %v4302 = vadd.s32 %v4301, %v4292
        %v4303 = vand.u32 %v4280, 65535
        %v4304 = vshrl.u32 %v4280, 16
        %v4305 = vand.u32 %v4275, 65535
        %v4306 = vshrl.u32 %v4275, 16
        %v4307 = vmul.u32 %v4303, %v4305
        %v4308 = vmul.u32 %v4303, %v4306
        %v4309 = vmul.u32 %v4304, %v4305
        %v4310 = vmul.u32 %v4304, %v4306
        %v4311 = vshll.u32 %v4308, 16
        %v4312 = vshrl.u32 %v4308, 16
        %v4313 = vshll.u32 %v4309, 16
        %v4314 = vshrl.u32 %v4309, 16
        %vm4315 = vc.u32 %v4307, %v4311
        %v4316 = vsel %vm4315, 1, 0
        %v4317 = vadd.s32 %v4307, %v4311
        %v4318 = vadd.s32 %v4310, %v4316
        %vm4319 = vc.u32 %v4317, %v4313
        %v4320 = vsel %vm4319, 1, 0
        %v4321 = vadd.s32 %v4317, %v4313
        %v4322 = vadd.s32 %v4318, %v4320
        %v4323 = vadd.s32 %v4322, %v4312
        %v4324 = vadd.s32 %v4323, %v4314
        %v4325 = vmul.u32 %v4280, %v4271
        %v4326 = vadd.s32 %v4302, %v4321
        %vm4327 = vc.u32 %v4302, %v4321
        %v4328 = vadd.s32 %v4324, 1
        %v4329 = vsel %vm4327, %v4328, %v4324
        %v4330 = vadd.s32 %v4325, %v4329
        %v4331 = vadd.s32 %v4330, 536870912
        %v4332 = vshrl.u32 %v4331, 30
        %v4333 = vshll.u32 %v4332, 30
        %v4334 = vsub.s32 %v4330, %v4333
        %vm4335 = vcmp.lt.s32.totalorder %v4334, 0
        %v4336 = vsub.s32 0, %v4334
        %v4337 = vsel %vm4335, %v4336, %v4334
        %v4338 = vclz %v4337
        %v4339 = vsub.s32 %v4338, 2
        %vm4340 = vcmp.gt.s32.totalorder 0, %v4339
        %v4341 = vsel %vm4340, 0, %v4339
        %v4342 = vsub.s32 32, %v4341
        %v4343 = vshll.u32 %v4334, %v4341
        %v4344 = vshrl.u32 %v4326, %v4342
        %v4345 = vor.u32 %v4343, %v4344
        %v4346 = vsub.s32 4294967266, %v4341
        %v4347 = vadd.s32 %v4346, 127
        %v4348 = vshll.u32 %v4347, 23
        %v4349 = vor.u32 4788187, %v4348
        %v4350 = vand.u32 2147483647, %v4349
        %v4352 = vcvt.s32.f32 %v4345
        %v4353 = vmul.f32 %v4352, %v4350
        %v4354 = vxor.u32 %v4353, 2147483648
        %v4355 = vsel %vm4234, %v4354, %v4353
        %v4356 = vsub.s32 4, %v4332
        %v4357 = vsel %vm4234, %v4356, %v4332
        %v4358 = vsel %vm4233, %v3146, %v4355
        %v4359 = vsel %vm4233, 0, %v4357
        %v4360 = vmul.f32 %v4358, %v4358
        %v4361 = vmul.f32 %v4360, -0.001358992
        %v4362 = vadd.f32 %v4361, 0.041655596
        %v4363 = vmul.f32 %v4360, %v4362
        %v4364 = vadd.f32 %v4363, -0.4999988
        %v4365 = vmul.f32 %v4360, %v4364
        %v4366 = vadd.f32 1.0, %v4365
        %v4367 = vmul.f32 %v4358, %v4358
        %v4368 = vmul.f32 %v4367, -0.00019511016
        %v4369 = vadd.f32 %v4368, 0.008332121
        %v4370 = vmul.f32 %v4367, %v4369
        %v4371 = vadd.f32 %v4370, -0.16666654
        %v4372 = vmul.f32 %v4367, %v4371
        %v4373 = vadd.f32 %v4372, 1.0
        %v4374 = vmul.f32 %v4373, %v4358
        %vm4375 = vweird.f32 %v3146
        %v4376 = vadd.s32 %v4359, 3
        %v4377 = vand.u32 %v4376, 3
        %vm4378 = vcmp.lt.s32.totalorder %v4377, 2
        %vm4379 = vcmp.eq.s32.totalorder %v4377, 0
        %v4380 = vxor.u32 %v4374, 2147483648
        %v4381 = vsel %vm4379, %v4366, %v4380
        %vm4382 = vcmp.eq.s32.totalorder %v4377, 2
        %v4383 = vxor.u32 %v4366, 2147483648
        %v4384 = vsel %vm4382, %v4383, %v4374
        %v4385 = vsel %vm4378, %v4381, %v4384
        %v4386 = vsel %vm4375, nan, %v4385
        %v4387 = vld [vmem:[%s7] sm:$0x1]
        %v4388 = vld [vmem:[#allocation2] sm:$0x1]
        %4390 = vset.pattern.permute.xlu0 0
        %4391 = vperm.xlu0 %4390, %v4388
        %v4392 = vpop.permute.xlu0 %4391
        %v4394 = vperm.slane %v4392, 0
        %v4396 = vsel %vm1722, %v4387, 0
        %4398 = vmatpush.msra.mxu0 0.0
        %4399 = vmatpush.msra.mxu0 0.0
        %4400 = vmatpush.msra.mxu0 0.0
        %4401 = vmatpush.msra.mxu0 0.0
        %4402 = vmatpush.msra.mxu0 0.0
        %4403 = vmatpush.msra.mxu0 0.0
        %4404 = vmatpush.msra.mxu0 0.0
        %4405 = vmatpush.msra.mxu0 0.0
        %4406 = vmatpush.msra.mxu0 0.0
        %4407 = vmatpush.msra.mxu0 0.0
        %4408 = vmatpush.msra.mxu0 0.0
        %4409 = vmatpush.msra.mxu0 0.0
        %4410 = vmatpush.msra.mxu0 %v4231
        %4411 = vmatpush.msra.mxu0 %v3921
        %4412 = vmatpush.msra.mxu0 %v3611
        %4413 = vmatpush.msra.mxu0 %v3301
        %4414 = vmatmul.f32.gmra.mxu0 %v4396
        %v4415 = vpop.f32.mrf.mxu0
        %v4416 = vadd.f32 %v4394, %v4415
        %4417 = vdwg.mxu0
        %4418 = vmatpush.msra.mxu0 0.0
        %4419 = vmatpush.msra.mxu0 0.0
        %4420 = vmatpush.msra.mxu0 0.0
        %4421 = vmatpush.msra.mxu0 0.0
        %4422 = vmatpush.msra.mxu0 0.0
        %4423 = vmatpush.msra.mxu0 0.0
        %4424 = vmatpush.msra.mxu0 0.0
        %4425 = vmatpush.msra.mxu0 0.0
        %4426 = vmatpush.msra.mxu0 0.0
        %4427 = vmatpush.msra.mxu0 0.0
        %4428 = vmatpush.msra.mxu0 0.0
        %4429 = vmatpush.msra.mxu0 0.0
        %4430 = vmatpush.msra.mxu0 %v4386
        %4431 = vmatpush.msra.mxu0 %v4076
        %4432 = vmatpush.msra.mxu0 %v3766
        %4433 = vmatpush.msra.mxu0 %v3456
        %4434 = vmatmul.f32.gmra.mxu0 %v4396
        %v4435 = vpop.f32.mrf.mxu0
        %v4436 = vadd.f32 %v4394, %v4435
        %4437 = vdwg.mxu0
        %v4440 = vrot.slane %v4436, 7
        %vm4441 = vcmask 1040384
        %v4442 = vsel %vm4441, %v4416, %v4440
        %v4444 = vlaneseq
        %vm4445 = vcmp.ge.s32.totalorder %v4444, 0
        %vm4446 = vcmp.lt.s32.totalorder %v4444, 256
        %vm4447 = vmand %vm4445, %vm4446
        %4448 = vst.msk [vmem:[%s328] sm:$0x3] %vm4447, %v4442
        %s4449 = sand.u32 %s227, 1
        %s4450 = scalar_lea.sflag [#allocation4], %s4449
        %s4451 = sand.u32 %s227, 1
        %s4452 = smul.addr %s4451, 2
        %s4453 = scalar_lea.vmem [#allocation3], %s4452
        // Predicated region
        $region57: #{tpu_custom_call.1} parent=55 // pred_check
          %p4454 = pneg %p237
        $region58: #{tpu_custom_call.1} parent=55 // pred_check_branch
          %4456 = sbr.rel (%p4454) target = $region60
        $region59: #{tpu_custom_call.1} parent=55 // pred_region
          %s4457 = smul.u32 2, %s25
          %4459 = vsyncadd %s4450, 0
          %s4460 = scalar_lea.hbm %s9, %s4457
          %s4462 = sshll.u32 %s4453, 4
          %s4463 = int_to_ptr.vmem [resolvable:$true] %s4462
          %s4464 = sshll.u32 %s4460, 4
          %s4465 = int_to_ptr.hbm [resolvable:$true] %s4464
          %4467 = dma.vmem_to_hbm [thread:$0]  %s4463, 32, %s4465, %s4450
        $region60: #{tpu_custom_call.1} parent=55 // pred_fallthru
          _
      $region56: #{tpu_custom_call.1} parent=5 // pred_fallthru
        _
      %p4468 = scmp.le.s32.totalorder 2, %s20
      // Predicated region
      $region61: #{tpu_custom_call.1} parent=5 // pred_check
        %p4469 = pneg %p4468
      $region62: #{tpu_custom_call.1} parent=5 // pred_check_branch
        %4471 = sbr.rel (%p4469) target = $region64
      $region63: #{tpu_custom_call.1} parent=5 // pred_region
        %s4472 = ssub.s32 %s20, 2
        // Predicated region
        $region65: #{tpu_custom_call.1} parent=63 // pred_check
          %p4473 = pneg %p243
        $region66: #{tpu_custom_call.1} parent=63 // pred_check_branch
          %4475 = sbr.rel (%p4473) target = $region68
        $region67: #{tpu_custom_call.1} parent=63 // pred_region
          %s4476 = sand.u32 %s228, 1
          %s4477 = scalar_lea.sflag [#allocation4], %s4476
          %s4478 = sand.u32 %s228, 1
          %s4479 = smul.addr %s4478, 2
          %s4480 = scalar_lea.vmem [#allocation3], %s4479
          %4482 = dma.done %s4477, 32
        $region68: #{tpu_custom_call.1} parent=63 // pred_fallthru
          _
      $region64: #{tpu_custom_call.1} parent=5 // pred_fallthru
        _
    $region6: #{tpu_custom_call.1} parent=1 // loop_footer
      %s24 = sadd.s32 1, %s20
    $region7: #{tpu_custom_call.1} parent=1 // loop_footer_branch
      %19 = sbr.rel target = $region3
    $region8: #{tpu_custom_call.1} parent=1 // loop_exit
      _
    %4483 = vsyncpa [#allocation4], 1
    %s4484 = scalar_lea.sflag [#allocation4], 1
    %4485 = vsyncpa %s4484, 1

</llo_original>
